<compile_context>
chip_gen: v7x
topology: tpu7x:2x2x1
jax: 0.10.0
libtpu: 0.0.40
codegen_flags: <defaults>
</compile_context>

<pallas_src>
import math
import functools

import jax
import jax.numpy as jnp
from jax.experimental import pallas as pl
from jax.experimental.pallas import tpu as pltpu


def _self_attn_block_kernel(x_ref, nmask_ref, wq_ref, bq_ref, wkv_ref, bkv_ref,
                            wo_ref, bo_ref, lnw_ref, lnb_ref, out_ref, *,
                            num_heads, compute_dtype, exp_dtype, approx_recip):
    B, S, D = x_ref.shape
    Tq = out_ref.shape[1]
    H = num_heads
    hd = D // H
    M = B * Tq

    qi = pl.program_id(1)
    q_start = pl.multiple_of(qi * Tq, Tq)

    # Query rows of this tile (also the residual / LayerNorm input, kept in f32).
    xq_f32 = x_ref[:, pl.ds(q_start, Tq), :].astype(jnp.float32)          # (B, Tq, D)
    xq = xq_f32.reshape(M, D).astype(compute_dtype)
    # Full sequence block for keys / values (block is resident across the query-tile axis).
    xkv = x_ref[...].astype(compute_dtype).reshape(B * S, D)

    # Projections: softmax scale is pre-folded into wq/bq in the wrapper.
    q2 = (jnp.dot(xq, wq_ref[...], preferred_element_type=jnp.float32)
          + bq_ref[...]).astype(compute_dtype)                            # (M, D)
    kv = (jnp.dot(xkv, wkv_ref[...], preferred_element_type=jnp.float32)
          + bkv_ref[...]).astype(compute_dtype)                           # (B*S, 2D)
    k2 = kv[:, :D]
    v2 = kv[:, D:]

    # Additive mask, broadcast ONCE per grid step (not once per head).
    nmask_b = jnp.broadcast_to(nmask_ref[...], (B, Tq, S))                # (B, Tq, S) f32

    o_heads = []
    for h in range(H):                                 # static unroll; H is small
        sl = slice(h * hd, (h + 1) * hd)
        qh = q2[:, sl].reshape(B, Tq, hd)
        kh = k2[:, sl].reshape(B, S, hd)
        vh = v2[:, sl].reshape(B, S, hd)

        # Batched over the batch tile, contraction on hd (MXU).
        s = jnp.einsum('bqd,bkd->bqk', qh, kh,
                       preferred_element_type=jnp.float32)                # (B, Tq, S)
        s = s + nmask_b
        s = s - jnp.max(s, axis=-1, keepdims=True)
        p = jnp.exp(s.astype(exp_dtype))
        denom = jnp.sum(p.astype(jnp.float32), axis=-1, keepdims=True)
        inv = pl.reciprocal(denom, approx=approx_recip)                   # EUP reciprocal
        pn = (p * inv.astype(p.dtype)).astype(compute_dtype)

        oh = jnp.einsum('bqk,bkd->bqd', pn, vh,
                        preferred_element_type=jnp.float32)               # (B, Tq, hd)
        o_heads.append(oh.reshape(M, hd).astype(compute_dtype))

    # Single K = D output projection over all heads (full MXU depth, one matmul).
    o_all = jnp.concatenate(o_heads, axis=1)                              # (M, D)
    y = jnp.dot(o_all, wo_ref[...], preferred_element_type=jnp.float32)   # (M, D) f32

    # Residual + LayerNorm (f32, eps = 1e-5, biased variance like torch.nn.LayerNorm).
    r = y + bo_ref[...] + xq_f32.reshape(M, D)
    mu = jnp.mean(r, axis=-1, keepdims=True)
    var = jnp.mean((r - mu) * (r - mu), axis=-1, keepdims=True)
    rn = (r - mu) * jax.lax.rsqrt(var + 1e-5)
    out = rn * lnw_ref[...] + lnb_ref[...]

    out_ref[...] = out.reshape(B, Tq, D).astype(out_ref.dtype)


def _vmem_capacity_bytes():
    try:
        return int(pltpu.get_tpu_info().vmem_capacity_bytes)
    except Exception:
        return 64 * 1024 * 1024          # conservative fallback (v7x per-TensorCore VMEM)


def _step_vmem_bytes(bt, qt, S, D):
    """Rough per-grid-step VMEM upper bound (f32 worst case, incl. pipeline buffers)."""
    m = bt * qt
    io = 2 * bt * S * D * 4 + 2 * m * D * 4           # double-buffered seq in / out blocks
    wts = 2 * (4 * D * D) * 4 + 8 * D * 4             # weights (worst case: dbl-buffered, f32)
    proj = bt * S * 3 * D * 4 + m * D * 4             # kv + q projection slabs
    attn = 3 * m * S * 4                              # scores / probs / broadcast mask
    misc = 4 * m * D * 4                              # o_all, y, residual, LN temporaries
    return io + wts + proj + attn + misc


def _choose_tiles(N, S, D):
    """Generation-aware (VMEM-capacity-based) batch-tile / query-tile selection."""
    cap = _vmem_capacity_bytes()
    budget = cap // 2
    if S % 8 != 0:                        # keep in-kernel reshapes layout-trivial
        return 1, S
    q_cands = [S] + [t for t in (S // 2, S // 4, S // 8)
                     if t >= 8 and t % 8 == 0 and S % t == 0]
    best, best_score = (1, q_cands[-1]), -1
    for bt in range(1, N + 1):
        if N % bt:
            continue
        for qt in q_cands:
            if _step_vmem_bytes(bt, qt, S, D) > budget:
                continue
            steps = (N // bt) * (S // qt)
            if N >= 2 and steps < 2:      # keep >=2 parallel steps (v7x has 2 TensorCores)
                continue
            score = bt * qt               # biggest M per step = best MXU fill / least overhead
            if score > best_score:
                best_score, best = score, (bt, qt)
    return best


def self_attention_block(seq, mask, params, num_heads, *,
                         compute_dtype=jnp.bfloat16,
                         exp_dtype=jnp.float32,
                         approx_softmax=True,
                         batch_tile=None, q_tile=None,
                         out_dtype=None):
    """seq: (N, S, D), mask: (S, S) with 1 = attend. Eval-mode (dropout = identity) forward.

    compute_dtype=jnp.float32 + approx_softmax=False is the numerically faithful path; the bf16
    default is the fast MXU path.  exp_dtype=jnp.bfloat16 enables the bf16 EUP exp path
    (v6e / v7x only — keep f32 on v5e).  Pass seq in bf16 (and out_dtype=bf16) to halve HBM I/O.
    """
    N, S, D = seq.shape
    H = num_heads
    assert D % H == 0

    auto_bt, auto_qt = _choose_tiles(N, S, D)
    bt = auto_bt if batch_tile is None else batch_tile
    qt = auto_qt if q_tile is None else q_tile
    assert N % bt == 0, "batch_tile must divide N"
    assert S % qt == 0, "q_tile must divide S"
    if qt != S:
        assert qt % 8 == 0, "q_tile must be a multiple of 8 (sublane tiling)"
    if bt > 1:
        assert S % 8 == 0 and qt % 8 == 0, \
            "batch_tile > 1 requires S and q_tile to be multiples of 8 (layout-trivial reshapes)"

    scale = 1.0 / math.sqrt(D / H)        # sqrt(embed_dim / num_heads), as in the torch module

    # Q weight/bias with the softmax scale folded in; fused [K|V] weight; whole Wo (one K=D matmul).
    wq = (params["wq"].T * scale).astype(compute_dtype)                   # (D, D)
    bq = (params["bq"] * scale).reshape(1, D).astype(jnp.float32)
    wkv = jnp.concatenate([params["wk"].T, params["wv"].T], axis=1).astype(compute_dtype)
    bkv = jnp.concatenate([params["bk"], params["bv"]]).reshape(1, 2 * D).astype(jnp.float32)
    wo = params["wo"].T.astype(compute_dtype)                             # (D, D)
    bo = params["bo"].reshape(1, D).astype(jnp.float32)
    lnw = params["ln_w"].reshape(1, D).astype(jnp.float32)
    lnb = params["ln_b"].reshape(1, D).astype(jnp.float32)

    # Additive mask precomputed once (batch/head invariant).
    neg_mask = (1.0 - mask.astype(jnp.float32)) * -1.0e9

    if out_dtype is None:
        out_dtype = seq.dtype

    kernel = functools.partial(_self_attn_block_kernel,
                               num_heads=H, compute_dtype=compute_dtype,
                               exp_dtype=exp_dtype, approx_recip=approx_softmax)

    grid = (N // bt, S // qt)
    cap = _vmem_capacity_bytes()
    vmem_limit = max(32 * 1024 * 1024, int(cap * 3 // 4))

    def build(single_buffer_consts):
        def const_spec(shape):
            if single_buffer_consts:
                return pl.BlockSpec(shape, lambda n, i: (0, 0),
                                    pipeline_mode=pl.Buffered(1))
            return pl.BlockSpec(shape, lambda n, i: (0, 0))

        return pl.pallas_call(
            kernel,
            out_shape=jax.ShapeDtypeStruct((N, S, D), out_dtype),
            grid=grid,
            in_specs=[
                pl.BlockSpec((bt, S, D), lambda n, i: (n, 0, 0)),   # seq (full S for K/V)
                pl.BlockSpec((qt, S), lambda n, i: (i, 0)),         # additive mask (query rows)
                const_spec((D, D)),                                 # Wq^T (scale folded)
                const_spec((1, D)),                                 # bq (scaled)
                const_spec((D, 2 * D)),                             # fused [Wk^T | Wv^T]
                const_spec((1, 2 * D)),                             # fused [bk | bv]
                const_spec((D, D)),                                 # Wo^T
                const_spec((1, D)),                                 # bo
                const_spec((1, D)),                                 # LN weight
                const_spec((1, D)),                                 # LN bias
            ],
            out_specs=pl.BlockSpec((bt, qt, D), lambda n, i: (n, i, 0)),
            compiler_params=pltpu.CompilerParams(
                dimension_semantics=("parallel", "parallel"),
                vmem_limit_bytes=vmem_limit),
        )

    args = (seq, neg_mask, wq, bq, wkv, bkv, wo, bo, lnw, lnb)
    try:
        return build(True)(*args)
    except Exception:
        # pipeline_mode=pl.Buffered(1) not supported here -> fall back to default buffering.
        return build(False)(*args)


def _reference(seq, mask, params, num_heads):
    # Pure-JAX reference mirroring the PyTorch module (dropout = identity).
    N, S, D = seq.shape
    H = num_heads
    hd = D // H
    q = seq @ params["wq"].T + params["bq"]
    k = seq @ params["wk"].T + params["bk"]
    v = seq @ params["wv"].T + params["bv"]
    q = q.reshape(N, S, H, hd)
    k = k.reshape(N, S, H, hd)
    v = v.reshape(N, S, H, hd)
    dot = jnp.einsum("NSHD,NTHD->NHST", q, k) / math.sqrt(D / H)
    dot = dot + (1.0 - mask) * -1.0e9
    attn = jax.nn.softmax(dot, axis=-1)
    out = jnp.einsum("NHST,NTHD->NSHD", attn, v).reshape(N, S, D)
    out = out @ params["wo"].T + params["bo"]
    r = out + seq
    mu = jnp.mean(r, axis=-1, keepdims=True)
    var = jnp.mean((r - mu) ** 2, axis=-1, keepdims=True)
    rn = (r - mu) / jnp.sqrt(var + 1e-5)
    return rn * params["ln_w"] + params["ln_b"]


if __name__ == "__main__":
    key = jax.random.PRNGKey(0)
    keys = jax.random.split(key, 12)

    D, H = 32, 4
    scale = 1.0 / math.sqrt(D)
    params = {
        "wq": jax.random.uniform(keys[0], (D, D), jnp.float32, -scale, scale),
        "bq": jax.random.uniform(keys[1], (D,), jnp.float32, -scale, scale),
        "wk": jax.random.uniform(keys[2], (D, D), jnp.float32, -scale, scale),
        "bk": jax.random.uniform(keys[3], (D,), jnp.float32, -scale, scale),
        "wv": jax.random.uniform(keys[4], (D, D), jnp.float32, -scale, scale),
        "bv": jax.random.uniform(keys[5], (D,), jnp.float32, -scale, scale),
        "wo": jax.random.uniform(keys[6], (D, D), jnp.float32, -scale, scale),
        "bo": jax.random.uniform(keys[7], (D,), jnp.float32, -scale, scale),
        "ln_w": jnp.ones((D,), jnp.float32),    # torch LayerNorm default init
        "ln_b": jnp.zeros((D,), jnp.float32),
    }

    # --- case 1: N=2, S=8 (auto tiles -> batch_tile=1, q_tile=S, grid (2,1)) ---
    N, S = 2, 8
    seq = jax.random.normal(keys[8], (N, S, D), jnp.float32)
    mask = jnp.tril(jnp.ones((S, S), jnp.float32))          # causal, 1 = attend
    ref = _reference(seq, mask, params, H)

    out_fast = jax.block_until_ready(self_attention_block(seq, mask, params, H))
    out_f32 = jax.block_until_ready(self_attention_block(
        seq, mask, params, H, compute_dtype=jnp.float32, approx_softmax=False))
    out_bt2 = jax.block_until_ready(self_attention_block(
        seq, mask, params, H, compute_dtype=jnp.float32, approx_softmax=False,
        batch_tile=2, q_tile=S))                            # multi-batch block path

    assert out_fast.shape == (N, S, D)
    assert jnp.allclose(out_f32, ref, atol=5e-4, rtol=5e-4), "f32 path mismatch vs reference"
    assert jnp.allclose(out_bt2, ref, atol=5e-4, rtol=5e-4), "batch-tiled path mismatch vs reference"
    assert jnp.allclose(out_fast, ref, atol=3e-2, rtol=3e-2), "bf16 path mismatch vs reference"

    # --- case 2: query-tiled grid (N=2, S=16 split into two q tiles of 8, grid (2,2)) ---
    N2, S2 = 2, 16
    seq2 = jax.random.normal(keys[9], (N2, S2, D), jnp.float32)
    mask2 = jnp.tril(jnp.ones((S2, S2), jnp.float32))
    ref2 = _reference(seq2, mask2, params, H)
    out_qt = jax.block_until_ready(self_attention_block(
        seq2, mask2, params, H, compute_dtype=jnp.float32, approx_softmax=False,
        batch_tile=1, q_tile=8))
    assert jnp.allclose(out_qt, ref2, atol=5e-4, rtol=5e-4), "query-tiled path mismatch vs reference"

    print("KERNEL_OK")
</pallas_src>

<mosaic_0001>
module attributes {stable_mosaic.version = 11 : i64} {
  func.func @_self_attn_block_kernel(%arg0: i32, %arg1: i32, %arg2: memref<1x8x32xf32, #tpu.memory_space<vmem>>, %arg3: memref<8x8xf32, #tpu.memory_space<vmem>>, %arg4: memref<32x32xbf16, #tpu.memory_space<vmem>>, %arg5: memref<1x32xf32, #tpu.memory_space<vmem>>, %arg6: memref<32x64xbf16, #tpu.memory_space<vmem>>, %arg7: memref<1x64xf32, #tpu.memory_space<vmem>>, %arg8: memref<32x32xbf16, #tpu.memory_space<vmem>>, %arg9: memref<1x32xf32, #tpu.memory_space<vmem>>, %arg10: memref<1x32xf32, #tpu.memory_space<vmem>>, %arg11: memref<1x32xf32, #tpu.memory_space<vmem>>, %arg12: memref<1x8x32xf32, #tpu.memory_space<vmem>>) attributes {dimension_semantics = [#tpu.dimension_semantics<parallel>, #tpu.dimension_semantics<parallel>], iteration_bounds = array<i64: 2, 1>, scalar_prefetch = 0 : i64, scratch_operands = 0 : i64, tpu.core_type = #tpu.core_type<tc>, window_params = [{transform_indices = @transform_0, window_bounds = array<i64: 1, 8, 32>}, {transform_indices = @transform_1, window_bounds = array<i64: 8, 8>}, {pipeline_mode = #tpu.pipeline_mode<synchronous>, transform_indices = @transform_2, window_bounds = array<i64: 32, 32>}, {pipeline_mode = #tpu.pipeline_mode<synchronous>, transform_indices = @transform_3, window_bounds = array<i64: 1, 32>}, {pipeline_mode = #tpu.pipeline_mode<synchronous>, transform_indices = @transform_4, window_bounds = array<i64: 32, 64>}, {pipeline_mode = #tpu.pipeline_mode<synchronous>, transform_indices = @transform_5, window_bounds = array<i64: 1, 64>}, {pipeline_mode = #tpu.pipeline_mode<synchronous>, transform_indices = @transform_6, window_bounds = array<i64: 32, 32>}, {pipeline_mode = #tpu.pipeline_mode<synchronous>, transform_indices = @transform_7, window_bounds = array<i64: 1, 32>}, {pipeline_mode = #tpu.pipeline_mode<synchronous>, transform_indices = @transform_8, window_bounds = array<i64: 1, 32>}, {pipeline_mode = #tpu.pipeline_mode<synchronous>, transform_indices = @transform_9, window_bounds = array<i64: 1, 32>}, {transform_indices = @transform_10, window_bounds = array<i64: 1, 8, 32>}]} {
    %c8_i32 = arith.constant 8 : i32
    %0 = arith.muli %arg1, %c8_i32 : i32
    %1 = tpu.assume_multiple %0, 8 : i32
    %c0 = arith.constant 0 : index
    %2 = arith.index_cast %1 : i32 to index
    %c0_0 = arith.constant 0 : index
    %3 = vector.load %arg2[%c0, %2, %c0_0] : memref<1x8x32xf32, #tpu.memory_space<vmem>>, vector<1x8x32xf32>
    %4 = vector.shape_cast %3 : vector<1x8x32xf32> to vector<8x32xf32>
    %5 = arith.truncf %4 : vector<8x32xf32> to vector<8x32xbf16>
    %c0_1 = arith.constant 0 : index
    %c0_2 = arith.constant 0 : index
    %c0_3 = arith.constant 0 : index
    %6 = vector.load %arg2[%c0_1, %c0_2, %c0_3] : memref<1x8x32xf32, #tpu.memory_space<vmem>>, vector<1x8x32xf32>
    %7 = arith.truncf %6 : vector<1x8x32xf32> to vector<1x8x32xbf16>
    %8 = vector.shape_cast %7 : vector<1x8x32xbf16> to vector<8x32xbf16>
    %c0_4 = arith.constant 0 : index
    %c0_5 = arith.constant 0 : index
    %9 = vector.load %arg4[%c0_4, %c0_5] : memref<32x32xbf16, #tpu.memory_space<vmem>>, vector<32x32xbf16>
    %cst = arith.constant dense<0.000000e+00> : vector<8x32xf32>
    %10 = tpu.matmul %5, %9, %cst {dimension_numbers = #tpu.dot_dimension_numbers<[1], [0], [0], [1], [0, 0, 1, 1], [], []>} : vector<8x32xbf16>, vector<32x32xbf16>, vector<8x32xf32> -> vector<8x32xf32>
    %c0_6 = arith.constant 0 : index
    %c0_7 = arith.constant 0 : index
    %11 = vector.load %arg5[%c0_6, %c0_7] : memref<1x32xf32, #tpu.memory_space<vmem>>, vector<1x32xf32>
    %12 = vector.broadcast %11 : vector<1x32xf32> to vector<8x32xf32>
    %13 = arith.addf %10, %12 : vector<8x32xf32>
    %14 = arith.truncf %13 : vector<8x32xf32> to vector<8x32xbf16>
    %c0_8 = arith.constant 0 : index
    %c0_9 = arith.constant 0 : index
    %15 = vector.load %arg6[%c0_8, %c0_9] : memref<32x64xbf16, #tpu.memory_space<vmem>>, vector<32x64xbf16>
    %cst_10 = arith.constant dense<0.000000e+00> : vector<8x64xf32>
    %16 = tpu.matmul %8, %15, %cst_10 {dimension_numbers = #tpu.dot_dimension_numbers<[1], [0], [0], [1], [0, 0, 1, 1], [], []>} : vector<8x32xbf16>, vector<32x64xbf16>, vector<8x64xf32> -> vector<8x64xf32>
    %c0_11 = arith.constant 0 : index
    %c0_12 = arith.constant 0 : index
    %17 = vector.load %arg7[%c0_11, %c0_12] : memref<1x64xf32, #tpu.memory_space<vmem>>, vector<1x64xf32>
    %18 = vector.broadcast %17 : vector<1x64xf32> to vector<8x64xf32>
    %19 = arith.addf %16, %18 : vector<8x64xf32>
    %20 = arith.truncf %19 : vector<8x64xf32> to vector<8x64xbf16>
    %21 = vector.extract_strided_slice %20 {offsets = [0, 0], sizes = [8, 32], strides = [1, 1]} : vector<8x64xbf16> to vector<8x32xbf16>
    %22 = vector.extract_strided_slice %20 {offsets = [0, 32], sizes = [8, 32], strides = [1, 1]} : vector<8x64xbf16> to vector<8x32xbf16>
    %c0_13 = arith.constant 0 : index
    %c0_14 = arith.constant 0 : index
    %23 = vector.load %arg3[%c0_13, %c0_14] : memref<8x8xf32, #tpu.memory_space<vmem>>, vector<8x8xf32>
    %24 = vector.shape_cast %23 : vector<8x8xf32> to vector<1x8x8xf32>
    %25 = vector.extract_strided_slice %14 {offsets = [0, 0], sizes = [8, 8], strides = [1, 1]} : vector<8x32xbf16> to vector<8x8xbf16>
    %26 = vector.shape_cast %25 : vector<8x8xbf16> to vector<1x8x8xbf16>
    %27 = vector.extract_strided_slice %21 {offsets = [0, 0], sizes = [8, 8], strides = [1, 1]} : vector<8x32xbf16> to vector<8x8xbf16>
    %28 = vector.shape_cast %27 : vector<8x8xbf16> to vector<1x8x8xbf16>
    %29 = vector.extract_strided_slice %22 {offsets = [0, 0], sizes = [8, 8], strides = [1, 1]} : vector<8x32xbf16> to vector<8x8xbf16>
    %30 = vector.shape_cast %29 : vector<8x8xbf16> to vector<1x8x8xbf16>
    "tpu.trace_start"() <{level = 10 : i32, message = "bqd,bkd->bqk"}> : () -> ()
    %cst_15 = arith.constant dense<0.000000e+00> : vector<1x8x8xf32>
    %31 = tpu.matmul %26, %28, %cst_15 {dimension_numbers = #tpu.dot_dimension_numbers<[2], [2], [1], [1], [0, 0, 0, 1, 1, 1], [0], [0]>} : vector<1x8x8xbf16>, vector<1x8x8xbf16>, vector<1x8x8xf32> -> vector<1x8x8xf32>
    "tpu.trace_stop"() : () -> ()
    %32 = arith.addf %31, %24 : vector<1x8x8xf32>
    %cst_16 = arith.constant dense<0xFF800000> : vector<1x8xf32>
    %33 = vector.multi_reduction <maximumf>, %32, %cst_16 [2] : vector<1x8x8xf32> to vector<1x8xf32>
    %34 = vector.shape_cast %33 : vector<1x8xf32> to vector<1x8x1xf32>
    %35 = vector.broadcast %34 : vector<1x8x1xf32> to vector<1x8x8xf32>
    %36 = arith.subf %32, %35 : vector<1x8x8xf32>
    %37 = math.exp %36 : vector<1x8x8xf32>
    %cst_17 = arith.constant dense<0.000000e+00> : vector<1x8xf32>
    %38 = vector.multi_reduction <add>, %37, %cst_17 [2] : vector<1x8x8xf32> to vector<1x8xf32>
    %39 = vector.shape_cast %38 : vector<1x8xf32> to vector<1x8x1xf32>
    %40 = tpu.reciprocal %39 {approx = true} : vector<1x8x1xf32> -> vector<1x8x1xf32>
    %41 = vector.broadcast %40 : vector<1x8x1xf32> to vector<1x8x8xf32>
    %42 = arith.mulf %37, %41 : vector<1x8x8xf32>
    %43 = arith.truncf %42 : vector<1x8x8xf32> to vector<1x8x8xbf16>
    "tpu.trace_start"() <{level = 10 : i32, message = "bqk,bkd->bqd"}> : () -> ()
    %cst_18 = arith.constant dense<0.000000e+00> : vector<1x8x8xf32>
    %44 = tpu.matmul %43, %30, %cst_18 {dimension_numbers = #tpu.dot_dimension_numbers<[2], [1], [1], [2], [0, 0, 0, 1, 1, 2], [0], [0]>} : vector<1x8x8xbf16>, vector<1x8x8xbf16>, vector<1x8x8xf32> -> vector<1x8x8xf32>
    "tpu.trace_stop"() : () -> ()
    %45 = vector.shape_cast %44 : vector<1x8x8xf32> to vector<8x8xf32>
    %46 = arith.truncf %45 : vector<8x8xf32> to vector<8x8xbf16>
    %47 = vector.extract_strided_slice %14 {offsets = [0, 8], sizes = [8, 8], strides = [1, 1]} : vector<8x32xbf16> to vector<8x8xbf16>
    %48 = vector.shape_cast %47 : vector<8x8xbf16> to vector<1x8x8xbf16>
    %49 = vector.extract_strided_slice %21 {offsets = [0, 8], sizes = [8, 8], strides = [1, 1]} : vector<8x32xbf16> to vector<8x8xbf16>
    %50 = vector.shape_cast %49 : vector<8x8xbf16> to vector<1x8x8xbf16>
    %51 = vector.extract_strided_slice %22 {offsets = [0, 8], sizes = [8, 8], strides = [1, 1]} : vector<8x32xbf16> to vector<8x8xbf16>
    %52 = vector.shape_cast %51 : vector<8x8xbf16> to vector<1x8x8xbf16>
    "tpu.trace_start"() <{level = 10 : i32, message = "bqd,bkd->bqk"}> : () -> ()
    %cst_19 = arith.constant dense<0.000000e+00> : vector<1x8x8xf32>
    %53 = tpu.matmul %48, %50, %cst_19 {dimension_numbers = #tpu.dot_dimension_numbers<[2], [2], [1], [1], [0, 0, 0, 1, 1, 1], [0], [0]>} : vector<1x8x8xbf16>, vector<1x8x8xbf16>, vector<1x8x8xf32> -> vector<1x8x8xf32>
    "tpu.trace_stop"() : () -> ()
    %54 = arith.addf %53, %24 : vector<1x8x8xf32>
    %cst_20 = arith.constant dense<0xFF800000> : vector<1x8xf32>
    %55 = vector.multi_reduction <maximumf>, %54, %cst_20 [2] : vector<1x8x8xf32> to vector<1x8xf32>
    %56 = vector.shape_cast %55 : vector<1x8xf32> to vector<1x8x1xf32>
    %57 = vector.broadcast %56 : vector<1x8x1xf32> to vector<1x8x8xf32>
    %58 = arith.subf %54, %57 : vector<1x8x8xf32>
    %59 = math.exp %58 : vector<1x8x8xf32>
    %cst_21 = arith.constant dense<0.000000e+00> : vector<1x8xf32>
    %60 = vector.multi_reduction <add>, %59, %cst_21 [2] : vector<1x8x8xf32> to vector<1x8xf32>
    %61 = vector.shape_cast %60 : vector<1x8xf32> to vector<1x8x1xf32>
    %62 = tpu.reciprocal %61 {approx = true} : vector<1x8x1xf32> -> vector<1x8x1xf32>
    %63 = vector.broadcast %62 : vector<1x8x1xf32> to vector<1x8x8xf32>
    %64 = arith.mulf %59, %63 : vector<1x8x8xf32>
    %65 = arith.truncf %64 : vector<1x8x8xf32> to vector<1x8x8xbf16>
    "tpu.trace_start"() <{level = 10 : i32, message = "bqk,bkd->bqd"}> : () -> ()
    %cst_22 = arith.constant dense<0.000000e+00> : vector<1x8x8xf32>
    %66 = tpu.matmul %65, %52, %cst_22 {dimension_numbers = #tpu.dot_dimension_numbers<[2], [1], [1], [2], [0, 0, 0, 1, 1, 2], [0], [0]>} : vector<1x8x8xbf16>, vector<1x8x8xbf16>, vector<1x8x8xf32> -> vector<1x8x8xf32>
    "tpu.trace_stop"() : () -> ()
    %67 = vector.shape_cast %66 : vector<1x8x8xf32> to vector<8x8xf32>
    %68 = arith.truncf %67 : vector<8x8xf32> to vector<8x8xbf16>
    %69 = vector.extract_strided_slice %14 {offsets = [0, 16], sizes = [8, 8], strides = [1, 1]} : vector<8x32xbf16> to vector<8x8xbf16>
    %70 = vector.shape_cast %69 : vector<8x8xbf16> to vector<1x8x8xbf16>
    %71 = vector.extract_strided_slice %21 {offsets = [0, 16], sizes = [8, 8], strides = [1, 1]} : vector<8x32xbf16> to vector<8x8xbf16>
    %72 = vector.shape_cast %71 : vector<8x8xbf16> to vector<1x8x8xbf16>
    %73 = vector.extract_strided_slice %22 {offsets = [0, 16], sizes = [8, 8], strides = [1, 1]} : vector<8x32xbf16> to vector<8x8xbf16>
    %74 = vector.shape_cast %73 : vector<8x8xbf16> to vector<1x8x8xbf16>
    "tpu.trace_start"() <{level = 10 : i32, message = "bqd,bkd->bqk"}> : () -> ()
    %cst_23 = arith.constant dense<0.000000e+00> : vector<1x8x8xf32>
    %75 = tpu.matmul %70, %72, %cst_23 {dimension_numbers = #tpu.dot_dimension_numbers<[2], [2], [1], [1], [0, 0, 0, 1, 1, 1], [0], [0]>} : vector<1x8x8xbf16>, vector<1x8x8xbf16>, vector<1x8x8xf32> -> vector<1x8x8xf32>
    "tpu.trace_stop"() : () -> ()
    %76 = arith.addf %75, %24 : vector<1x8x8xf32>
    %cst_24 = arith.constant dense<0xFF800000> : vector<1x8xf32>
    %77 = vector.multi_reduction <maximumf>, %76, %cst_24 [2] : vector<1x8x8xf32> to vector<1x8xf32>
    %78 = vector.shape_cast %77 : vector<1x8xf32> to vector<1x8x1xf32>
    %79 = vector.broadcast %78 : vector<1x8x1xf32> to vector<1x8x8xf32>
    %80 = arith.subf %76, %79 : vector<1x8x8xf32>
    %81 = math.exp %80 : vector<1x8x8xf32>
    %cst_25 = arith.constant dense<0.000000e+00> : vector<1x8xf32>
    %82 = vector.multi_reduction <add>, %81, %cst_25 [2] : vector<1x8x8xf32> to vector<1x8xf32>
    %83 = vector.shape_cast %82 : vector<1x8xf32> to vector<1x8x1xf32>
    %84 = tpu.reciprocal %83 {approx = true} : vector<1x8x1xf32> -> vector<1x8x1xf32>
    %85 = vector.broadcast %84 : vector<1x8x1xf32> to vector<1x8x8xf32>
    %86 = arith.mulf %81, %85 : vector<1x8x8xf32>
    %87 = arith.truncf %86 : vector<1x8x8xf32> to vector<1x8x8xbf16>
    "tpu.trace_start"() <{level = 10 : i32, message = "bqk,bkd->bqd"}> : () -> ()
    %cst_26 = arith.constant dense<0.000000e+00> : vector<1x8x8xf32>
    %88 = tpu.matmul %87, %74, %cst_26 {dimension_numbers = #tpu.dot_dimension_numbers<[2], [1], [1], [2], [0, 0, 0, 1, 1, 2], [0], [0]>} : vector<1x8x8xbf16>, vector<1x8x8xbf16>, vector<1x8x8xf32> -> vector<1x8x8xf32>
    "tpu.trace_stop"() : () -> ()
    %89 = vector.shape_cast %88 : vector<1x8x8xf32> to vector<8x8xf32>
    %90 = arith.truncf %89 : vector<8x8xf32> to vector<8x8xbf16>
    %91 = vector.extract_strided_slice %14 {offsets = [0, 24], sizes = [8, 8], strides = [1, 1]} : vector<8x32xbf16> to vector<8x8xbf16>
    %92 = vector.shape_cast %91 : vector<8x8xbf16> to vector<1x8x8xbf16>
    %93 = vector.extract_strided_slice %21 {offsets = [0, 24], sizes = [8, 8], strides = [1, 1]} : vector<8x32xbf16> to vector<8x8xbf16>
    %94 = vector.shape_cast %93 : vector<8x8xbf16> to vector<1x8x8xbf16>
    %95 = vector.extract_strided_slice %22 {offsets = [0, 24], sizes = [8, 8], strides = [1, 1]} : vector<8x32xbf16> to vector<8x8xbf16>
    %96 = vector.shape_cast %95 : vector<8x8xbf16> to vector<1x8x8xbf16>
    "tpu.trace_start"() <{level = 10 : i32, message = "bqd,bkd->bqk"}> : () -> ()
    %cst_27 = arith.constant dense<0.000000e+00> : vector<1x8x8xf32>
    %97 = tpu.matmul %92, %94, %cst_27 {dimension_numbers = #tpu.dot_dimension_numbers<[2], [2], [1], [1], [0, 0, 0, 1, 1, 1], [0], [0]>} : vector<1x8x8xbf16>, vector<1x8x8xbf16>, vector<1x8x8xf32> -> vector<1x8x8xf32>
    "tpu.trace_stop"() : () -> ()
    %98 = arith.addf %97, %24 : vector<1x8x8xf32>
    %cst_28 = arith.constant dense<0xFF800000> : vector<1x8xf32>
    %99 = vector.multi_reduction <maximumf>, %98, %cst_28 [2] : vector<1x8x8xf32> to vector<1x8xf32>
    %100 = vector.shape_cast %99 : vector<1x8xf32> to vector<1x8x1xf32>
    %101 = vector.broadcast %100 : vector<1x8x1xf32> to vector<1x8x8xf32>
    %102 = arith.subf %98, %101 : vector<1x8x8xf32>
    %103 = math.exp %102 : vector<1x8x8xf32>
    %cst_29 = arith.constant dense<0.000000e+00> : vector<1x8xf32>
    %104 = vector.multi_reduction <add>, %103, %cst_29 [2] : vector<1x8x8xf32> to vector<1x8xf32>
    %105 = vector.shape_cast %104 : vector<1x8xf32> to vector<1x8x1xf32>
    %106 = tpu.reciprocal %105 {approx = true} : vector<1x8x1xf32> -> vector<1x8x1xf32>
    %107 = vector.broadcast %106 : vector<1x8x1xf32> to vector<1x8x8xf32>
    %108 = arith.mulf %103, %107 : vector<1x8x8xf32>
    %109 = arith.truncf %108 : vector<1x8x8xf32> to vector<1x8x8xbf16>
    "tpu.trace_start"() <{level = 10 : i32, message = "bqk,bkd->bqd"}> : () -> ()
    %cst_30 = arith.constant dense<0.000000e+00> : vector<1x8x8xf32>
    %110 = tpu.matmul %109, %96, %cst_30 {dimension_numbers = #tpu.dot_dimension_numbers<[2], [1], [1], [2], [0, 0, 0, 1, 1, 2], [0], [0]>} : vector<1x8x8xbf16>, vector<1x8x8xbf16>, vector<1x8x8xf32> -> vector<1x8x8xf32>
    "tpu.trace_stop"() : () -> ()
    %111 = vector.shape_cast %110 : vector<1x8x8xf32> to vector<8x8xf32>
    %112 = arith.truncf %111 : vector<8x8xf32> to vector<8x8xbf16>
    %113 = tpu.concatenate %46, %68, %90, %112 in 1 : vector<8x8xbf16>, vector<8x8xbf16>, vector<8x8xbf16>, vector<8x8xbf16> -> vector<8x32xbf16>
    %c0_31 = arith.constant 0 : index
    %c0_32 = arith.constant 0 : index
    %114 = vector.load %arg8[%c0_31, %c0_32] : memref<32x32xbf16, #tpu.memory_space<vmem>>, vector<32x32xbf16>
    %cst_33 = arith.constant dense<0.000000e+00> : vector<8x32xf32>
    %115 = tpu.matmul %113, %114, %cst_33 {dimension_numbers = #tpu.dot_dimension_numbers<[1], [0], [0], [1], [0, 0, 1, 1], [], []>} : vector<8x32xbf16>, vector<32x32xbf16>, vector<8x32xf32> -> vector<8x32xf32>
    %c0_34 = arith.constant 0 : index
    %c0_35 = arith.constant 0 : index
    %116 = vector.load %arg9[%c0_34, %c0_35] : memref<1x32xf32, #tpu.memory_space<vmem>>, vector<1x32xf32>
    %117 = vector.broadcast %116 : vector<1x32xf32> to vector<8x32xf32>
    %118 = arith.addf %115, %117 : vector<8x32xf32>
    %119 = vector.shape_cast %3 : vector<1x8x32xf32> to vector<8x32xf32>
    %120 = arith.addf %118, %119 : vector<8x32xf32>
    %cst_36 = arith.constant dense<0.000000e+00> : vector<8xf32>
    %121 = vector.multi_reduction <add>, %120, %cst_36 [1] : vector<8x32xf32> to vector<8xf32>
    %122 = vector.shape_cast %121 : vector<8xf32> to vector<8x1xf32>
    %cst_37 = arith.constant 3.200000e+01 : f32
    %123 = vector.broadcast %cst_37 : f32 to vector<8x1xf32>
    %124 = arith.divf %122, %123 : vector<8x1xf32>
    %125 = vector.broadcast %124 : vector<8x1xf32> to vector<8x32xf32>
    %126 = arith.subf %120, %125 : vector<8x32xf32>
    %127 = vector.broadcast %124 : vector<8x1xf32> to vector<8x32xf32>
    %128 = arith.subf %120, %127 : vector<8x32xf32>
    %129 = arith.mulf %126, %128 : vector<8x32xf32>
    %cst_38 = arith.constant dense<0.000000e+00> : vector<8xf32>
    %130 = vector.multi_reduction <add>, %129, %cst_38 [1] : vector<8x32xf32> to vector<8xf32>
    %131 = vector.shape_cast %130 : vector<8xf32> to vector<8x1xf32>
    %cst_39 = arith.constant 3.200000e+01 : f32
    %132 = vector.broadcast %cst_39 : f32 to vector<8x1xf32>
    %133 = arith.divf %131, %132 : vector<8x1xf32>
    %134 = vector.broadcast %124 : vector<8x1xf32> to vector<8x32xf32>
    %135 = arith.subf %120, %134 : vector<8x32xf32>
    %cst_40 = arith.constant 9.99999974E-6 : f32
    %136 = vector.broadcast %cst_40 : f32 to vector<8x1xf32>
    %137 = arith.addf %133, %136 : vector<8x1xf32>
    %138 = math.rsqrt %137 : vector<8x1xf32>
    %139 = vector.broadcast %138 : vector<8x1xf32> to vector<8x32xf32>
    %140 = arith.mulf %135, %139 : vector<8x32xf32>
    %c0_41 = arith.constant 0 : index
    %c0_42 = arith.constant 0 : index
    %141 = vector.load %arg10[%c0_41, %c0_42] : memref<1x32xf32, #tpu.memory_space<vmem>>, vector<1x32xf32>
    %142 = vector.broadcast %141 : vector<1x32xf32> to vector<8x32xf32>
    %143 = arith.mulf %140, %142 : vector<8x32xf32>
    %c0_43 = arith.constant 0 : index
    %c0_44 = arith.constant 0 : index
    %144 = vector.load %arg11[%c0_43, %c0_44] : memref<1x32xf32, #tpu.memory_space<vmem>>, vector<1x32xf32>
    %145 = vector.broadcast %144 : vector<1x32xf32> to vector<8x32xf32>
    %146 = arith.addf %143, %145 : vector<8x32xf32>
    %147 = vector.shape_cast %146 : vector<8x32xf32> to vector<1x8x32xf32>
    %c0_45 = arith.constant 0 : index
    %c0_46 = arith.constant 0 : index
    %c0_47 = arith.constant 0 : index
    %148 = vector.load %arg12[%c0_45, %c0_46, %c0_47] : memref<1x8x32xf32, #tpu.memory_space<vmem>>, vector<1x8x32xf32>
    tpu.vector_store %arg12[%c0_45, %c0_46, %c0_47], %147 {strides = array<i32>} : memref<1x8x32xf32, #tpu.memory_space<vmem>>, vector<1x8x32xf32>,
    return
  }
  func.func @transform_0(%arg0: i32, %arg1: i32) -> (i32, i32, i32) {
    %c0_i32 = arith.constant 0 : i32
    %c0_i32_0 = arith.constant 0 : i32
    %c0_i32_1 = arith.constant 0 : i32
    return %arg0, %c0_i32, %c0_i32_0 : i32, i32, i32
  }
  func.func @transform_1(%arg0: i32, %arg1: i32) -> (i32, i32) {
    %c0_i32 = arith.constant 0 : i32
    %c0_i32_0 = arith.constant 0 : i32
    return %arg1, %c0_i32 : i32, i32
  }
  func.func @transform_2(%arg0: i32, %arg1: i32) -> (i32, i32) {
    %c0_i32 = arith.constant 0 : i32
    %c0_i32_0 = arith.constant 0 : i32
    %c0_i32_1 = arith.constant 0 : i32
    return %c0_i32, %c0_i32_0 : i32, i32
  }
  func.func @transform_3(%arg0: i32, %arg1: i32) -> (i32, i32) {
    %c0_i32 = arith.constant 0 : i32
    %c0_i32_0 = arith.constant 0 : i32
    %c0_i32_1 = arith.constant 0 : i32
    return %c0_i32, %c0_i32_0 : i32, i32
  }
  func.func @transform_4(%arg0: i32, %arg1: i32) -> (i32, i32) {
    %c0_i32 = arith.constant 0 : i32
    %c0_i32_0 = arith.constant 0 : i32
    %c0_i32_1 = arith.constant 0 : i32
    return %c0_i32, %c0_i32_0 : i32, i32
  }
  func.func @transform_5(%arg0: i32, %arg1: i32) -> (i32, i32) {
    %c0_i32 = arith.constant 0 : i32
    %c0_i32_0 = arith.constant 0 : i32
    %c0_i32_1 = arith.constant 0 : i32
    return %c0_i32, %c0_i32_0 : i32, i32
  }
  func.func @transform_6(%arg0: i32, %arg1: i32) -> (i32, i32) {
    %c0_i32 = arith.constant 0 : i32
    %c0_i32_0 = arith.constant 0 : i32
    %c0_i32_1 = arith.constant 0 : i32
    return %c0_i32, %c0_i32_0 : i32, i32
  }
  func.func @transform_7(%arg0: i32, %arg1: i32) -> (i32, i32) {
    %c0_i32 = arith.constant 0 : i32
    %c0_i32_0 = arith.constant 0 : i32
    %c0_i32_1 = arith.constant 0 : i32
    return %c0_i32, %c0_i32_0 : i32, i32
  }
  func.func @transform_8(%arg0: i32, %arg1: i32) -> (i32, i32) {
    %c0_i32 = arith.constant 0 : i32
    %c0_i32_0 = arith.constant 0 : i32
    %c0_i32_1 = arith.constant 0 : i32
    return %c0_i32, %c0_i32_0 : i32, i32
  }
  func.func @transform_9(%arg0: i32, %arg1: i32) -> (i32, i32) {
    %c0_i32 = arith.constant 0 : i32
    %c0_i32_0 = arith.constant 0 : i32
    %c0_i32_1 = arith.constant 0 : i32
    return %c0_i32, %c0_i32_0 : i32, i32
  }
  func.func @transform_10(%arg0: i32, %arg1: i32) -> (i32, i32, i32) {
    %c0_i32 = arith.constant 0 : i32
    %c0_i32_0 = arith.constant 0 : i32
    return %arg0, %arg1, %c0_i32 : i32, i32, i32
  }
}

module attributes {stable_mosaic.version = 11 : i64} {
  func.func @_self_attn_block_kernel(%arg0: i32, %arg1: i32, %arg2: memref<1x8x32xf32, #tpu.memory_space<vmem>>, %arg3: memref<8x8xf32, #tpu.memory_space<vmem>>, %arg4: memref<32x32xbf16, #tpu.memory_space<vmem>>, %arg5: memref<1x32xf32, #tpu.memory_space<vmem>>, %arg6: memref<32x64xbf16, #tpu.memory_space<vmem>>, %arg7: memref<1x64xf32, #tpu.memory_space<vmem>>, %arg8: memref<32x32xbf16, #tpu.memory_space<vmem>>, %arg9: memref<1x32xf32, #tpu.memory_space<vmem>>, %arg10: memref<1x32xf32, #tpu.memory_space<vmem>>, %arg11: memref<1x32xf32, #tpu.memory_space<vmem>>, %arg12: memref<1x8x32xf32, #tpu.memory_space<vmem>>) attributes {dimension_semantics = [#tpu.dimension_semantics<parallel>, #tpu.dimension_semantics<parallel>], iteration_bounds = array<i64: 2, 1>, scalar_prefetch = 0 : i64, scratch_operands = 0 : i64, tpu.core_type = #tpu.core_type<tc>, window_params = [{transform_indices = @transform_0, window_bounds = array<i64: 1, 8, 32>}, {transform_indices = @transform_1, window_bounds = array<i64: 8, 8>}, {pipeline_mode = #tpu.pipeline_mode<synchronous>, transform_indices = @transform_2, window_bounds = array<i64: 32, 32>}, {pipeline_mode = #tpu.pipeline_mode<synchronous>, transform_indices = @transform_3, window_bounds = array<i64: 1, 32>}, {pipeline_mode = #tpu.pipeline_mode<synchronous>, transform_indices = @transform_4, window_bounds = array<i64: 32, 64>}, {pipeline_mode = #tpu.pipeline_mode<synchronous>, transform_indices = @transform_5, window_bounds = array<i64: 1, 64>}, {pipeline_mode = #tpu.pipeline_mode<synchronous>, transform_indices = @transform_6, window_bounds = array<i64: 32, 32>}, {pipeline_mode = #tpu.pipeline_mode<synchronous>, transform_indices = @transform_7, window_bounds = array<i64: 1, 32>}, {pipeline_mode = #tpu.pipeline_mode<synchronous>, transform_indices = @transform_8, window_bounds = array<i64: 1, 32>}, {pipeline_mode = #tpu.pipeline_mode<synchronous>, transform_indices = @transform_9, window_bounds = array<i64: 1, 32>}, {transform_indices = @transform_10, window_bounds = array<i64: 1, 8, 32>}]} {
    %c8_i32 = arith.constant 8 : i32
    %0 = arith.muli %arg1, %c8_i32 : i32
    %1 = tpu.assume_multiple %0, 8 : i32
    %c0 = arith.constant 0 : index
    %2 = arith.index_cast %1 : i32 to index
    %c0_0 = arith.constant 0 : index
    %3 = vector.load %arg2[%c0, %2, %c0_0] : memref<1x8x32xf32, #tpu.memory_space<vmem>>, vector<1x8x32xf32>
    %4 = vector.shape_cast %3 : vector<1x8x32xf32> to vector<8x32xf32>
    %5 = arith.truncf %4 : vector<8x32xf32> to vector<8x32xbf16>
    %c0_1 = arith.constant 0 : index
    %c0_2 = arith.constant 0 : index
    %c0_3 = arith.constant 0 : index
    %6 = vector.load %arg2[%c0_1, %c0_2, %c0_3] : memref<1x8x32xf32, #tpu.memory_space<vmem>>, vector<1x8x32xf32>
    %7 = arith.truncf %6 : vector<1x8x32xf32> to vector<1x8x32xbf16>
    %8 = vector.shape_cast %7 : vector<1x8x32xbf16> to vector<8x32xbf16>
    %c0_4 = arith.constant 0 : index
    %c0_5 = arith.constant 0 : index
    %9 = vector.load %arg4[%c0_4, %c0_5] : memref<32x32xbf16, #tpu.memory_space<vmem>>, vector<32x32xbf16>
    %cst = arith.constant dense<0.000000e+00> : vector<8x32xf32>
    %10 = tpu.matmul %5, %9, %cst {dimension_numbers = #tpu.dot_dimension_numbers<[1], [0], [0], [1], [0, 0, 1, 1], [], []>} : vector<8x32xbf16>, vector<32x32xbf16>, vector<8x32xf32> -> vector<8x32xf32>
    %c0_6 = arith.constant 0 : index
    %c0_7 = arith.constant 0 : index
    %11 = vector.load %arg5[%c0_6, %c0_7] : memref<1x32xf32, #tpu.memory_space<vmem>>, vector<1x32xf32>
    %12 = vector.broadcast %11 : vector<1x32xf32> to vector<8x32xf32>
    %13 = arith.addf %10, %12 : vector<8x32xf32>
    %14 = arith.truncf %13 : vector<8x32xf32> to vector<8x32xbf16>
    %c0_8 = arith.constant 0 : index
    %c0_9 = arith.constant 0 : index
    %15 = vector.load %arg6[%c0_8, %c0_9] : memref<32x64xbf16, #tpu.memory_space<vmem>>, vector<32x64xbf16>
    %cst_10 = arith.constant dense<0.000000e+00> : vector<8x64xf32>
    %16 = tpu.matmul %8, %15, %cst_10 {dimension_numbers = #tpu.dot_dimension_numbers<[1], [0], [0], [1], [0, 0, 1, 1], [], []>} : vector<8x32xbf16>, vector<32x64xbf16>, vector<8x64xf32> -> vector<8x64xf32>
    %c0_11 = arith.constant 0 : index
    %c0_12 = arith.constant 0 : index
    %17 = vector.load %arg7[%c0_11, %c0_12] : memref<1x64xf32, #tpu.memory_space<vmem>>, vector<1x64xf32>
    %18 = vector.broadcast %17 : vector<1x64xf32> to vector<8x64xf32>
    %19 = arith.addf %16, %18 : vector<8x64xf32>
    %20 = arith.truncf %19 : vector<8x64xf32> to vector<8x64xbf16>
    %21 = vector.extract_strided_slice %20 {offsets = [0, 0], sizes = [8, 32], strides = [1, 1]} : vector<8x64xbf16> to vector<8x32xbf16>
    %22 = vector.extract_strided_slice %20 {offsets = [0, 32], sizes = [8, 32], strides = [1, 1]} : vector<8x64xbf16> to vector<8x32xbf16>
    %c0_13 = arith.constant 0 : index
    %c0_14 = arith.constant 0 : index
    %23 = vector.load %arg3[%c0_13, %c0_14] : memref<8x8xf32, #tpu.memory_space<vmem>>, vector<8x8xf32>
    %24 = vector.shape_cast %23 : vector<8x8xf32> to vector<1x8x8xf32>
    %25 = vector.extract_strided_slice %14 {offsets = [0, 0], sizes = [8, 8], strides = [1, 1]} : vector<8x32xbf16> to vector<8x8xbf16>
    %26 = vector.shape_cast %25 : vector<8x8xbf16> to vector<1x8x8xbf16>
    %27 = vector.extract_strided_slice %21 {offsets = [0, 0], sizes = [8, 8], strides = [1, 1]} : vector<8x32xbf16> to vector<8x8xbf16>
    %28 = vector.shape_cast %27 : vector<8x8xbf16> to vector<1x8x8xbf16>
    %29 = vector.extract_strided_slice %22 {offsets = [0, 0], sizes = [8, 8], strides = [1, 1]} : vector<8x32xbf16> to vector<8x8xbf16>
    %30 = vector.shape_cast %29 : vector<8x8xbf16> to vector<1x8x8xbf16>
    "tpu.trace_start"() <{level = 10 : i32, message = "bqd,bkd->bqk"}> : () -> ()
    %cst_15 = arith.constant dense<0.000000e+00> : vector<1x8x8xf32>
    %31 = tpu.matmul %26, %28, %cst_15 {dimension_numbers = #tpu.dot_dimension_numbers<[2], [2], [1], [1], [0, 0, 0, 1, 1, 1], [0], [0]>} : vector<1x8x8xbf16>, vector<1x8x8xbf16>, vector<1x8x8xf32> -> vector<1x8x8xf32>
    "tpu.trace_stop"() : () -> ()
    %32 = arith.addf %31, %24 : vector<1x8x8xf32>
    %cst_16 = arith.constant dense<0xFF800000> : vector<1x8xf32>
    %33 = vector.multi_reduction <maximumf>, %32, %cst_16 [2] : vector<1x8x8xf32> to vector<1x8xf32>
    %34 = vector.shape_cast %33 : vector<1x8xf32> to vector<1x8x1xf32>
    %35 = vector.broadcast %34 : vector<1x8x1xf32> to vector<1x8x8xf32>
    %36 = arith.subf %32, %35 : vector<1x8x8xf32>
    %37 = math.exp %36 : vector<1x8x8xf32>
    %cst_17 = arith.constant dense<0.000000e+00> : vector<1x8xf32>
    %38 = vector.multi_reduction <add>, %37, %cst_17 [2] : vector<1x8x8xf32> to vector<1x8xf32>
    %39 = vector.shape_cast %38 : vector<1x8xf32> to vector<1x8x1xf32>
    %40 = tpu.reciprocal %39 {approx = true} : vector<1x8x1xf32> -> vector<1x8x1xf32>
    %41 = vector.broadcast %40 : vector<1x8x1xf32> to vector<1x8x8xf32>
    %42 = arith.mulf %37, %41 : vector<1x8x8xf32>
    %43 = arith.truncf %42 : vector<1x8x8xf32> to vector<1x8x8xbf16>
    "tpu.trace_start"() <{level = 10 : i32, message = "bqk,bkd->bqd"}> : () -> ()
    %cst_18 = arith.constant dense<0.000000e+00> : vector<1x8x8xf32>
    %44 = tpu.matmul %43, %30, %cst_18 {dimension_numbers = #tpu.dot_dimension_numbers<[2], [1], [1], [2], [0, 0, 0, 1, 1, 2], [0], [0]>} : vector<1x8x8xbf16>, vector<1x8x8xbf16>, vector<1x8x8xf32> -> vector<1x8x8xf32>
    "tpu.trace_stop"() : () -> ()
    %45 = vector.shape_cast %44 : vector<1x8x8xf32> to vector<8x8xf32>
    %46 = arith.truncf %45 : vector<8x8xf32> to vector<8x8xbf16>
    %47 = vector.extract_strided_slice %14 {offsets = [0, 8], sizes = [8, 8], strides = [1, 1]} : vector<8x32xbf16> to vector<8x8xbf16>
    %48 = vector.shape_cast %47 : vector<8x8xbf16> to vector<1x8x8xbf16>
    %49 = vector.extract_strided_slice %21 {offsets = [0, 8], sizes = [8, 8], strides = [1, 1]} : vector<8x32xbf16> to vector<8x8xbf16>
    %50 = vector.shape_cast %49 : vector<8x8xbf16> to vector<1x8x8xbf16>
    %51 = vector.extract_strided_slice %22 {offsets = [0, 8], sizes = [8, 8], strides = [1, 1]} : vector<8x32xbf16> to vector<8x8xbf16>
    %52 = vector.shape_cast %51 : vector<8x8xbf16> to vector<1x8x8xbf16>
    "tpu.trace_start"() <{level = 10 : i32, message = "bqd,bkd->bqk"}> : () -> ()
    %cst_19 = arith.constant dense<0.000000e+00> : vector<1x8x8xf32>
    %53 = tpu.matmul %48, %50, %cst_19 {dimension_numbers = #tpu.dot_dimension_numbers<[2], [2], [1], [1], [0, 0, 0, 1, 1, 1], [0], [0]>} : vector<1x8x8xbf16>, vector<1x8x8xbf16>, vector<1x8x8xf32> -> vector<1x8x8xf32>
    "tpu.trace_stop"() : () -> ()
    %54 = arith.addf %53, %24 : vector<1x8x8xf32>
    %cst_20 = arith.constant dense<0xFF800000> : vector<1x8xf32>
    %55 = vector.multi_reduction <maximumf>, %54, %cst_20 [2] : vector<1x8x8xf32> to vector<1x8xf32>
    %56 = vector.shape_cast %55 : vector<1x8xf32> to vector<1x8x1xf32>
    %57 = vector.broadcast %56 : vector<1x8x1xf32> to vector<1x8x8xf32>
    %58 = arith.subf %54, %57 : vector<1x8x8xf32>
    %59 = math.exp %58 : vector<1x8x8xf32>
    %cst_21 = arith.constant dense<0.000000e+00> : vector<1x8xf32>
    %60 = vector.multi_reduction <add>, %59, %cst_21 [2] : vector<1x8x8xf32> to vector<1x8xf32>
    %61 = vector.shape_cast %60 : vector<1x8xf32> to vector<1x8x1xf32>
    %62 = tpu.reciprocal %61 {approx = true} : vector<1x8x1xf32> -> vector<1x8x1xf32>
    %63 = vector.broadcast %62 : vector<1x8x1xf32> to vector<1x8x8xf32>
    %64 = arith.mulf %59, %63 : vector<1x8x8xf32>
    %65 = arith.truncf %64 : vector<1x8x8xf32> to vector<1x8x8xbf16>
    "tpu.trace_start"() <{level = 10 : i32, message = "bqk,bkd->bqd"}> : () -> ()
    %cst_22 = arith.constant dense<0.000000e+00> : vector<1x8x8xf32>
    %66 = tpu.matmul %65, %52, %cst_22 {dimension_numbers = #tpu.dot_dimension_numbers<[2], [1], [1], [2], [0, 0, 0, 1, 1, 2], [0], [0]>} : vector<1x8x8xbf16>, vector<1x8x8xbf16>, vector<1x8x8xf32> -> vector<1x8x8xf32>
    "tpu.trace_stop"() : () -> ()
    %67 = vector.shape_cast %66 : vector<1x8x8xf32> to vector<8x8xf32>
    %68 = arith.truncf %67 : vector<8x8xf32> to vector<8x8xbf16>
    %69 = vector.extract_strided_slice %14 {offsets = [0, 16], sizes = [8, 8], strides = [1, 1]} : vector<8x32xbf16> to vector<8x8xbf16>
    %70 = vector.shape_cast %69 : vector<8x8xbf16> to vector<1x8x8xbf16>
    %71 = vector.extract_strided_slice %21 {offsets = [0, 16], sizes = [8, 8], strides = [1, 1]} : vector<8x32xbf16> to vector<8x8xbf16>
    %72 = vector.shape_cast %71 : vector<8x8xbf16> to vector<1x8x8xbf16>
    %73 = vector.extract_strided_slice %22 {offsets = [0, 16], sizes = [8, 8], strides = [1, 1]} : vector<8x32xbf16> to vector<8x8xbf16>
    %74 = vector.shape_cast %73 : vector<8x8xbf16> to vector<1x8x8xbf16>
    "tpu.trace_start"() <{level = 10 : i32, message = "bqd,bkd->bqk"}> : () -> ()
    %cst_23 = arith.constant dense<0.000000e+00> : vector<1x8x8xf32>
    %75 = tpu.matmul %70, %72, %cst_23 {dimension_numbers = #tpu.dot_dimension_numbers<[2], [2], [1], [1], [0, 0, 0, 1, 1, 1], [0], [0]>} : vector<1x8x8xbf16>, vector<1x8x8xbf16>, vector<1x8x8xf32> -> vector<1x8x8xf32>
    "tpu.trace_stop"() : () -> ()
    %76 = arith.addf %75, %24 : vector<1x8x8xf32>
    %cst_24 = arith.constant dense<0xFF800000> : vector<1x8xf32>
    %77 = vector.multi_reduction <maximumf>, %76, %cst_24 [2] : vector<1x8x8xf32> to vector<1x8xf32>
    %78 = vector.shape_cast %77 : vector<1x8xf32> to vector<1x8x1xf32>
    %79 = vector.broadcast %78 : vector<1x8x1xf32> to vector<1x8x8xf32>
    %80 = arith.subf %76, %79 : vector<1x8x8xf32>
    %81 = math.exp %80 : vector<1x8x8xf32>
    %cst_25 = arith.constant dense<0.000000e+00> : vector<1x8xf32>
    %82 = vector.multi_reduction <add>, %81, %cst_25 [2] : vector<1x8x8xf32> to vector<1x8xf32>
    %83 = vector.shape_cast %82 : vector<1x8xf32> to vector<1x8x1xf32>
    %84 = tpu.reciprocal %83 {approx = true} : vector<1x8x1xf32> -> vector<1x8x1xf32>
    %85 = vector.broadcast %84 : vector<1x8x1xf32> to vector<1x8x8xf32>
    %86 = arith.mulf %81, %85 : vector<1x8x8xf32>
    %87 = arith.truncf %86 : vector<1x8x8xf32> to vector<1x8x8xbf16>
    "tpu.trace_start"() <{level = 10 : i32, message = "bqk,bkd->bqd"}> : () -> ()
    %cst_26 = arith.constant dense<0.000000e+00> : vector<1x8x8xf32>
    %88 = tpu.matmul %87, %74, %cst_26 {dimension_numbers = #tpu.dot_dimension_numbers<[2], [1], [1], [2], [0, 0, 0, 1, 1, 2], [0], [0]>} : vector<1x8x8xbf16>, vector<1x8x8xbf16>, vector<1x8x8xf32> -> vector<1x8x8xf32>
    "tpu.trace_stop"() : () -> ()
    %89 = vector.shape_cast %88 : vector<1x8x8xf32> to vector<8x8xf32>
    %90 = arith.truncf %89 : vector<8x8xf32> to vector<8x8xbf16>
    %91 = vector.extract_strided_slice %14 {offsets = [0, 24], sizes = [8, 8], strides = [1, 1]} : vector<8x32xbf16> to vector<8x8xbf16>
    %92 = vector.shape_cast %91 : vector<8x8xbf16> to vector<1x8x8xbf16>
    %93 = vector.extract_strided_slice %21 {offsets = [0, 24], sizes = [8, 8], strides = [1, 1]} : vector<8x32xbf16> to vector<8x8xbf16>
    %94 = vector.shape_cast %93 : vector<8x8xbf16> to vector<1x8x8xbf16>
    %95 = vector.extract_strided_slice %22 {offsets = [0, 24], sizes = [8, 8], strides = [1, 1]} : vector<8x32xbf16> to vector<8x8xbf16>
    %96 = vector.shape_cast %95 : vector<8x8xbf16> to vector<1x8x8xbf16>
    "tpu.trace_start"() <{level = 10 : i32, message = "bqd,bkd->bqk"}> : () -> ()
    %cst_27 = arith.constant dense<0.000000e+00> : vector<1x8x8xf32>
    %97 = tpu.matmul %92, %94, %cst_27 {dimension_numbers = #tpu.dot_dimension_numbers<[2], [2], [1], [1], [0, 0, 0, 1, 1, 1], [0], [0]>} : vector<1x8x8xbf16>, vector<1x8x8xbf16>, vector<1x8x8xf32> -> vector<1x8x8xf32>
    "tpu.trace_stop"() : () -> ()
    %98 = arith.addf %97, %24 : vector<1x8x8xf32>
    %cst_28 = arith.constant dense<0xFF800000> : vector<1x8xf32>
    %99 = vector.multi_reduction <maximumf>, %98, %cst_28 [2] : vector<1x8x8xf32> to vector<1x8xf32>
    %100 = vector.shape_cast %99 : vector<1x8xf32> to vector<1x8x1xf32>
    %101 = vector.broadcast %100 : vector<1x8x1xf32> to vector<1x8x8xf32>
    %102 = arith.subf %98, %101 : vector<1x8x8xf32>
    %103 = math.exp %102 : vector<1x8x8xf32>
    %cst_29 = arith.constant dense<0.000000e+00> : vector<1x8xf32>
    %104 = vector.multi_reduction <add>, %103, %cst_29 [2] : vector<1x8x8xf32> to vector<1x8xf32>
    %105 = vector.shape_cast %104 : vector<1x8xf32> to vector<1x8x1xf32>
    %106 = tpu.reciprocal %105 {approx = true} : vector<1x8x1xf32> -> vector<1x8x1xf32>
    %107 = vector.broadcast %106 : vector<1x8x1xf32> to vector<1x8x8xf32>
    %108 = arith.mulf %103, %107 : vector<1x8x8xf32>
    %109 = arith.truncf %108 : vector<1x8x8xf32> to vector<1x8x8xbf16>
    "tpu.trace_start"() <{level = 10 : i32, message = "bqk,bkd->bqd"}> : () -> ()
    %cst_30 = arith.constant dense<0.000000e+00> : vector<1x8x8xf32>
    %110 = tpu.matmul %109, %96, %cst_30 {dimension_numbers = #tpu.dot_dimension_numbers<[2], [1], [1], [2], [0, 0, 0, 1, 1, 2], [0], [0]>} : vector<1x8x8xbf16>, vector<1x8x8xbf16>, vector<1x8x8xf32> -> vector<1x8x8xf32>
    "tpu.trace_stop"() : () -> ()
    %111 = vector.shape_cast %110 : vector<1x8x8xf32> to vector<8x8xf32>
    %112 = arith.truncf %111 : vector<8x8xf32> to vector<8x8xbf16>
    %113 = tpu.concatenate %46, %68, %90, %112 in 1 : vector<8x8xbf16>, vector<8x8xbf16>, vector<8x8xbf16>, vector<8x8xbf16> -> vector<8x32xbf16>
    %c0_31 = arith.constant 0 : index
    %c0_32 = arith.constant 0 : index
    %114 = vector.load %arg8[%c0_31, %c0_32] : memref<32x32xbf16, #tpu.memory_space<vmem>>, vector<32x32xbf16>
    %cst_33 = arith.constant dense<0.000000e+00> : vector<8x32xf32>
    %115 = tpu.matmul %113, %114, %cst_33 {dimension_numbers = #tpu.dot_dimension_numbers<[1], [0], [0], [1], [0, 0, 1, 1], [], []>} : vector<8x32xbf16>, vector<32x32xbf16>, vector<8x32xf32> -> vector<8x32xf32>
    %c0_34 = arith.constant 0 : index
    %c0_35 = arith.constant 0 : index
    %116 = vector.load %arg9[%c0_34, %c0_35] : memref<1x32xf32, #tpu.memory_space<vmem>>, vector<1x32xf32>
    %117 = vector.broadcast %116 : vector<1x32xf32> to vector<8x32xf32>
    %118 = arith.addf %115, %117 : vector<8x32xf32>
    %119 = vector.shape_cast %3 : vector<1x8x32xf32> to vector<8x32xf32>
    %120 = arith.addf %118, %119 : vector<8x32xf32>
    %cst_36 = arith.constant dense<0.000000e+00> : vector<8xf32>
    %121 = vector.multi_reduction <add>, %120, %cst_36 [1] : vector<8x32xf32> to vector<8xf32>
    %122 = vector.shape_cast %121 : vector<8xf32> to vector<8x1xf32>
    %cst_37 = arith.constant 3.200000e+01 : f32
    %123 = vector.broadcast %cst_37 : f32 to vector<8x1xf32>
    %124 = arith.divf %122, %123 : vector<8x1xf32>
    %125 = vector.broadcast %124 : vector<8x1xf32> to vector<8x32xf32>
    %126 = arith.subf %120, %125 : vector<8x32xf32>
    %127 = vector.broadcast %124 : vector<8x1xf32> to vector<8x32xf32>
    %128 = arith.subf %120, %127 : vector<8x32xf32>
    %129 = arith.mulf %126, %128 : vector<8x32xf32>
    %cst_38 = arith.constant dense<0.000000e+00> : vector<8xf32>
    %130 = vector.multi_reduction <add>, %129, %cst_38 [1] : vector<8x32xf32> to vector<8xf32>
    %131 = vector.shape_cast %130 : vector<8xf32> to vector<8x1xf32>
    %cst_39 = arith.constant 3.200000e+01 : f32
    %132 = vector.broadcast %cst_39 : f32 to vector<8x1xf32>
    %133 = arith.divf %131, %132 : vector<8x1xf32>
    %134 = vector.broadcast %124 : vector<8x1xf32> to vector<8x32xf32>
    %135 = arith.subf %120, %134 : vector<8x32xf32>
    %cst_40 = arith.constant 9.99999974E-6 : f32
    %136 = vector.broadcast %cst_40 : f32 to vector<8x1xf32>
    %137 = arith.addf %133, %136 : vector<8x1xf32>
    %138 = math.rsqrt %137 : vector<8x1xf32>
    %139 = vector.broadcast %138 : vector<8x1xf32> to vector<8x32xf32>
    %140 = arith.mulf %135, %139 : vector<8x32xf32>
    %c0_41 = arith.constant 0 : index
    %c0_42 = arith.constant 0 : index
    %141 = vector.load %arg10[%c0_41, %c0_42] : memref<1x32xf32, #tpu.memory_space<vmem>>, vector<1x32xf32>
    %142 = vector.broadcast %141 : vector<1x32xf32> to vector<8x32xf32>
    %143 = arith.mulf %140, %142 : vector<8x32xf32>
    %c0_43 = arith.constant 0 : index
    %c0_44 = arith.constant 0 : index
    %144 = vector.load %arg11[%c0_43, %c0_44] : memref<1x32xf32, #tpu.memory_space<vmem>>, vector<1x32xf32>
    %145 = vector.broadcast %144 : vector<1x32xf32> to vector<8x32xf32>
    %146 = arith.addf %143, %145 : vector<8x32xf32>
    %147 = vector.shape_cast %146 : vector<8x32xf32> to vector<1x8x32xf32>
    %c0_45 = arith.constant 0 : index
    %c0_46 = arith.constant 0 : index
    %c0_47 = arith.constant 0 : index
    %148 = vector.load %arg12[%c0_45, %c0_46, %c0_47] : memref<1x8x32xf32, #tpu.memory_space<vmem>>, vector<1x8x32xf32>
    tpu.vector_store %arg12[%c0_45, %c0_46, %c0_47], %147 {strides = array<i32>} : memref<1x8x32xf32, #tpu.memory_space<vmem>>, vector<1x8x32xf32>,
    return
  }
  func.func @transform_0(%arg0: i32, %arg1: i32) -> (i32, i32, i32) {
    %c0_i32 = arith.constant 0 : i32
    %c0_i32_0 = arith.constant 0 : i32
    %c0_i32_1 = arith.constant 0 : i32
    return %arg0, %c0_i32, %c0_i32_0 : i32, i32, i32
  }
  func.func @transform_1(%arg0: i32, %arg1: i32) -> (i32, i32) {
    %c0_i32 = arith.constant 0 : i32
    %c0_i32_0 = arith.constant 0 : i32
    return %arg1, %c0_i32 : i32, i32
  }
  func.func @transform_2(%arg0: i32, %arg1: i32) -> (i32, i32) {
    %c0_i32 = arith.constant 0 : i32
    %c0_i32_0 = arith.constant 0 : i32
    %c0_i32_1 = arith.constant 0 : i32
    return %c0_i32, %c0_i32_0 : i32, i32
  }
  func.func @transform_3(%arg0: i32, %arg1: i32) -> (i32, i32) {
    %c0_i32 = arith.constant 0 : i32
    %c0_i32_0 = arith.constant 0 : i32
    %c0_i32_1 = arith.constant 0 : i32
    return %c0_i32, %c0_i32_0 : i32, i32
  }
  func.func @transform_4(%arg0: i32, %arg1: i32) -> (i32, i32) {
    %c0_i32 = arith.constant 0 : i32
    %c0_i32_0 = arith.constant 0 : i32
    %c0_i32_1 = arith.constant 0 : i32
    return %c0_i32, %c0_i32_0 : i32, i32
  }
  func.func @transform_5(%arg0: i32, %arg1: i32) -> (i32, i32) {
    %c0_i32 = arith.constant 0 : i32
    %c0_i32_0 = arith.constant 0 : i32
    %c0_i32_1 = arith.constant 0 : i32
    return %c0_i32, %c0_i32_0 : i32, i32
  }
  func.func @transform_6(%arg0: i32, %arg1: i32) -> (i32, i32) {
    %c0_i32 = arith.constant 0 : i32
    %c0_i32_0 = arith.constant 0 : i32
    %c0_i32_1 = arith.constant 0 : i32
    return %c0_i32, %c0_i32_0 : i32, i32
  }
  func.func @transform_7(%arg0: i32, %arg1: i32) -> (i32, i32) {
    %c0_i32 = arith.constant 0 : i32
    %c0_i32_0 = arith.constant 0 : i32
    %c0_i32_1 = arith.constant 0 : i32
    return %c0_i32, %c0_i32_0 : i32, i32
  }
  func.func @transform_8(%arg0: i32, %arg1: i32) -> (i32, i32) {
    %c0_i32 = arith.constant 0 : i32
    %c0_i32_0 = arith.constant 0 : i32
    %c0_i32_1 = arith.constant 0 : i32
    return %c0_i32, %c0_i32_0 : i32, i32
  }
  func.func @transform_9(%arg0: i32, %arg1: i32) -> (i32, i32) {
    %c0_i32 = arith.constant 0 : i32
    %c0_i32_0 = arith.constant 0 : i32
    %c0_i32_1 = arith.constant 0 : i32
    return %c0_i32, %c0_i32_0 : i32, i32
  }
  func.func @transform_10(%arg0: i32, %arg1: i32) -> (i32, i32, i32) {
    %c0_i32 = arith.constant 0 : i32
    %c0_i32_0 = arith.constant 0 : i32
    return %arg0, %arg1, %c0_i32 : i32, i32, i32
  }
}

</mosaic_0001>

<llo_original>
// kernel: tpu_custom_call.1
$region0: #{tpu_custom_call.1}
  #allocation0 [shape = 'u32[]', space=smem, size = 0x4, offset = 0x4, fixed_abs, tag = 'smem constant byte address 0x4 - core index']
  #allocation1 [shape = 'u32[144,128]{1,0:T(1,128)}', space=vmem, size = 0x12000, scoped, tag = 'internal scratch']
  %s0 = inlined_call_operand.hbm [shape: f32[2,8,32], index: 0, kind: input, shape index: {}]
  %s1 = inlined_call_operand.hbm [shape: f32[8,8], index: 1, kind: input, shape index: {}]
  %s2 = inlined_call_operand.hbm [shape: bf16[32,32], index: 2, kind: input, shape index: {}]
  %s3 = inlined_call_operand.vmem [shape: f32[1,32], index: 3, kind: input, shape index: {}]
  %s4 = inlined_call_operand.hbm [shape: bf16[32,64], index: 4, kind: input, shape index: {}]
  %s5 = inlined_call_operand.vmem [shape: f32[1,64], index: 5, kind: input, shape index: {}]
  %s6 = inlined_call_operand.vmem [shape: bf16[32,32], index: 6, kind: input, shape index: {}]
  %s7 = inlined_call_operand.vmem [shape: f32[1,32], index: 7, kind: input, shape index: {}]
  %s8 = inlined_call_operand.vmem [shape: f32[1,32], index: 8, kind: input, shape index: {}]
  %s9 = inlined_call_operand.vmem [shape: f32[1,32], index: 9, kind: input, shape index: {}]
  %s10 = inlined_call_operand.hbm [shape: f32[2,8,32], index: 10, kind: output, shape index: {}]
  %s11 = sld [smem:[#allocation0]]
  $region89: #{tpu_custom_call.1} parent=0
    _
  %s13 = ssub.s32 1, %s11
  %s14 = scalar_select 0, %s13, %s11
  $region1: #{tpu_custom_call.1} parent=0
    #allocation2 [shape = 'u8[8192]{0}', space=vmem, size = 0x2000, scoped, tag = 'input window, operand 0']
    #allocation3 [shape = 's32[2]{0}', space=sflag, size = 0x8, scoped, tag = 'scoped memory for tpu_custom_call.1']
    #allocation4 [shape = 's32[2]{0}', space=sflag, size = 0x8, scoped, tag = 'scoped memory for tpu_custom_call.1']
    #allocation5 [shape = 'u8[4096]{0}', space=vmem, size = 0x1000, scoped, tag = 'input window, operand 1, single buffered']
    #allocation6 [shape = 's32[1]{0}', space=sflag, size = 0x4, scoped, tag = 'scoped memory for tpu_custom_call.1']
    #allocation7 [shape = 'u8[8192]{0}', space=vmem, size = 0x2000, scoped, tag = 'input window, operand 2, single buffered']
    #allocation8 [shape = 'u8[8192]{0}', space=vmem, size = 0x2000, scoped, tag = 'input window, operand 4, single buffered']
    #allocation9 [shape = 's32[1]{0}', space=sflag, size = 0x4, scoped, tag = 'scoped memory for tpu_custom_call.1']
    #allocation10 [shape = 'u8[8192]{0}', space=vmem, size = 0x2000, scoped, tag = 'output window, operand 0']
    %15 = vsyncpa [#allocation3], 0
    %s16 = scalar_lea.sflag [#allocation3], 1
    %17 = vsyncpa %s16, 0
    %18 = vsyncpa [#allocation6], 0
    %19 = vsyncpa [#allocation9], 0
    %20 = vsyncpa [#allocation4], 0
    %s21 = scalar_lea.sflag [#allocation4], 1
    %22 = vsyncpa %s21, 0
    loop: start=0, step=1, limit=4
    $region2: #{tpu_custom_call.1} parent=1 // loop_pre_header
      _
    $region3: #{tpu_custom_call.1} parent=1 // loop_header
      %s24 = sphi 0, %s28
      %p25 = scmp.ge.s32.totalorder %s24, 4
      %s31 = sphi 0, %s43
      %s32 = sphi 0, %s39
      %s33 = sphi 0, %s31
      %s34 = sphi 0, %s32
      %s35 = sphi 0, %s33
      %s36 = sphi 0, %s34
      %s46 = sphi 0, %s48
      %s49 = sphi 0, %s46
      %s50 = sphi 0, %s49
      %s66 = sphi 0, %s50
      %s72 = sphi 0, %s74
      %s75 = sphi 0, %s72
      %s76 = sphi 0, %s75
      %s92 = sphi 0, %s76
      %s96 = sphi 0, %s96
      %s98 = sphi 0, %s96
      %s99 = sphi 0, %s98
      %s113 = sphi 0, %s99
      %s117 = sphi 0, %s117
      %s119 = sphi 0, %s117
      %s120 = sphi 0, %s119
      %s134 = sphi 0, %s120
      %s138 = sphi 0, %s138
      %s140 = sphi 0, %s138
      %s141 = sphi 0, %s140
      %s155 = sphi 0, %s141
      %s159 = sphi 0, %s159
      %s161 = sphi 0, %s159
      %s162 = sphi 0, %s161
      %s176 = sphi 0, %s162
      %s180 = sphi 0, %s180
      %s182 = sphi 0, %s180
      %s183 = sphi 0, %s182
      %s197 = sphi 0, %s183
      %s201 = sphi 0, %s201
      %s203 = sphi 0, %s201
      %s204 = sphi 0, %s203
      %s218 = sphi 0, %s204
      %s222 = sphi 0, %s222
      %s224 = sphi 0, %s222
      %s225 = sphi 0, %s224
      %s239 = sphi 0, %s225
      %s243 = sphi 0, %s243
      %s245 = sphi 0, %s243
      %s246 = sphi 0, %s245
      %s260 = sphi 0, %s246
      %s268 = sphi 0, %s270
      %s271 = sphi 0, %s268
      %s272 = sphi 0, %s271
      %s288 = sphi 0, %s272
    $region4: #{tpu_custom_call.1} parent=1 // loop_header_branch
      %27 = sbr.rel (%p25) target = $region8
    $region5: #{tpu_custom_call.1} parent=1 // loop_body
      %s29 = ssub.s32 %s24, 1
      %s30 = ssub.s32 %s24, 2
      %s37 = sadd.s32 1, %s32
      %p38 = scmp.ge.s32.totalorder %s37, 1
      %s39 = scalar_select %p38, 0, %s37
      %s40 = sadd.s32 1, %s31
      %s41 = scalar_select %p38, %s40, %s31
      %p42 = scmp.ge.s32.totalorder %s41, 2
      %s43 = scalar_select %p42, 0, %s41
      %s44 = ssub.s32 %s31, %s43
      %p45 = scmp.eq.s32.totalorder %s44, 0
      %s47 = sadd.s32 %s46, 1
      %s48 = scalar_select %p45, %s46, %s47
      %p51 = pneg %p45
      %p52 = scmp.eq.s32.totalorder %s24, 1
      %p53 = por %p51, %p52
      %p54 = scmp.ne.s32.totalorder %s46, %s49
      %p55 = scmp.eq.s32.totalorder %s24, 0
      %p56 = por %p54, %p55
      %p57 = scmp.ne.s32.totalorder %s46, %s49
      %p58 = scmp.eq.s32.totalorder %s29, 1
      %p59 = por %p57, %p58
      %p60 = scmp.ne.s32.totalorder %s49, %s50
      %p61 = scmp.eq.s32.totalorder %s29, 0
      %p62 = por %p60, %p61
      %p63 = scmp.ne.s32.totalorder %s49, %s50
      %p64 = scmp.eq.s32.totalorder %s30, 1
      %p65 = por %p63, %p64
      %p67 = scmp.ne.s32.totalorder %s50, %s66
      %p68 = scmp.eq.s32.totalorder %s30, 0
      %p69 = por %p67, %p68
      %s70 = ssub.s32 %s32, %s39
      %p71 = scmp.eq.s32.totalorder %s70, 0
      %s73 = sadd.s32 %s72, 1
      %s74 = scalar_select %p71, %s72, %s73
      %p77 = pneg %p71
      %p78 = scmp.eq.s32.totalorder %s24, 1
      %p79 = por %p77, %p78
      %p80 = scmp.ne.s32.totalorder %s72, %s75
      %p81 = scmp.eq.s32.totalorder %s24, 0
      %p82 = por %p80, %p81
      %p83 = scmp.ne.s32.totalorder %s72, %s75
      %p84 = scmp.eq.s32.totalorder %s29, 1
      %p85 = por %p83, %p84
      %p86 = scmp.ne.s32.totalorder %s75, %s76
      %p87 = scmp.eq.s32.totalorder %s29, 0
      %p88 = por %p86, %p87
      %p89 = scmp.ne.s32.totalorder %s75, %s76
      %p90 = scmp.eq.s32.totalorder %s30, 1
      %p91 = por %p89, %p90
      %p93 = scmp.ne.s32.totalorder %s76, %s92
      %p94 = scmp.eq.s32.totalorder %s30, 0
      %p95 = por %p93, %p94
      %s97 = sadd.s32 %s96, 1
      %p100 = scmp.eq.s32.totalorder %s24, 1
      %p101 = scmp.ne.s32.totalorder %s96, %s98
      %p102 = scmp.eq.s32.totalorder %s24, 0
      %p103 = por %p101, %p102
      %p104 = scmp.ne.s32.totalorder %s96, %s98
      %p105 = scmp.eq.s32.totalorder %s29, 1
      %p106 = por %p104, %p105
      %p107 = scmp.ne.s32.totalorder %s98, %s99
      %p108 = scmp.eq.s32.totalorder %s29, 0
      %p109 = por %p107, %p108
      %p110 = scmp.ne.s32.totalorder %s98, %s99
      %p111 = scmp.eq.s32.totalorder %s30, 1
      %p112 = por %p110, %p111
      %p114 = scmp.ne.s32.totalorder %s99, %s113
      %p115 = scmp.eq.s32.totalorder %s30, 0
      %p116 = por %p114, %p115
      %s118 = sadd.s32 %s117, 1
      %p121 = scmp.eq.s32.totalorder %s24, 1
      %p122 = scmp.ne.s32.totalorder %s117, %s119
      %p123 = scmp.eq.s32.totalorder %s24, 0
      %p124 = por %p122, %p123
      %p125 = scmp.ne.s32.totalorder %s117, %s119
      %p126 = scmp.eq.s32.totalorder %s29, 1
      %p127 = por %p125, %p126
      %p128 = scmp.ne.s32.totalorder %s119, %s120
      %p129 = scmp.eq.s32.totalorder %s29, 0
      %p130 = por %p128, %p129
      %p131 = scmp.ne.s32.totalorder %s119, %s120
      %p132 = scmp.eq.s32.totalorder %s30, 1
      %p133 = por %p131, %p132
      %p135 = scmp.ne.s32.totalorder %s120, %s134
      %p136 = scmp.eq.s32.totalorder %s30, 0
      %p137 = por %p135, %p136
      %s139 = sadd.s32 %s138, 1
      %p142 = scmp.eq.s32.totalorder %s24, 1
      %p143 = scmp.ne.s32.totalorder %s138, %s140
      %p144 = scmp.eq.s32.totalorder %s24, 0
      %p145 = por %p143, %p144
      %p146 = scmp.ne.s32.totalorder %s138, %s140
      %p147 = scmp.eq.s32.totalorder %s29, 1
      %p148 = por %p146, %p147
      %p149 = scmp.ne.s32.totalorder %s140, %s141
      %p150 = scmp.eq.s32.totalorder %s29, 0
      %p151 = por %p149, %p150
      %p152 = scmp.ne.s32.totalorder %s140, %s141
      %p153 = scmp.eq.s32.totalorder %s30, 1
      %p154 = por %p152, %p153
      %p156 = scmp.ne.s32.totalorder %s141, %s155
      %p157 = scmp.eq.s32.totalorder %s30, 0
      %p158 = por %p156, %p157
      %s160 = sadd.s32 %s159, 1
      %p163 = scmp.eq.s32.totalorder %s24, 1
      %p164 = scmp.ne.s32.totalorder %s159, %s161
      %p165 = scmp.eq.s32.totalorder %s24, 0
      %p166 = por %p164, %p165
      %p167 = scmp.ne.s32.totalorder %s159, %s161
      %p168 = scmp.eq.s32.totalorder %s29, 1
      %p169 = por %p167, %p168
      %p170 = scmp.ne.s32.totalorder %s161, %s162
      %p171 = scmp.eq.s32.totalorder %s29, 0
      %p172 = por %p170, %p171
      %p173 = scmp.ne.s32.totalorder %s161, %s162
      %p174 = scmp.eq.s32.totalorder %s30, 1
      %p175 = por %p173, %p174
      %p177 = scmp.ne.s32.totalorder %s162, %s176
      %p178 = scmp.eq.s32.totalorder %s30, 0
      %p179 = por %p177, %p178
      %s181 = sadd.s32 %s180, 1
      %p184 = scmp.eq.s32.totalorder %s24, 1
      %p185 = scmp.ne.s32.totalorder %s180, %s182
      %p186 = scmp.eq.s32.totalorder %s24, 0
      %p187 = por %p185, %p186
      %p188 = scmp.ne.s32.totalorder %s180, %s182
      %p189 = scmp.eq.s32.totalorder %s29, 1
      %p190 = por %p188, %p189
      %p191 = scmp.ne.s32.totalorder %s182, %s183
      %p192 = scmp.eq.s32.totalorder %s29, 0
      %p193 = por %p191, %p192
      %p194 = scmp.ne.s32.totalorder %s182, %s183
      %p195 = scmp.eq.s32.totalorder %s30, 1
      %p196 = por %p194, %p195
      %p198 = scmp.ne.s32.totalorder %s183, %s197
      %p199 = scmp.eq.s32.totalorder %s30, 0
      %p200 = por %p198, %p199
      %s202 = sadd.s32 %s201, 1
      %p205 = scmp.eq.s32.totalorder %s24, 1
      %p206 = scmp.ne.s32.totalorder %s201, %s203
      %p207 = scmp.eq.s32.totalorder %s24, 0
      %p208 = por %p206, %p207
      %p209 = scmp.ne.s32.totalorder %s201, %s203
      %p210 = scmp.eq.s32.totalorder %s29, 1
      %p211 = por %p209, %p210
      %p212 = scmp.ne.s32.totalorder %s203, %s204
      %p213 = scmp.eq.s32.totalorder %s29, 0
      %p214 = por %p212, %p213
      %p215 = scmp.ne.s32.totalorder %s203, %s204
      %p216 = scmp.eq.s32.totalorder %s30, 1
      %p217 = por %p215, %p216
      %p219 = scmp.ne.s32.totalorder %s204, %s218
      %p220 = scmp.eq.s32.totalorder %s30, 0
      %p221 = por %p219, %p220
      %s223 = sadd.s32 %s222, 1
      %p226 = scmp.eq.s32.totalorder %s24, 1
      %p227 = scmp.ne.s32.totalorder %s222, %s224
      %p228 = scmp.eq.s32.totalorder %s24, 0
      %p229 = por %p227, %p228
      %p230 = scmp.ne.s32.totalorder %s222, %s224
      %p231 = scmp.eq.s32.totalorder %s29, 1
      %p232 = por %p230, %p231
      %p233 = scmp.ne.s32.totalorder %s224, %s225
      %p234 = scmp.eq.s32.totalorder %s29, 0
      %p235 = por %p233, %p234
      %p236 = scmp.ne.s32.totalorder %s224, %s225
      %p237 = scmp.eq.s32.totalorder %s30, 1
      %p238 = por %p236, %p237
      %p240 = scmp.ne.s32.totalorder %s225, %s239
      %p241 = scmp.eq.s32.totalorder %s30, 0
      %p242 = por %p240, %p241
      %s244 = sadd.s32 %s243, 1
      %p247 = scmp.eq.s32.totalorder %s24, 1
      %p248 = scmp.ne.s32.totalorder %s243, %s245
      %p249 = scmp.eq.s32.totalorder %s24, 0
      %p250 = por %p248, %p249
      %p251 = scmp.ne.s32.totalorder %s243, %s245
      %p252 = scmp.eq.s32.totalorder %s29, 1
      %p253 = por %p251, %p252
      %p254 = scmp.ne.s32.totalorder %s245, %s246
      %p255 = scmp.eq.s32.totalorder %s29, 0
      %p256 = por %p254, %p255
      %p257 = scmp.ne.s32.totalorder %s245, %s246
      %p258 = scmp.eq.s32.totalorder %s30, 1
      %p259 = por %p257, %p258
      %p261 = scmp.ne.s32.totalorder %s246, %s260
      %p262 = scmp.eq.s32.totalorder %s30, 0
      %p263 = por %p261, %p262
      %s264 = ssub.s32 %s31, %s43
      %s265 = ssub.s32 %s32, %s39
      %s266 = sor.u32 %s264, %s265
      %p267 = scmp.eq.s32.totalorder %s266, 0
      %s269 = sadd.s32 %s268, 1
      %s270 = scalar_select %p267, %s268, %s269
      %p273 = pneg %p267
      %p274 = scmp.eq.s32.totalorder %s24, 1
      %p275 = por %p273, %p274
      %p276 = scmp.ne.s32.totalorder %s268, %s271
      %p277 = scmp.eq.s32.totalorder %s24, 0
      %p278 = por %p276, %p277
      %p279 = scmp.ne.s32.totalorder %s268, %s271
      %p280 = scmp.eq.s32.totalorder %s29, 1
      %p281 = por %p279, %p280
      %p282 = scmp.ne.s32.totalorder %s271, %s272
      %p283 = scmp.eq.s32.totalorder %s29, 0
      %p284 = por %p282, %p283
      %p285 = scmp.ne.s32.totalorder %s271, %s272
      %p286 = scmp.eq.s32.totalorder %s30, 1
      %p287 = por %p285, %p286
      %p289 = scmp.ne.s32.totalorder %s272, %s288
      %p290 = scmp.eq.s32.totalorder %s30, 0
      %p291 = por %p289, %p290
      %p292 = scmp.le.s32.totalorder 1, %s24
      %p293 = scmp.lt.s32.totalorder %s24, 3
      %p294 = pnand %p292, %p293
      %p295 = pneg %p294
      // Predicated region
      $region9: #{tpu_custom_call.1} parent=5 // pred_check
        _
      $region10: #{tpu_custom_call.1} parent=5 // pred_check_branch
        %297 = sbr.rel (%p294) target = $region12
      $region11: #{tpu_custom_call.1} parent=5 // pred_region
        %s298 = ssub.s32 %s24, 1
        // Predicated region
        $region13: #{tpu_custom_call.1} parent=11 // pred_check
          %p299 = pneg %p88
        $region14: #{tpu_custom_call.1} parent=11 // pred_check_branch
          %301 = sbr.rel (%p299) target = $region16
        $region15: #{tpu_custom_call.1} parent=11 // pred_region
          %s303 = ssub.s32 128, 128
          %304 = vsyncadd [#allocation6], %s303
          %s305 = smul.addr %s34, 128
          %s306 = scalar_lea.hbm %s1, %s305
          %s308 = sshll.u32 [#allocation5], 4
          %s309 = int_to_ptr.vmem [resolvable:$true] %s308
          %311 = dma.hbm_to_vmem [thread:$0]  %s306, 128, %s309, [#allocation6]
        $region16: #{tpu_custom_call.1} parent=11 // pred_fallthru
          _
        // Predicated region
        $region17: #{tpu_custom_call.1} parent=11 // pred_check
          %p312 = pneg %p109
        $region18: #{tpu_custom_call.1} parent=11 // pred_check_branch
          %314 = sbr.rel (%p312) target = $region20
        $region19: #{tpu_custom_call.1} parent=11 // pred_region
          %s316 = ssub.s32 256, 256
          %317 = vsyncadd [#allocation6], %s316
          %s318 = sshll.u32 [#allocation7], 4
          %s319 = int_to_ptr.vmem [resolvable:$true] %s318
          %324 = dma.hbm_to_vmem [thread:$0]  %s2, 256, %s319, [#allocation6], 64, 64, 4
        $region20: #{tpu_custom_call.1} parent=11 // pred_fallthru
          _
        // Predicated region
        $region21: #{tpu_custom_call.1} parent=11 // pred_check
          %p325 = pneg %p130
        $region22: #{tpu_custom_call.1} parent=11 // pred_check_branch
          %327 = sbr.rel (%p325) target = $region24
        $region23: #{tpu_custom_call.1} parent=11 // pred_region
          _
        $region24: #{tpu_custom_call.1} parent=11 // pred_fallthru
          _
        // Predicated region
        $region25: #{tpu_custom_call.1} parent=11 // pred_check
          %p328 = pneg %p151
        $region26: #{tpu_custom_call.1} parent=11 // pred_check_branch
          %330 = sbr.rel (%p328) target = $region28
        $region27: #{tpu_custom_call.1} parent=11 // pred_region
          %s332 = ssub.s32 256, 256
          %333 = vsyncadd [#allocation9], %s332
          %s334 = sshll.u32 [#allocation8], 4
          %s335 = int_to_ptr.vmem [resolvable:$true] %s334
          %340 = dma.hbm_to_vmem [thread:$0]  %s4, 256, %s335, [#allocation9], 64, 64, 4
        $region28: #{tpu_custom_call.1} parent=11 // pred_fallthru
          _
        // Predicated region
        $region29: #{tpu_custom_call.1} parent=11 // pred_check
          %p341 = pneg %p172
        $region30: #{tpu_custom_call.1} parent=11 // pred_check_branch
          %343 = sbr.rel (%p341) target = $region32
        $region31: #{tpu_custom_call.1} parent=11 // pred_region
          _
        $region32: #{tpu_custom_call.1} parent=11 // pred_fallthru
          _
        // Predicated region
        $region33: #{tpu_custom_call.1} parent=11 // pred_check
          %p344 = pneg %p193
        $region34: #{tpu_custom_call.1} parent=11 // pred_check_branch
          %346 = sbr.rel (%p344) target = $region36
        $region35: #{tpu_custom_call.1} parent=11 // pred_region
          _
        $region36: #{tpu_custom_call.1} parent=11 // pred_fallthru
          _
        // Predicated region
        $region37: #{tpu_custom_call.1} parent=11 // pred_check
          %p347 = pneg %p214
        $region38: #{tpu_custom_call.1} parent=11 // pred_check_branch
          %349 = sbr.rel (%p347) target = $region40
        $region39: #{tpu_custom_call.1} parent=11 // pred_region
          _
        $region40: #{tpu_custom_call.1} parent=11 // pred_fallthru
          _
        // Predicated region
        $region41: #{tpu_custom_call.1} parent=11 // pred_check
          %p350 = pneg %p235
        $region42: #{tpu_custom_call.1} parent=11 // pred_check_branch
          %352 = sbr.rel (%p350) target = $region44
        $region43: #{tpu_custom_call.1} parent=11 // pred_region
          _
        $region44: #{tpu_custom_call.1} parent=11 // pred_fallthru
          _
        // Predicated region
        $region45: #{tpu_custom_call.1} parent=11 // pred_check
          %p353 = pneg %p256
        $region46: #{tpu_custom_call.1} parent=11 // pred_check_branch
          %355 = sbr.rel (%p353) target = $region48
        $region47: #{tpu_custom_call.1} parent=11 // pred_region
          _
        $region48: #{tpu_custom_call.1} parent=11 // pred_fallthru
          _
      $region12: #{tpu_custom_call.1} parent=5 // pred_fallthru
        _
      %p356 = scmp.lt.s32.totalorder %s24, 2
      // Predicated region
      $region49: #{tpu_custom_call.1} parent=5 // pred_check
        %p357 = pneg %p356
      $region50: #{tpu_custom_call.1} parent=5 // pred_check_branch
        %359 = sbr.rel (%p357) target = $region52
      $region51: #{tpu_custom_call.1} parent=5 // pred_region
        // Predicated region
        $region53: #{tpu_custom_call.1} parent=51 // pred_check
          %p360 = pneg %p56
        $region54: #{tpu_custom_call.1} parent=51 // pred_check_branch
          %362 = sbr.rel (%p360) target = $region56
        $region55: #{tpu_custom_call.1} parent=51 // pred_region
          %s363 = sand.u32 %s46, 1
          %s364 = scalar_lea.sflag [#allocation3], %s363
          %s365 = sand.u32 %s46, 1
          %s366 = smul.addr %s365, 8
          %s367 = scalar_lea.vmem [#allocation2], %s366
          %s369 = ssub.s32 128, 128
          %370 = vsyncadd %s364, %s369
          %s371 = smul.addr %s31, 128
          %s372 = scalar_lea.hbm %s0, %s371
          %s374 = sshll.u32 %s367, 4
          %s375 = int_to_ptr.vmem [resolvable:$true] %s374
          %377 = dma.hbm_to_vmem [thread:$0]  %s372, 128, %s375, %s364
        $region56: #{tpu_custom_call.1} parent=51 // pred_fallthru
          _
      $region52: #{tpu_custom_call.1} parent=5 // pred_fallthru
        _
      %p378 = scmp.le.s32.totalorder 1, %s24
      %p379 = scmp.lt.s32.totalorder %s24, 3
      %p380 = pnand %p378, %p379
      %p381 = pneg %p380
      // Predicated region
      $region57: #{tpu_custom_call.1} parent=5 // pred_check
        _
      $region58: #{tpu_custom_call.1} parent=5 // pred_check_branch
        %383 = sbr.rel (%p380) target = $region60
      $region59: #{tpu_custom_call.1} parent=5 // pred_region
        %s384 = ssub.s32 %s24, 1
        %s385 = sand.u32 %s49, 1
        %s386 = scalar_lea.sflag [#allocation3], %s385
        %s387 = sand.u32 %s49, 1
        %s388 = smul.addr %s387, 8
        %s389 = scalar_lea.vmem [#allocation2], %s388
        // Predicated region
        $region61: #{tpu_custom_call.1} parent=59 // pred_check
          %p390 = pneg %p62
        $region62: #{tpu_custom_call.1} parent=59 // pred_check_branch
          %392 = sbr.rel (%p390) target = $region64
        $region63: #{tpu_custom_call.1} parent=59 // pred_region
          %393 = dma.done %s386, 128
        $region64: #{tpu_custom_call.1} parent=59 // pred_fallthru
          _
        // Predicated region
        $region65: #{tpu_custom_call.1} parent=59 // pred_check
          %p394 = pneg %p88
        $region66: #{tpu_custom_call.1} parent=59 // pred_check_branch
          %396 = sbr.rel (%p394) target = $region68
        $region67: #{tpu_custom_call.1} parent=59 // pred_region
          %397 = dma.done [#allocation6], 128
        $region68: #{tpu_custom_call.1} parent=59 // pred_fallthru
          _
        // Predicated region
        $region69: #{tpu_custom_call.1} parent=59 // pred_check
          %p398 = pneg %p109
        $region70: #{tpu_custom_call.1} parent=59 // pred_check_branch
          %400 = sbr.rel (%p398) target = $region72
        $region71: #{tpu_custom_call.1} parent=59 // pred_region
          %401 = dma.done [#allocation6], 256
        $region72: #{tpu_custom_call.1} parent=59 // pred_fallthru
          _
        // Predicated region
        $region73: #{tpu_custom_call.1} parent=59 // pred_check
          %p402 = pneg %p151
        $region74: #{tpu_custom_call.1} parent=59 // pred_check_branch
          %404 = sbr.rel (%p402) target = $region76
        $region75: #{tpu_custom_call.1} parent=59 // pred_region
          %405 = dma.done [#allocation9], 256
        $region76: #{tpu_custom_call.1} parent=59 // pred_fallthru
          _
        %s406 = sand.u32 %s49, 1
        %s407 = scalar_lea.sflag [#allocation3], %s406
        %s408 = sand.u32 %s49, 1
        %s409 = smul.addr %s408, 8
        %s410 = scalar_lea.vmem [#allocation2], %s409
        %p411 = pneg %p62
        %p412 = pneg %p59
        %p413 = pneg %p88
        %p414 = pneg %p85
        %p415 = pneg %p109
        %p416 = pneg %p106
        %p417 = pneg %p130
        %p418 = pneg %p127
        %p419 = pneg %p151
        %p420 = pneg %p148
        %p421 = pneg %p172
        %p422 = pneg %p169
        %p423 = pneg %p193
        %p424 = pneg %p190
        %p425 = pneg %p214
        %p426 = pneg %p211
        %p427 = pneg %p235
        %p428 = pneg %p232
        %p429 = pneg %p256
        %p430 = pneg %p253
        %p431 = pneg %p284
        %p432 = pneg %p281
        %s433 = sand.u32 %s271, 1
        %s434 = scalar_lea.sflag [#allocation4], %s433
        %s435 = sand.u32 %s271, 1
        %s436 = smul.addr %s435, 8
        %s437 = scalar_lea.vmem [#allocation10], %s436
        %s439 = smul.u32 %s34, 8
        %s440 = scalar_lea.vmem %s389, %s439 [#allocation2]
        %v441 = vld [vmem:[%s440] sm:$0xff]
        %v442 = vpack.c.bf16 %v441, %v441
        %v443 = vld [vmem:[%s389] sm:$0xff]
        %v444 = vpack.c.bf16 %v443, %v443
        %v445 = vld [vmem:[#allocation7] sm:$0xf]
        %v446 = vld [vmem:[#allocation7 + $0x4] sm:$0xf]
        %v447 = vld [vmem:[#allocation7 + $0x8] sm:$0xf]
        %v448 = vld [vmem:[#allocation7 + $0xc] sm:$0xf]
        %v449 = vld [vmem:[%s3] sm:$0x1]
        %v451 = vlaneseq
        %v452 = vshrl.u32 %v451, 7
        %v453 = vsub.s32 0, %v452
        %v454 = vrot.slane %v449, %v453
        %v460 = vunpack.c.l.b16 %v445
        %v461 = vunpack.c.l.b16 %v446
        %v462 = vunpack.c.l.b16 %v447
        %v463 = vunpack.c.l.b16 %v448
        %v464 = vpack.c.b16 %v461, %v460
        %v465 = vpack.c.b16 %v463, %v462
        %vm468 = vcmask 261120
        %v470 = vsel %vm468, %v442, 0
        %472 = vmatprep.subr.bf16.mxu0 0
        %473 = vmatpush1.bf16.msra.mxu0 %v464
        %474 = vmatprep.subr.bf16.mxu0 0
        %475 = vmatpush1.bf16.msra.mxu0 %v465
        %476 = vmatprep.subr.bf16.mxu0 0
        %477 = vmatpush1.bf16.msra.mxu0 0
        %478 = vmatprep.subr.bf16.mxu0 0
        %479 = vmatpush1.bf16.msra.mxu0 0
        %480 = vmatprep.subr.bf16.mxu0 0
        %481 = vmatpush1.bf16.msra.mxu0 0
        %482 = vmatprep.subr.bf16.mxu0 0
        %483 = vmatpush1.bf16.msra.mxu0 0
        %484 = vmatprep.subr.bf16.mxu0 0
        %485 = vmatpush1.bf16.msra.mxu0 0
        %486 = vmatprep.subr.bf16.mxu0 0
        %487 = vmatpush1.bf16.msra.mxu0 0
        %488 = vmatprep.subr.bf16.mxu0 0
        %489 = vmatpush1.bf16.msra.mxu0 0
        %490 = vmatprep.subr.bf16.mxu0 0
        %491 = vmatpush1.bf16.msra.mxu0 0
        %492 = vmatprep.subr.bf16.mxu0 0
        %493 = vmatpush1.bf16.msra.mxu0 0
        %494 = vmatprep.subr.bf16.mxu0 0
        %495 = vmatpush1.bf16.msra.mxu0 0
        %496 = vmatprep.subr.bf16.mxu0 0
        %497 = vmatpush1.bf16.msra.mxu0 0
        %498 = vmatprep.subr.bf16.mxu0 0
        %499 = vmatpush1.bf16.msra.mxu0 0
        %500 = vmatprep.subr.bf16.mxu0 0
        %501 = vmatpush1.bf16.msra.mxu0 0
        %502 = vmatprep.subr.bf16.mxu0 0
        %503 = vmatpush1.bf16.msra.mxu0 0
        %504 = vmatprep.mubr.bf16.mxu0 0
        %505 = vmatmul.mubr.bf16.gmra.mrb[0].mxu0 %v470
        %v506 = vpop.f32.mrb[0].mxu0
        %v507 = vadd.f32 %v454, %v506
        %v508 = vpop.f32.mrb[0].mxu0
        %v509 = vpop.f32.mrb[0].mxu0
        %v510 = vpop.f32.mrb[0].mxu0
        %511 = vdwg.mxu0
        %v512 = vpack.c.bf16 %v507, %v507
        %v513 = vld [vmem:[#allocation8] sm:$0xf]
        %v514 = vld [vmem:[#allocation8 + $0x4] sm:$0xf]
        %v515 = vld [vmem:[#allocation8 + $0x8] sm:$0xf]
        %v516 = vld [vmem:[#allocation8 + $0xc] sm:$0xf]
        %v517 = vld [vmem:[%s5] sm:$0x1]
        %v519 = vlaneseq
        %v520 = vshrl.u32 %v519, 7
        %v521 = vsub.s32 0, %v520
        %v522 = vrot.slane %v517, %v521
        %v528 = vunpack.c.l.b16 %v513
        %v529 = vunpack.c.l.b16 %v514
        %v530 = vunpack.c.l.b16 %v515
        %v531 = vunpack.c.l.b16 %v516
        %v532 = vpack.c.b16 %v529, %v528
        %v533 = vpack.c.b16 %v531, %v530
        %v537 = vsel %vm468, %v444, 0
        %539 = vmatprep.subr.bf16.mxu0 0
        %540 = vmatpush1.bf16.msra.mxu0 %v532
        %541 = vmatprep.subr.bf16.mxu0 0
        %542 = vmatpush1.bf16.msra.mxu0 %v533
        %543 = vmatprep.subr.bf16.mxu0 0
        %544 = vmatpush1.bf16.msra.mxu0 0
        %545 = vmatprep.subr.bf16.mxu0 0
        %546 = vmatpush1.bf16.msra.mxu0 0
        %547 = vmatprep.subr.bf16.mxu0 0
        %548 = vmatpush1.bf16.msra.mxu0 0
        %549 = vmatprep.subr.bf16.mxu0 0
        %550 = vmatpush1.bf16.msra.mxu0 0
        %551 = vmatprep.subr.bf16.mxu0 0
        %552 = vmatpush1.bf16.msra.mxu0 0
        %553 = vmatprep.subr.bf16.mxu0 0
        %554 = vmatpush1.bf16.msra.mxu0 0
        %555 = vmatprep.subr.bf16.mxu0 0
        %556 = vmatpush1.bf16.msra.mxu0 0
        %557 = vmatprep.subr.bf16.mxu0 0
        %558 = vmatpush1.bf16.msra.mxu0 0
        %559 = vmatprep.subr.bf16.mxu0 0
        %560 = vmatpush1.bf16.msra.mxu0 0
        %561 = vmatprep.subr.bf16.mxu0 0
        %562 = vmatpush1.bf16.msra.mxu0 0
        %563 = vmatprep.subr.bf16.mxu0 0
        %564 = vmatpush1.bf16.msra.mxu0 0
        %565 = vmatprep.subr.bf16.mxu0 0
        %566 = vmatpush1.bf16.msra.mxu0 0
        %567 = vmatprep.subr.bf16.mxu0 0
        %568 = vmatpush1.bf16.msra.mxu0 0
        %569 = vmatprep.subr.bf16.mxu0 0
        %570 = vmatpush1.bf16.msra.mxu0 0
        %571 = vmatprep.mubr.bf16.mxu0 0
        %572 = vmatmul.mubr.bf16.gmra.mrb[0].mxu0 %v537
        %v573 = vpop.f32.mrb[0].mxu0
        %v574 = vadd.f32 %v522, %v573
        %v575 = vpop.f32.mrb[0].mxu0
        %v576 = vpop.f32.mrb[0].mxu0
        %v577 = vpop.f32.mrb[0].mxu0
        %578 = vdwg.mxu0
        %v579 = vpack.c.bf16 %v574, %v574
        %v580 = vld [vmem:[#allocation5] sm:$0xff]
        %vm581 = vcmask 64512
        %v583 = vsel %vm581, %v512, 0
        %v586 = vsel %vm581, %v579, 0
        %588 = vmatprep.subr.bf16.mxu0 0
        %589 = vmatpush1.bf16.xpose.msra.mxu0 %v586
        %590 = vmatprep.subr.bf16.mxu0 0
        %591 = vmatpush1.bf16.xpose.msra.mxu0 0
        %592 = vmatprep.subr.bf16.mxu0 0
        %593 = vmatpush1.bf16.xpose.msra.mxu0 0
        %594 = vmatprep.subr.bf16.mxu0 0
        %595 = vmatpush1.bf16.xpose.msra.mxu0 0
        %596 = vmatprep.subr.bf16.mxu0 0
        %597 = vmatpush1.bf16.xpose.msra.mxu0 0
        %598 = vmatprep.subr.bf16.mxu0 0
        %599 = vmatpush1.bf16.xpose.msra.mxu0 0
        %600 = vmatprep.subr.bf16.mxu0 0
        %601 = vmatpush1.bf16.xpose.msra.mxu0 0
        %602 = vmatprep.subr.bf16.mxu0 0
        %603 = vmatpush1.bf16.xpose.msra.mxu0 0
        %604 = vmatprep.subr.bf16.mxu0 0
        %605 = vmatpush1.bf16.xpose.msra.mxu0 0
        %606 = vmatprep.subr.bf16.mxu0 0
        %607 = vmatpush1.bf16.xpose.msra.mxu0 0
        %608 = vmatprep.subr.bf16.mxu0 0
        %609 = vmatpush1.bf16.xpose.msra.mxu0 0
        %610 = vmatprep.subr.bf16.mxu0 0
        %611 = vmatpush1.bf16.xpose.msra.mxu0 0
        %612 = vmatprep.subr.bf16.mxu0 0
        %613 = vmatpush1.bf16.xpose.msra.mxu0 0
        %614 = vmatprep.subr.bf16.mxu0 0
        %615 = vmatpush1.bf16.xpose.msra.mxu0 0
        %616 = vmatprep.subr.bf16.mxu0 0
        %617 = vmatpush1.bf16.xpose.msra.mxu0 0
        %618 = vmatprep.subr.bf16.mxu0 0
        %619 = vmatpush1.bf16.xpose.msra.mxu0 0
        %620 = vmatprep.mubr.bf16.mxu0 0
        %621 = vmatmul.mubr.bf16.gmra.mrb[0].mxu0 %v583
        %v622 = vpop.f32.mrb[0].mxu0
        %v623 = vadd.f32 %v580, %v622
        %v624 = vpop.f32.mrb[0].mxu0
        %v625 = vpop.f32.mrb[0].mxu0
        %v626 = vpop.f32.mrb[0].mxu0
        %627 = vdwg.mxu0
        %v628 = vsel %vm581, %v623, -inf
        %629 = vmax.xlane.f32.xlu0 %v628
        %v630 = vpop.xlane.xlu0 %629
        %v631 = vsub.f32 %v623, %v630
        %v632 = vmul.f32 %v631, 1.442695
        %v633 = vpow.pop %v632
        %v634 = vsel %vm581, %v633, 0.0
        %635 = vadd.xlane.f32.xlu0 %v634
        %v636 = vpop.xlane.xlu0 %635
        %v637 = vrcp.pop %v636
        %v638 = vmul.f32 %v633, %v637
        %v639 = vpack.c.bf16 %v638, %v638
        %641 = vrot.lane.b32.xlu0 %v579, 96
        %v642 = vpop.permute.xlu0 %641
        %v644 = vsel %vm581, %v639, 0
        %vm646 = vcmask 1043456
        %v648 = vsel %vm646, %v642, 0
        %650 = vmatprep.subr.bf16.mxu0 0
        %651 = vmatpush1.bf16.msra.mxu0 %v648
        %652 = vmatprep.subr.bf16.mxu0 0
        %653 = vmatpush1.bf16.msra.mxu0 0
        %654 = vmatprep.subr.bf16.mxu0 0
        %655 = vmatpush1.bf16.msra.mxu0 0
        %656 = vmatprep.subr.bf16.mxu0 0
        %657 = vmatpush1.bf16.msra.mxu0 0
        %658 = vmatprep.subr.bf16.mxu0 0
        %659 = vmatpush1.bf16.msra.mxu0 0
        %660 = vmatprep.subr.bf16.mxu0 0
        %661 = vmatpush1.bf16.msra.mxu0 0
        %662 = vmatprep.subr.bf16.mxu0 0
        %663 = vmatpush1.bf16.msra.mxu0 0
        %664 = vmatprep.subr.bf16.mxu0 0
        %665 = vmatpush1.bf16.msra.mxu0 0
        %666 = vmatprep.subr.bf16.mxu0 0
        %667 = vmatpush1.bf16.msra.mxu0 0
        %668 = vmatprep.subr.bf16.mxu0 0
        %669 = vmatpush1.bf16.msra.mxu0 0
        %670 = vmatprep.subr.bf16.mxu0 0
        %671 = vmatpush1.bf16.msra.mxu0 0
        %672 = vmatprep.subr.bf16.mxu0 0
        %673 = vmatpush1.bf16.msra.mxu0 0
        %674 = vmatprep.subr.bf16.mxu0 0
        %675 = vmatpush1.bf16.msra.mxu0 0
        %676 = vmatprep.subr.bf16.mxu0 0
        %677 = vmatpush1.bf16.msra.mxu0 0
        %678 = vmatprep.subr.bf16.mxu0 0
        %679 = vmatpush1.bf16.msra.mxu0 0
        %680 = vmatprep.subr.bf16.mxu0 0
        %681 = vmatpush1.bf16.msra.mxu0 0
        %682 = vmatprep.mubr.bf16.mxu0 0
        %683 = vmatmul.mubr.bf16.gmra.mrb[0].mxu0 %v644
        %v684 = vpop.f32.mrb[0].mxu0
        %v685 = vadd.f32 0.0, %v684
        %v686 = vpop.f32.mrb[0].mxu0
        %v687 = vpop.f32.mrb[0].mxu0
        %v688 = vpop.f32.mrb[0].mxu0
        %689 = vdwg.mxu0
        %v690 = vpack.c.bf16 %v685, %v685
        %692 = vrot.lane.b32.xlu0 %v512, 120
        %v693 = vpop.permute.xlu0 %692
        %694 = vrot.lane.b32.xlu0 %v579, 120
        %v695 = vpop.permute.xlu0 %694
        %v697 = vsel %vm581, %v693, 0
        %v700 = vsel %vm581, %v695, 0
        %702 = vmatprep.subr.bf16.mxu0 0
        %703 = vmatpush1.bf16.xpose.msra.mxu0 %v700
        %704 = vmatprep.subr.bf16.mxu0 0
        %705 = vmatpush1.bf16.xpose.msra.mxu0 0
        %706 = vmatprep.subr.bf16.mxu0 0
        %707 = vmatpush1.bf16.xpose.msra.mxu0 0
        %708 = vmatprep.subr.bf16.mxu0 0
        %709 = vmatpush1.bf16.xpose.msra.mxu0 0
        %710 = vmatprep.subr.bf16.mxu0 0
        %711 = vmatpush1.bf16.xpose.msra.mxu0 0
        %712 = vmatprep.subr.bf16.mxu0 0
        %713 = vmatpush1.bf16.xpose.msra.mxu0 0
        %714 = vmatprep.subr.bf16.mxu0 0
        %715 = vmatpush1.bf16.xpose.msra.mxu0 0
        %716 = vmatprep.subr.bf16.mxu0 0
        %717 = vmatpush1.bf16.xpose.msra.mxu0 0
        %718 = vmatprep.subr.bf16.mxu0 0
        %719 = vmatpush1.bf16.xpose.msra.mxu0 0
        %720 = vmatprep.subr.bf16.mxu0 0
        %721 = vmatpush1.bf16.xpose.msra.mxu0 0
        %722 = vmatprep.subr.bf16.mxu0 0
        %723 = vmatpush1.bf16.xpose.msra.mxu0 0
        %724 = vmatprep.subr.bf16.mxu0 0
        %725 = vmatpush1.bf16.xpose.msra.mxu0 0
        %726 = vmatprep.subr.bf16.mxu0 0
        %727 = vmatpush1.bf16.xpose.msra.mxu0 0
        %728 = vmatprep.subr.bf16.mxu0 0
        %729 = vmatpush1.bf16.xpose.msra.mxu0 0
        %730 = vmatprep.subr.bf16.mxu0 0
        %731 = vmatpush1.bf16.xpose.msra.mxu0 0
        %732 = vmatprep.subr.bf16.mxu0 0
        %733 = vmatpush1.bf16.xpose.msra.mxu0 0
        %734 = vmatprep.mubr.bf16.mxu0 0
        %735 = vmatmul.mubr.bf16.gmra.mrb[0].mxu0 %v697
        %v736 = vpop.f32.mrb[0].mxu0
        %v737 = vadd.f32 %v580, %v736
        %v738 = vpop.f32.mrb[0].mxu0
        %v739 = vpop.f32.mrb[0].mxu0
        %v740 = vpop.f32.mrb[0].mxu0
        %741 = vdwg.mxu0
        %v742 = vsel %vm581, %v737, -inf
        %743 = vmax.xlane.f32.xlu0 %v742
        %v744 = vpop.xlane.xlu0 %743
        %v745 = vsub.f32 %v737, %v744
        %v746 = vmul.f32 %v745, 1.442695
        %v747 = vpow.pop %v746
        %v748 = vsel %vm581, %v747, 0.0
        %749 = vadd.xlane.f32.xlu0 %v748
        %v750 = vpop.xlane.xlu0 %749
        %v751 = vrcp.pop %v750
        %v752 = vmul.f32 %v747, %v751
        %v753 = vpack.c.bf16 %v752, %v752
        %754 = vrot.lane.b32.xlu0 %v579, 88
        %v755 = vpop.permute.xlu0 %754
        %v757 = vsel %vm581, %v753, 0
        %v760 = vsel %vm646, %v755, 0
        %762 = vmatprep.subr.bf16.mxu0 0
        %763 = vmatpush1.bf16.msra.mxu0 %v760
        %764 = vmatprep.subr.bf16.mxu0 0
        %765 = vmatpush1.bf16.msra.mxu0 0
        %766 = vmatprep.subr.bf16.mxu0 0
        %767 = vmatpush1.bf16.msra.mxu0 0
        %768 = vmatprep.subr.bf16.mxu0 0
        %769 = vmatpush1.bf16.msra.mxu0 0
        %770 = vmatprep.subr.bf16.mxu0 0
        %771 = vmatpush1.bf16.msra.mxu0 0
        %772 = vmatprep.subr.bf16.mxu0 0
        %773 = vmatpush1.bf16.msra.mxu0 0
        %774 = vmatprep.subr.bf16.mxu0 0
        %775 = vmatpush1.bf16.msra.mxu0 0
        %776 = vmatprep.subr.bf16.mxu0 0
        %777 = vmatpush1.bf16.msra.mxu0 0
        %778 = vmatprep.subr.bf16.mxu0 0
        %779 = vmatpush1.bf16.msra.mxu0 0
        %780 = vmatprep.subr.bf16.mxu0 0
        %781 = vmatpush1.bf16.msra.mxu0 0
        %782 = vmatprep.subr.bf16.mxu0 0
        %783 = vmatpush1.bf16.msra.mxu0 0
        %784 = vmatprep.subr.bf16.mxu0 0
        %785 = vmatpush1.bf16.msra.mxu0 0
        %786 = vmatprep.subr.bf16.mxu0 0
        %787 = vmatpush1.bf16.msra.mxu0 0
        %788 = vmatprep.subr.bf16.mxu0 0
        %789 = vmatpush1.bf16.msra.mxu0 0
        %790 = vmatprep.subr.bf16.mxu0 0
        %791 = vmatpush1.bf16.msra.mxu0 0
        %792 = vmatprep.subr.bf16.mxu0 0
        %793 = vmatpush1.bf16.msra.mxu0 0
        %794 = vmatprep.mubr.bf16.mxu0 0
        %795 = vmatmul.mubr.bf16.gmra.mrb[0].mxu0 %v757
        %v796 = vpop.f32.mrb[0].mxu0
        %v797 = vadd.f32 0.0, %v796
        %v798 = vpop.f32.mrb[0].mxu0
        %v799 = vpop.f32.mrb[0].mxu0
        %v800 = vpop.f32.mrb[0].mxu0
        %801 = vdwg.mxu0
        %v802 = vpack.c.bf16 %v797, %v797
        %803 = vrot.lane.b32.xlu0 %v512, 112
        %v804 = vpop.permute.xlu0 %803
        %805 = vrot.lane.b32.xlu0 %v579, 112
        %v806 = vpop.permute.xlu0 %805
        %v808 = vsel %vm581, %v804, 0
        %v811 = vsel %vm581, %v806, 0
        %813 = vmatprep.subr.bf16.mxu0 0
        %814 = vmatpush1.bf16.xpose.msra.mxu0 %v811
        %815 = vmatprep.subr.bf16.mxu0 0
        %816 = vmatpush1.bf16.xpose.msra.mxu0 0
        %817 = vmatprep.subr.bf16.mxu0 0
        %818 = vmatpush1.bf16.xpose.msra.mxu0 0
        %819 = vmatprep.subr.bf16.mxu0 0
        %820 = vmatpush1.bf16.xpose.msra.mxu0 0
        %821 = vmatprep.subr.bf16.mxu0 0
        %822 = vmatpush1.bf16.xpose.msra.mxu0 0
        %823 = vmatprep.subr.bf16.mxu0 0
        %824 = vmatpush1.bf16.xpose.msra.mxu0 0
        %825 = vmatprep.subr.bf16.mxu0 0
        %826 = vmatpush1.bf16.xpose.msra.mxu0 0
        %827 = vmatprep.subr.bf16.mxu0 0
        %828 = vmatpush1.bf16.xpose.msra.mxu0 0
        %829 = vmatprep.subr.bf16.mxu0 0
        %830 = vmatpush1.bf16.xpose.msra.mxu0 0
        %831 = vmatprep.subr.bf16.mxu0 0
        %832 = vmatpush1.bf16.xpose.msra.mxu0 0
        %833 = vmatprep.subr.bf16.mxu0 0
        %834 = vmatpush1.bf16.xpose.msra.mxu0 0
        %835 = vmatprep.subr.bf16.mxu0 0
        %836 = vmatpush1.bf16.xpose.msra.mxu0 0
        %837 = vmatprep.subr.bf16.mxu0 0
        %838 = vmatpush1.bf16.xpose.msra.mxu0 0
        %839 = vmatprep.subr.bf16.mxu0 0
        %840 = vmatpush1.bf16.xpose.msra.mxu0 0
        %841 = vmatprep.subr.bf16.mxu0 0
        %842 = vmatpush1.bf16.xpose.msra.mxu0 0
        %843 = vmatprep.subr.bf16.mxu0 0
        %844 = vmatpush1.bf16.xpose.msra.mxu0 0
        %845 = vmatprep.mubr.bf16.mxu0 0
        %846 = vmatmul.mubr.bf16.gmra.mrb[0].mxu0 %v808
        %v847 = vpop.f32.mrb[0].mxu0
        %v848 = vadd.f32 %v580, %v847
        %v849 = vpop.f32.mrb[0].mxu0
        %v850 = vpop.f32.mrb[0].mxu0
        %v851 = vpop.f32.mrb[0].mxu0
        %852 = vdwg.mxu0
        %v853 = vsel %vm581, %v848, -inf
        %854 = vmax.xlane.f32.xlu0 %v853
        %v855 = vpop.xlane.xlu0 %854
        %v856 = vsub.f32 %v848, %v855
        %v857 = vmul.f32 %v856, 1.442695
        %v858 = vpow.pop %v857
        %v859 = vsel %vm581, %v858, 0.0
        %860 = vadd.xlane.f32.xlu0 %v859
        %v861 = vpop.xlane.xlu0 %860
        %v862 = vrcp.pop %v861
        %v863 = vmul.f32 %v858, %v862
        %v864 = vpack.c.bf16 %v863, %v863
        %865 = vrot.lane.b32.xlu0 %v579, 80
        %v866 = vpop.permute.xlu0 %865
        %v868 = vsel %vm581, %v864, 0
        %v871 = vsel %vm646, %v866, 0
        %873 = vmatprep.subr.bf16.mxu0 0
        %874 = vmatpush1.bf16.msra.mxu0 %v871
        %875 = vmatprep.subr.bf16.mxu0 0
        %876 = vmatpush1.bf16.msra.mxu0 0
        %877 = vmatprep.subr.bf16.mxu0 0
        %878 = vmatpush1.bf16.msra.mxu0 0
        %879 = vmatprep.subr.bf16.mxu0 0
        %880 = vmatpush1.bf16.msra.mxu0 0
        %881 = vmatprep.subr.bf16.mxu0 0
        %882 = vmatpush1.bf16.msra.mxu0 0
        %883 = vmatprep.subr.bf16.mxu0 0
        %884 = vmatpush1.bf16.msra.mxu0 0
        %885 = vmatprep.subr.bf16.mxu0 0
        %886 = vmatpush1.bf16.msra.mxu0 0
        %887 = vmatprep.subr.bf16.mxu0 0
        %888 = vmatpush1.bf16.msra.mxu0 0
        %889 = vmatprep.subr.bf16.mxu0 0
        %890 = vmatpush1.bf16.msra.mxu0 0
        %891 = vmatprep.subr.bf16.mxu0 0
        %892 = vmatpush1.bf16.msra.mxu0 0
        %893 = vmatprep.subr.bf16.mxu0 0
        %894 = vmatpush1.bf16.msra.mxu0 0
        %895 = vmatprep.subr.bf16.mxu0 0
        %896 = vmatpush1.bf16.msra.mxu0 0
        %897 = vmatprep.subr.bf16.mxu0 0
        %898 = vmatpush1.bf16.msra.mxu0 0
        %899 = vmatprep.subr.bf16.mxu0 0
        %900 = vmatpush1.bf16.msra.mxu0 0
        %901 = vmatprep.subr.bf16.mxu0 0
        %902 = vmatpush1.bf16.msra.mxu0 0
        %903 = vmatprep.subr.bf16.mxu0 0
        %904 = vmatpush1.bf16.msra.mxu0 0
        %905 = vmatprep.mubr.bf16.mxu0 0
        %906 = vmatmul.mubr.bf16.gmra.mrb[0].mxu0 %v868
        %v907 = vpop.f32.mrb[0].mxu0
        %v908 = vadd.f32 0.0, %v907
        %v909 = vpop.f32.mrb[0].mxu0
        %v910 = vpop.f32.mrb[0].mxu0
        %v911 = vpop.f32.mrb[0].mxu0
        %912 = vdwg.mxu0
        %v913 = vpack.c.bf16 %v908, %v908
        %914 = vrot.lane.b32.xlu0 %v512, 104
        %v915 = vpop.permute.xlu0 %914
        %916 = vrot.lane.b32.xlu0 %v579, 104
        %v917 = vpop.permute.xlu0 %916
        %v919 = vsel %vm581, %v915, 0
        %v922 = vsel %vm581, %v917, 0
        %924 = vmatprep.subr.bf16.mxu0 0
        %925 = vmatpush1.bf16.xpose.msra.mxu0 %v922
        %926 = vmatprep.subr.bf16.mxu0 0
        %927 = vmatpush1.bf16.xpose.msra.mxu0 0
        %928 = vmatprep.subr.bf16.mxu0 0
        %929 = vmatpush1.bf16.xpose.msra.mxu0 0
        %930 = vmatprep.subr.bf16.mxu0 0
        %931 = vmatpush1.bf16.xpose.msra.mxu0 0
        %932 = vmatprep.subr.bf16.mxu0 0
        %933 = vmatpush1.bf16.xpose.msra.mxu0 0
        %934 = vmatprep.subr.bf16.mxu0 0
        %935 = vmatpush1.bf16.xpose.msra.mxu0 0
        %936 = vmatprep.subr.bf16.mxu0 0
        %937 = vmatpush1.bf16.xpose.msra.mxu0 0
        %938 = vmatprep.subr.bf16.mxu0 0
        %939 = vmatpush1.bf16.xpose.msra.mxu0 0
        %940 = vmatprep.subr.bf16.mxu0 0
        %941 = vmatpush1.bf16.xpose.msra.mxu0 0
        %942 = vmatprep.subr.bf16.mxu0 0
        %943 = vmatpush1.bf16.xpose.msra.mxu0 0
        %944 = vmatprep.subr.bf16.mxu0 0
        %945 = vmatpush1.bf16.xpose.msra.mxu0 0
        %946 = vmatprep.subr.bf16.mxu0 0
        %947 = vmatpush1.bf16.xpose.msra.mxu0 0
        %948 = vmatprep.subr.bf16.mxu0 0
        %949 = vmatpush1.bf16.xpose.msra.mxu0 0
        %950 = vmatprep.subr.bf16.mxu0 0
        %951 = vmatpush1.bf16.xpose.msra.mxu0 0
        %952 = vmatprep.subr.bf16.mxu0 0
        %953 = vmatpush1.bf16.xpose.msra.mxu0 0
        %954 = vmatprep.subr.bf16.mxu0 0
        %955 = vmatpush1.bf16.xpose.msra.mxu0 0
        %956 = vmatprep.mubr.bf16.mxu0 0
        %957 = vmatmul.mubr.bf16.gmra.mrb[0].mxu0 %v919
        %v958 = vpop.f32.mrb[0].mxu0
        %v959 = vadd.f32 %v580, %v958
        %v960 = vpop.f32.mrb[0].mxu0
        %v961 = vpop.f32.mrb[0].mxu0
        %v962 = vpop.f32.mrb[0].mxu0
        %963 = vdwg.mxu0
        %v964 = vsel %vm581, %v959, -inf
        %965 = vmax.xlane.f32.xlu0 %v964
        %v966 = vpop.xlane.xlu0 %965
        %v967 = vsub.f32 %v959, %v966
        %v968 = vmul.f32 %v967, 1.442695
        %v969 = vpow.pop %v968
        %v970 = vsel %vm581, %v969, 0.0
        %971 = vadd.xlane.f32.xlu0 %v970
        %v972 = vpop.xlane.xlu0 %971
        %v973 = vrcp.pop %v972
        %v974 = vmul.f32 %v969, %v973
        %v975 = vpack.c.bf16 %v974, %v974
        %976 = vrot.lane.b32.xlu0 %v579, 72
        %v977 = vpop.permute.xlu0 %976
        %v979 = vsel %vm581, %v975, 0
        %v982 = vsel %vm646, %v977, 0
        %984 = vmatprep.subr.bf16.mxu0 0
        %985 = vmatpush1.bf16.msra.mxu0 %v982
        %986 = vmatprep.subr.bf16.mxu0 0
        %987 = vmatpush1.bf16.msra.mxu0 0
        %988 = vmatprep.subr.bf16.mxu0 0
        %989 = vmatpush1.bf16.msra.mxu0 0
        %990 = vmatprep.subr.bf16.mxu0 0
        %991 = vmatpush1.bf16.msra.mxu0 0
        %992 = vmatprep.subr.bf16.mxu0 0
        %993 = vmatpush1.bf16.msra.mxu0 0
        %994 = vmatprep.subr.bf16.mxu0 0
        %995 = vmatpush1.bf16.msra.mxu0 0
        %996 = vmatprep.subr.bf16.mxu0 0
        %997 = vmatpush1.bf16.msra.mxu0 0
        %998 = vmatprep.subr.bf16.mxu0 0
        %999 = vmatpush1.bf16.msra.mxu0 0
        %1000 = vmatprep.subr.bf16.mxu0 0
        %1001 = vmatpush1.bf16.msra.mxu0 0
        %1002 = vmatprep.subr.bf16.mxu0 0
        %1003 = vmatpush1.bf16.msra.mxu0 0
        %1004 = vmatprep.subr.bf16.mxu0 0
        %1005 = vmatpush1.bf16.msra.mxu0 0
        %1006 = vmatprep.subr.bf16.mxu0 0
        %1007 = vmatpush1.bf16.msra.mxu0 0
        %1008 = vmatprep.subr.bf16.mxu0 0
        %1009 = vmatpush1.bf16.msra.mxu0 0
        %1010 = vmatprep.subr.bf16.mxu0 0
        %1011 = vmatpush1.bf16.msra.mxu0 0
        %1012 = vmatprep.subr.bf16.mxu0 0
        %1013 = vmatpush1.bf16.msra.mxu0 0
        %1014 = vmatprep.subr.bf16.mxu0 0
        %1015 = vmatpush1.bf16.msra.mxu0 0
        %1016 = vmatprep.mubr.bf16.mxu0 0
        %1017 = vmatmul.mubr.bf16.gmra.mrb[0].mxu0 %v979
        %v1018 = vpop.f32.mrb[0].mxu0
        %v1019 = vadd.f32 0.0, %v1018
        %v1020 = vpop.f32.mrb[0].mxu0
        %v1021 = vpop.f32.mrb[0].mxu0
        %v1022 = vpop.f32.mrb[0].mxu0
        %1023 = vdwg.mxu0
        %v1024 = vpack.c.bf16 %v1019, %v1019
        %1026 = vrot.lane.b32.xlu0 %v802, 8
        %v1027 = vpop.permute.xlu0 %1026
        %1029 = vrot.lane.b32.xlu0 %v913, 16
        %v1030 = vpop.permute.xlu0 %1029
        %1032 = vrot.lane.b32.xlu0 %v1024, 24
        %v1033 = vpop.permute.xlu0 %1032
        %v1036 = vsel %vm581, %v690, %v1027
        %vm1037 = vcmask 130048
        %v1039 = vsel %vm1037, %v1036, %v1030
        %vm1040 = vcmask 195584
        %v1042 = vsel %vm1040, %v1039, %v1033
        %v1043 = vld [vmem:[%s6] sm:$0xf]
        %v1044 = vld [vmem:[%s6 + $0x4] sm:$0xf]
        %v1045 = vld [vmem:[%s6 + $0x8] sm:$0xf]
        %v1046 = vld [vmem:[%s6 + $0xc] sm:$0xf]
        %v1047 = vld [vmem:[%s7] sm:$0x1]
        %v1049 = vlaneseq
        %v1050 = vshrl.u32 %v1049, 7
        %v1051 = vsub.s32 0, %v1050
        %v1052 = vrot.slane %v1047, %v1051
        %v1058 = vunpack.c.l.b16 %v1043
        %v1059 = vunpack.c.l.b16 %v1044
        %v1060 = vunpack.c.l.b16 %v1045
        %v1061 = vunpack.c.l.b16 %v1046
        %v1062 = vpack.c.b16 %v1059, %v1058
        %v1063 = vpack.c.b16 %v1061, %v1060
        %v1066 = vsel %vm468, %v1042, 0
        %1068 = vmatprep.subr.bf16.mxu0 0
        %1069 = vmatpush1.bf16.msra.mxu0 %v1062
        %1070 = vmatprep.subr.bf16.mxu0 0
        %1071 = vmatpush1.bf16.msra.mxu0 %v1063
        %1072 = vmatprep.subr.bf16.mxu0 0
        %1073 = vmatpush1.bf16.msra.mxu0 0
        %1074 = vmatprep.subr.bf16.mxu0 0
        %1075 = vmatpush1.bf16.msra.mxu0 0
        %1076 = vmatprep.subr.bf16.mxu0 0
        %1077 = vmatpush1.bf16.msra.mxu0 0
        %1078 = vmatprep.subr.bf16.mxu0 0
        %1079 = vmatpush1.bf16.msra.mxu0 0
        %1080 = vmatprep.subr.bf16.mxu0 0
        %1081 = vmatpush1.bf16.msra.mxu0 0
        %1082 = vmatprep.subr.bf16.mxu0 0
        %1083 = vmatpush1.bf16.msra.mxu0 0
        %1084 = vmatprep.subr.bf16.mxu0 0
        %1085 = vmatpush1.bf16.msra.mxu0 0
        %1086 = vmatprep.subr.bf16.mxu0 0
        %1087 = vmatpush1.bf16.msra.mxu0 0
        %1088 = vmatprep.subr.bf16.mxu0 0
        %1089 = vmatpush1.bf16.msra.mxu0 0
        %1090 = vmatprep.subr.bf16.mxu0 0
        %1091 = vmatpush1.bf16.msra.mxu0 0
        %1092 = vmatprep.subr.bf16.mxu0 0
        %1093 = vmatpush1.bf16.msra.mxu0 0
        %1094 = vmatprep.subr.bf16.mxu0 0
        %1095 = vmatpush1.bf16.msra.mxu0 0
        %1096 = vmatprep.subr.bf16.mxu0 0
        %1097 = vmatpush1.bf16.msra.mxu0 0
        %1098 = vmatprep.subr.bf16.mxu0 0
        %1099 = vmatpush1.bf16.msra.mxu0 0
        %1100 = vmatprep.mubr.bf16.mxu0 0
        %1101 = vmatmul.mubr.bf16.gmra.mrb[0].mxu0 %v1066
        %v1102 = vpop.f32.mrb[0].mxu0
        %v1103 = vadd.f32 %v1052, %v1102
        %v1104 = vpop.f32.mrb[0].mxu0
        %v1105 = vpop.f32.mrb[0].mxu0
        %v1106 = vpop.f32.mrb[0].mxu0
        %1107 = vdwg.mxu0
        %v1108 = vadd.f32 %v1103, %v441
        %v1109 = vsel %vm468, %v1108, 0.0
        %1110 = vadd.xlane.f32.xlu0 %v1109
        %v1111 = vpop.xlane.xlu0 %1110
        %v1112 = vrcp.pop 32.0
        %v1113 = vmul.f32 %v1111, %v1112
        %v1114 = vsub.f32 %v1108, %v1113
        %v1115 = vmul.f32 %v1114, %v1114
        %v1116 = vsel %vm468, %v1115, 0.0
        %1117 = vadd.xlane.f32.xlu0 %v1116
        %v1118 = vpop.xlane.xlu0 %1117
        %v1119 = vmul.f32 %v1118, %v1112
        %v1120 = vadd.f32 %v1119, 1e-05
        %v1121 = vrsqrt.pop %v1120
        %v1122 = vmul.f32 %v1114, %v1121
        %v1123 = vld [vmem:[%s8] sm:$0x1]
        %v1125 = vlaneseq
        %v1126 = vshrl.u32 %v1125, 7
        %v1127 = vsub.s32 0, %v1126
        %v1128 = vrot.slane %v1123, %v1127
        %v1130 = vmul.f32 %v1122, %v1128
        %v1131 = vld [vmem:[%s9] sm:$0x1]
        %v1133 = vlaneseq
        %v1134 = vshrl.u32 %v1133, 7
        %v1135 = vsub.s32 0, %v1134
        %v1136 = vrot.slane %v1131, %v1135
        %v1138 = vadd.f32 %v1130, %v1136
        %1139 = vst.msk [vmem:[%s437] sm:$0xff] %vm468, %v1138
        %s1140 = sand.u32 %s271, 1
        %s1141 = scalar_lea.sflag [#allocation4], %s1140
        %s1142 = sand.u32 %s271, 1
        %s1143 = smul.addr %s1142, 8
        %s1144 = scalar_lea.vmem [#allocation10], %s1143
        // Predicated region
        $region77: #{tpu_custom_call.1} parent=59 // pred_check
          %p1145 = pneg %p281
        $region78: #{tpu_custom_call.1} parent=59 // pred_check_branch
          %1147 = sbr.rel (%p1145) target = $region80
        $region79: #{tpu_custom_call.1} parent=59 // pred_region
          %s1149 = ssub.s32 128, 128
          %1150 = vsyncadd %s1141, %s1149
          %s1151 = sadd.s32 %s34, %s33
          %s1152 = smul.addr %s1151, 128
          %s1153 = scalar_lea.hbm %s10, %s1152
          %s1155 = sshll.u32 %s1144, 4
          %s1156 = int_to_ptr.vmem [resolvable:$true] %s1155
          %1158 = dma.vmem_to_hbm [thread:$0]  %s1156, 128, %s1153, %s1141
        $region80: #{tpu_custom_call.1} parent=59 // pred_fallthru
          _
      $region60: #{tpu_custom_call.1} parent=5 // pred_fallthru
        _
      %p1159 = scmp.le.s32.totalorder 2, %s24
      // Predicated region
      $region81: #{tpu_custom_call.1} parent=5 // pred_check
        %p1160 = pneg %p1159
      $region82: #{tpu_custom_call.1} parent=5 // pred_check_branch
        %1162 = sbr.rel (%p1160) target = $region84
      $region83: #{tpu_custom_call.1} parent=5 // pred_region
        %s1163 = ssub.s32 %s24, 2
        // Predicated region
        $region85: #{tpu_custom_call.1} parent=83 // pred_check
          %p1164 = pneg %p287
        $region86: #{tpu_custom_call.1} parent=83 // pred_check_branch
          %1166 = sbr.rel (%p1164) target = $region88
        $region87: #{tpu_custom_call.1} parent=83 // pred_region
          %s1167 = sand.u32 %s272, 1
          %s1168 = scalar_lea.sflag [#allocation4], %s1167
          %s1169 = sand.u32 %s272, 1
          %s1170 = smul.addr %s1169, 8
          %s1171 = scalar_lea.vmem [#allocation10], %s1170
          %1172 = dma.done %s1168, 128
        $region88: #{tpu_custom_call.1} parent=83 // pred_fallthru
          _
      $region84: #{tpu_custom_call.1} parent=5 // pred_fallthru
        _
    $region6: #{tpu_custom_call.1} parent=1 // loop_footer
      %s28 = sadd.s32 1, %s24
    $region7: #{tpu_custom_call.1} parent=1 // loop_footer_branch
      %23 = sbr.rel target = $region3
    $region8: #{tpu_custom_call.1} parent=1 // loop_exit
      _
    %1173 = vsyncpa [#allocation3], 1
    %s1174 = scalar_lea.sflag [#allocation3], 1
    %1175 = vsyncpa %s1174, 1
    %1176 = vsyncpa [#allocation6], 1
    %1177 = vsyncpa [#allocation9], 1
    %1178 = vsyncpa [#allocation4], 1
    %s1179 = scalar_lea.sflag [#allocation4], 1
    %1180 = vsyncpa %s1179, 1

// kernel: tpu_custom_call.1
$region0: #{tpu_custom_call.1}
  #allocation0 [shape = 'u32[]', space=smem, size = 0x4, offset = 0x4, fixed_abs, tag = 'smem constant byte address 0x4 - core index']
  #allocation1 [shape = 'u32[144,128]{1,0:T(1,128)}', space=vmem, size = 0x12000, scoped, tag = 'internal scratch']
  %s0 = inlined_call_operand.hbm [shape: f32[2,8,32], index: 0, kind: input, shape index: {}]
  %s1 = inlined_call_operand.hbm [shape: f32[8,8], index: 1, kind: input, shape index: {}]
  %s2 = inlined_call_operand.hbm [shape: bf16[32,32], index: 2, kind: input, shape index: {}]
  %s3 = inlined_call_operand.vmem [shape: f32[1,32], index: 3, kind: input, shape index: {}]
  %s4 = inlined_call_operand.hbm [shape: bf16[32,64], index: 4, kind: input, shape index: {}]
  %s5 = inlined_call_operand.vmem [shape: f32[1,64], index: 5, kind: input, shape index: {}]
  %s6 = inlined_call_operand.vmem [shape: bf16[32,32], index: 6, kind: input, shape index: {}]
  %s7 = inlined_call_operand.vmem [shape: f32[1,32], index: 7, kind: input, shape index: {}]
  %s8 = inlined_call_operand.vmem [shape: f32[1,32], index: 8, kind: input, shape index: {}]
  %s9 = inlined_call_operand.vmem [shape: f32[1,32], index: 9, kind: input, shape index: {}]
  %s10 = inlined_call_operand.hbm [shape: f32[2,8,32], index: 10, kind: output, shape index: {}]
  %s11 = sld [smem:[#allocation0]]
  $region89: #{tpu_custom_call.1} parent=0
    _
  %s13 = ssub.s32 1, %s11
  %s14 = scalar_select 0, %s13, %s11
  $region1: #{tpu_custom_call.1} parent=0
    #allocation2 [shape = 'u8[8192]{0}', space=vmem, size = 0x2000, scoped, tag = 'input window, operand 0']
    #allocation3 [shape = 's32[2]{0}', space=sflag, size = 0x8, scoped, tag = 'scoped memory for tpu_custom_call.1']
    #allocation4 [shape = 's32[2]{0}', space=sflag, size = 0x8, scoped, tag = 'scoped memory for tpu_custom_call.1']
    #allocation5 [shape = 'u8[4096]{0}', space=vmem, size = 0x1000, scoped, tag = 'input window, operand 1, single buffered']
    #allocation6 [shape = 's32[1]{0}', space=sflag, size = 0x4, scoped, tag = 'scoped memory for tpu_custom_call.1']
    #allocation7 [shape = 'u8[8192]{0}', space=vmem, size = 0x2000, scoped, tag = 'input window, operand 2, single buffered']
    #allocation8 [shape = 'u8[8192]{0}', space=vmem, size = 0x2000, scoped, tag = 'input window, operand 4, single buffered']
    #allocation9 [shape = 's32[1]{0}', space=sflag, size = 0x4, scoped, tag = 'scoped memory for tpu_custom_call.1']
    #allocation10 [shape = 'u8[8192]{0}', space=vmem, size = 0x2000, scoped, tag = 'output window, operand 0']
    %15 = vsyncpa [#allocation3], 0
    %s16 = scalar_lea.sflag [#allocation3], 1
    %17 = vsyncpa %s16, 0
    %18 = vsyncpa [#allocation6], 0
    %19 = vsyncpa [#allocation9], 0
    %20 = vsyncpa [#allocation4], 0
    %s21 = scalar_lea.sflag [#allocation4], 1
    %22 = vsyncpa %s21, 0
    loop: start=0, step=1, limit=4
    $region2: #{tpu_custom_call.1} parent=1 // loop_pre_header
      _
    $region3: #{tpu_custom_call.1} parent=1 // loop_header
      %s24 = sphi 0, %s28
      %p25 = scmp.ge.s32.totalorder %s24, 4
      %s31 = sphi 0, %s43
      %s32 = sphi 0, %s39
      %s33 = sphi 0, %s31
      %s34 = sphi 0, %s32
      %s35 = sphi 0, %s33
      %s36 = sphi 0, %s34
      %s46 = sphi 0, %s48
      %s49 = sphi 0, %s46
      %s50 = sphi 0, %s49
      %s66 = sphi 0, %s50
      %s72 = sphi 0, %s74
      %s75 = sphi 0, %s72
      %s76 = sphi 0, %s75
      %s92 = sphi 0, %s76
      %s96 = sphi 0, %s96
      %s98 = sphi 0, %s96
      %s99 = sphi 0, %s98
      %s113 = sphi 0, %s99
      %s117 = sphi 0, %s117
      %s119 = sphi 0, %s117
      %s120 = sphi 0, %s119
      %s134 = sphi 0, %s120
      %s138 = sphi 0, %s138
      %s140 = sphi 0, %s138
      %s141 = sphi 0, %s140
      %s155 = sphi 0, %s141
      %s159 = sphi 0, %s159
      %s161 = sphi 0, %s159
      %s162 = sphi 0, %s161
      %s176 = sphi 0, %s162
      %s180 = sphi 0, %s180
      %s182 = sphi 0, %s180
      %s183 = sphi 0, %s182
      %s197 = sphi 0, %s183
      %s201 = sphi 0, %s201
      %s203 = sphi 0, %s201
      %s204 = sphi 0, %s203
      %s218 = sphi 0, %s204
      %s222 = sphi 0, %s222
      %s224 = sphi 0, %s222
      %s225 = sphi 0, %s224
      %s239 = sphi 0, %s225
      %s243 = sphi 0, %s243
      %s245 = sphi 0, %s243
      %s246 = sphi 0, %s245
      %s260 = sphi 0, %s246
      %s268 = sphi 0, %s270
      %s271 = sphi 0, %s268
      %s272 = sphi 0, %s271
      %s288 = sphi 0, %s272
    $region4: #{tpu_custom_call.1} parent=1 // loop_header_branch
      %27 = sbr.rel (%p25) target = $region8
    $region5: #{tpu_custom_call.1} parent=1 // loop_body
      %s29 = ssub.s32 %s24, 1
      %s30 = ssub.s32 %s24, 2
      %s37 = sadd.s32 1, %s32
      %p38 = scmp.ge.s32.totalorder %s37, 1
      %s39 = scalar_select %p38, 0, %s37
      %s40 = sadd.s32 1, %s31
      %s41 = scalar_select %p38, %s40, %s31
      %p42 = scmp.ge.s32.totalorder %s41, 2
      %s43 = scalar_select %p42, 0, %s41
      %s44 = ssub.s32 %s31, %s43
      %p45 = scmp.eq.s32.totalorder %s44, 0
      %s47 = sadd.s32 %s46, 1
      %s48 = scalar_select %p45, %s46, %s47
      %p51 = pneg %p45
      %p52 = scmp.eq.s32.totalorder %s24, 1
      %p53 = por %p51, %p52
      %p54 = scmp.ne.s32.totalorder %s46, %s49
      %p55 = scmp.eq.s32.totalorder %s24, 0
      %p56 = por %p54, %p55
      %p57 = scmp.ne.s32.totalorder %s46, %s49
      %p58 = scmp.eq.s32.totalorder %s29, 1
      %p59 = por %p57, %p58
      %p60 = scmp.ne.s32.totalorder %s49, %s50
      %p61 = scmp.eq.s32.totalorder %s29, 0
      %p62 = por %p60, %p61
      %p63 = scmp.ne.s32.totalorder %s49, %s50
      %p64 = scmp.eq.s32.totalorder %s30, 1
      %p65 = por %p63, %p64
      %p67 = scmp.ne.s32.totalorder %s50, %s66
      %p68 = scmp.eq.s32.totalorder %s30, 0
      %p69 = por %p67, %p68
      %s70 = ssub.s32 %s32, %s39
      %p71 = scmp.eq.s32.totalorder %s70, 0
      %s73 = sadd.s32 %s72, 1
      %s74 = scalar_select %p71, %s72, %s73
      %p77 = pneg %p71
      %p78 = scmp.eq.s32.totalorder %s24, 1
      %p79 = por %p77, %p78
      %p80 = scmp.ne.s32.totalorder %s72, %s75
      %p81 = scmp.eq.s32.totalorder %s24, 0
      %p82 = por %p80, %p81
      %p83 = scmp.ne.s32.totalorder %s72, %s75
      %p84 = scmp.eq.s32.totalorder %s29, 1
      %p85 = por %p83, %p84
      %p86 = scmp.ne.s32.totalorder %s75, %s76
      %p87 = scmp.eq.s32.totalorder %s29, 0
      %p88 = por %p86, %p87
      %p89 = scmp.ne.s32.totalorder %s75, %s76
      %p90 = scmp.eq.s32.totalorder %s30, 1
      %p91 = por %p89, %p90
      %p93 = scmp.ne.s32.totalorder %s76, %s92
      %p94 = scmp.eq.s32.totalorder %s30, 0
      %p95 = por %p93, %p94
      %s97 = sadd.s32 %s96, 1
      %p100 = scmp.eq.s32.totalorder %s24, 1
      %p101 = scmp.ne.s32.totalorder %s96, %s98
      %p102 = scmp.eq.s32.totalorder %s24, 0
      %p103 = por %p101, %p102
      %p104 = scmp.ne.s32.totalorder %s96, %s98
      %p105 = scmp.eq.s32.totalorder %s29, 1
      %p106 = por %p104, %p105
      %p107 = scmp.ne.s32.totalorder %s98, %s99
      %p108 = scmp.eq.s32.totalorder %s29, 0
      %p109 = por %p107, %p108
      %p110 = scmp.ne.s32.totalorder %s98, %s99
      %p111 = scmp.eq.s32.totalorder %s30, 1
      %p112 = por %p110, %p111
      %p114 = scmp.ne.s32.totalorder %s99, %s113
      %p115 = scmp.eq.s32.totalorder %s30, 0
      %p116 = por %p114, %p115
      %s118 = sadd.s32 %s117, 1
      %p121 = scmp.eq.s32.totalorder %s24, 1
      %p122 = scmp.ne.s32.totalorder %s117, %s119
      %p123 = scmp.eq.s32.totalorder %s24, 0
      %p124 = por %p122, %p123
      %p125 = scmp.ne.s32.totalorder %s117, %s119
      %p126 = scmp.eq.s32.totalorder %s29, 1
      %p127 = por %p125, %p126
      %p128 = scmp.ne.s32.totalorder %s119, %s120
      %p129 = scmp.eq.s32.totalorder %s29, 0
      %p130 = por %p128, %p129
      %p131 = scmp.ne.s32.totalorder %s119, %s120
      %p132 = scmp.eq.s32.totalorder %s30, 1
      %p133 = por %p131, %p132
      %p135 = scmp.ne.s32.totalorder %s120, %s134
      %p136 = scmp.eq.s32.totalorder %s30, 0
      %p137 = por %p135, %p136
      %s139 = sadd.s32 %s138, 1
      %p142 = scmp.eq.s32.totalorder %s24, 1
      %p143 = scmp.ne.s32.totalorder %s138, %s140
      %p144 = scmp.eq.s32.totalorder %s24, 0
      %p145 = por %p143, %p144
      %p146 = scmp.ne.s32.totalorder %s138, %s140
      %p147 = scmp.eq.s32.totalorder %s29, 1
      %p148 = por %p146, %p147
      %p149 = scmp.ne.s32.totalorder %s140, %s141
      %p150 = scmp.eq.s32.totalorder %s29, 0
      %p151 = por %p149, %p150
      %p152 = scmp.ne.s32.totalorder %s140, %s141
      %p153 = scmp.eq.s32.totalorder %s30, 1
      %p154 = por %p152, %p153
      %p156 = scmp.ne.s32.totalorder %s141, %s155
      %p157 = scmp.eq.s32.totalorder %s30, 0
      %p158 = por %p156, %p157
      %s160 = sadd.s32 %s159, 1
      %p163 = scmp.eq.s32.totalorder %s24, 1
      %p164 = scmp.ne.s32.totalorder %s159, %s161
      %p165 = scmp.eq.s32.totalorder %s24, 0
      %p166 = por %p164, %p165
      %p167 = scmp.ne.s32.totalorder %s159, %s161
      %p168 = scmp.eq.s32.totalorder %s29, 1
      %p169 = por %p167, %p168
      %p170 = scmp.ne.s32.totalorder %s161, %s162
      %p171 = scmp.eq.s32.totalorder %s29, 0
      %p172 = por %p170, %p171
      %p173 = scmp.ne.s32.totalorder %s161, %s162
      %p174 = scmp.eq.s32.totalorder %s30, 1
      %p175 = por %p173, %p174
      %p177 = scmp.ne.s32.totalorder %s162, %s176
      %p178 = scmp.eq.s32.totalorder %s30, 0
      %p179 = por %p177, %p178
      %s181 = sadd.s32 %s180, 1
      %p184 = scmp.eq.s32.totalorder %s24, 1
      %p185 = scmp.ne.s32.totalorder %s180, %s182
      %p186 = scmp.eq.s32.totalorder %s24, 0
      %p187 = por %p185, %p186
      %p188 = scmp.ne.s32.totalorder %s180, %s182
      %p189 = scmp.eq.s32.totalorder %s29, 1
      %p190 = por %p188, %p189
      %p191 = scmp.ne.s32.totalorder %s182, %s183
      %p192 = scmp.eq.s32.totalorder %s29, 0
      %p193 = por %p191, %p192
      %p194 = scmp.ne.s32.totalorder %s182, %s183
      %p195 = scmp.eq.s32.totalorder %s30, 1
      %p196 = por %p194, %p195
      %p198 = scmp.ne.s32.totalorder %s183, %s197
      %p199 = scmp.eq.s32.totalorder %s30, 0
      %p200 = por %p198, %p199
      %s202 = sadd.s32 %s201, 1
      %p205 = scmp.eq.s32.totalorder %s24, 1
      %p206 = scmp.ne.s32.totalorder %s201, %s203
      %p207 = scmp.eq.s32.totalorder %s24, 0
      %p208 = por %p206, %p207
      %p209 = scmp.ne.s32.totalorder %s201, %s203
      %p210 = scmp.eq.s32.totalorder %s29, 1
      %p211 = por %p209, %p210
      %p212 = scmp.ne.s32.totalorder %s203, %s204
      %p213 = scmp.eq.s32.totalorder %s29, 0
      %p214 = por %p212, %p213
      %p215 = scmp.ne.s32.totalorder %s203, %s204
      %p216 = scmp.eq.s32.totalorder %s30, 1
      %p217 = por %p215, %p216
      %p219 = scmp.ne.s32.totalorder %s204, %s218
      %p220 = scmp.eq.s32.totalorder %s30, 0
      %p221 = por %p219, %p220
      %s223 = sadd.s32 %s222, 1
      %p226 = scmp.eq.s32.totalorder %s24, 1
      %p227 = scmp.ne.s32.totalorder %s222, %s224
      %p228 = scmp.eq.s32.totalorder %s24, 0
      %p229 = por %p227, %p228
      %p230 = scmp.ne.s32.totalorder %s222, %s224
      %p231 = scmp.eq.s32.totalorder %s29, 1
      %p232 = por %p230, %p231
      %p233 = scmp.ne.s32.totalorder %s224, %s225
      %p234 = scmp.eq.s32.totalorder %s29, 0
      %p235 = por %p233, %p234
      %p236 = scmp.ne.s32.totalorder %s224, %s225
      %p237 = scmp.eq.s32.totalorder %s30, 1
      %p238 = por %p236, %p237
      %p240 = scmp.ne.s32.totalorder %s225, %s239
      %p241 = scmp.eq.s32.totalorder %s30, 0
      %p242 = por %p240, %p241
      %s244 = sadd.s32 %s243, 1
      %p247 = scmp.eq.s32.totalorder %s24, 1
      %p248 = scmp.ne.s32.totalorder %s243, %s245
      %p249 = scmp.eq.s32.totalorder %s24, 0
      %p250 = por %p248, %p249
      %p251 = scmp.ne.s32.totalorder %s243, %s245
      %p252 = scmp.eq.s32.totalorder %s29, 1
      %p253 = por %p251, %p252
      %p254 = scmp.ne.s32.totalorder %s245, %s246
      %p255 = scmp.eq.s32.totalorder %s29, 0
      %p256 = por %p254, %p255
      %p257 = scmp.ne.s32.totalorder %s245, %s246
      %p258 = scmp.eq.s32.totalorder %s30, 1
      %p259 = por %p257, %p258
      %p261 = scmp.ne.s32.totalorder %s246, %s260
      %p262 = scmp.eq.s32.totalorder %s30, 0
      %p263 = por %p261, %p262
      %s264 = ssub.s32 %s31, %s43
      %s265 = ssub.s32 %s32, %s39
      %s266 = sor.u32 %s264, %s265
      %p267 = scmp.eq.s32.totalorder %s266, 0
      %s269 = sadd.s32 %s268, 1
      %s270 = scalar_select %p267, %s268, %s269
      %p273 = pneg %p267
      %p274 = scmp.eq.s32.totalorder %s24, 1
      %p275 = por %p273, %p274
      %p276 = scmp.ne.s32.totalorder %s268, %s271
      %p277 = scmp.eq.s32.totalorder %s24, 0
      %p278 = por %p276, %p277
      %p279 = scmp.ne.s32.totalorder %s268, %s271
      %p280 = scmp.eq.s32.totalorder %s29, 1
      %p281 = por %p279, %p280
      %p282 = scmp.ne.s32.totalorder %s271, %s272
      %p283 = scmp.eq.s32.totalorder %s29, 0
      %p284 = por %p282, %p283
      %p285 = scmp.ne.s32.totalorder %s271, %s272
      %p286 = scmp.eq.s32.totalorder %s30, 1
      %p287 = por %p285, %p286
      %p289 = scmp.ne.s32.totalorder %s272, %s288
      %p290 = scmp.eq.s32.totalorder %s30, 0
      %p291 = por %p289, %p290
      %p292 = scmp.le.s32.totalorder 1, %s24
      %p293 = scmp.lt.s32.totalorder %s24, 3
      %p294 = pnand %p292, %p293
      %p295 = pneg %p294
      // Predicated region
      $region9: #{tpu_custom_call.1} parent=5 // pred_check
        _
      $region10: #{tpu_custom_call.1} parent=5 // pred_check_branch
        %297 = sbr.rel (%p294) target = $region12
      $region11: #{tpu_custom_call.1} parent=5 // pred_region
        %s298 = ssub.s32 %s24, 1
        // Predicated region
        $region13: #{tpu_custom_call.1} parent=11 // pred_check
          %p299 = pneg %p88
        $region14: #{tpu_custom_call.1} parent=11 // pred_check_branch
          %301 = sbr.rel (%p299) target = $region16
        $region15: #{tpu_custom_call.1} parent=11 // pred_region
          %s303 = ssub.s32 128, 128
          %304 = vsyncadd [#allocation6], %s303
          %s305 = smul.addr %s34, 128
          %s306 = scalar_lea.hbm %s1, %s305
          %s308 = sshll.u32 [#allocation5], 4
          %s309 = int_to_ptr.vmem [resolvable:$true] %s308
          %311 = dma.hbm_to_vmem [thread:$0]  %s306, 128, %s309, [#allocation6]
        $region16: #{tpu_custom_call.1} parent=11 // pred_fallthru
          _
        // Predicated region
        $region17: #{tpu_custom_call.1} parent=11 // pred_check
          %p312 = pneg %p109
        $region18: #{tpu_custom_call.1} parent=11 // pred_check_branch
          %314 = sbr.rel (%p312) target = $region20
        $region19: #{tpu_custom_call.1} parent=11 // pred_region
          %s316 = ssub.s32 256, 256
          %317 = vsyncadd [#allocation6], %s316
          %s318 = sshll.u32 [#allocation7], 4
          %s319 = int_to_ptr.vmem [resolvable:$true] %s318
          %324 = dma.hbm_to_vmem [thread:$0]  %s2, 256, %s319, [#allocation6], 64, 64, 4
        $region20: #{tpu_custom_call.1} parent=11 // pred_fallthru
          _
        // Predicated region
        $region21: #{tpu_custom_call.1} parent=11 // pred_check
          %p325 = pneg %p130
        $region22: #{tpu_custom_call.1} parent=11 // pred_check_branch
          %327 = sbr.rel (%p325) target = $region24
        $region23: #{tpu_custom_call.1} parent=11 // pred_region
          _
        $region24: #{tpu_custom_call.1} parent=11 // pred_fallthru
          _
        // Predicated region
        $region25: #{tpu_custom_call.1} parent=11 // pred_check
          %p328 = pneg %p151
        $region26: #{tpu_custom_call.1} parent=11 // pred_check_branch
          %330 = sbr.rel (%p328) target = $region28
        $region27: #{tpu_custom_call.1} parent=11 // pred_region
          %s332 = ssub.s32 256, 256
          %333 = vsyncadd [#allocation9], %s332
          %s334 = sshll.u32 [#allocation8], 4
          %s335 = int_to_ptr.vmem [resolvable:$true] %s334
          %340 = dma.hbm_to_vmem [thread:$0]  %s4, 256, %s335, [#allocation9], 64, 64, 4
        $region28: #{tpu_custom_call.1} parent=11 // pred_fallthru
          _
        // Predicated region
        $region29: #{tpu_custom_call.1} parent=11 // pred_check
          %p341 = pneg %p172
        $region30: #{tpu_custom_call.1} parent=11 // pred_check_branch
          %343 = sbr.rel (%p341) target = $region32
        $region31: #{tpu_custom_call.1} parent=11 // pred_region
          _
        $region32: #{tpu_custom_call.1} parent=11 // pred_fallthru
          _
        // Predicated region
        $region33: #{tpu_custom_call.1} parent=11 // pred_check
          %p344 = pneg %p193
        $region34: #{tpu_custom_call.1} parent=11 // pred_check_branch
          %346 = sbr.rel (%p344) target = $region36
        $region35: #{tpu_custom_call.1} parent=11 // pred_region
          _
        $region36: #{tpu_custom_call.1} parent=11 // pred_fallthru
          _
        // Predicated region
        $region37: #{tpu_custom_call.1} parent=11 // pred_check
          %p347 = pneg %p214
        $region38: #{tpu_custom_call.1} parent=11 // pred_check_branch
          %349 = sbr.rel (%p347) target = $region40
        $region39: #{tpu_custom_call.1} parent=11 // pred_region
          _
        $region40: #{tpu_custom_call.1} parent=11 // pred_fallthru
          _
        // Predicated region
        $region41: #{tpu_custom_call.1} parent=11 // pred_check
          %p350 = pneg %p235
        $region42: #{tpu_custom_call.1} parent=11 // pred_check_branch
          %352 = sbr.rel (%p350) target = $region44
        $region43: #{tpu_custom_call.1} parent=11 // pred_region
          _
        $region44: #{tpu_custom_call.1} parent=11 // pred_fallthru
          _
        // Predicated region
        $region45: #{tpu_custom_call.1} parent=11 // pred_check
          %p353 = pneg %p256
        $region46: #{tpu_custom_call.1} parent=11 // pred_check_branch
          %355 = sbr.rel (%p353) target = $region48
        $region47: #{tpu_custom_call.1} parent=11 // pred_region
          _
        $region48: #{tpu_custom_call.1} parent=11 // pred_fallthru
          _
      $region12: #{tpu_custom_call.1} parent=5 // pred_fallthru
        _
      %p356 = scmp.lt.s32.totalorder %s24, 2
      // Predicated region
      $region49: #{tpu_custom_call.1} parent=5 // pred_check
        %p357 = pneg %p356
      $region50: #{tpu_custom_call.1} parent=5 // pred_check_branch
        %359 = sbr.rel (%p357) target = $region52
      $region51: #{tpu_custom_call.1} parent=5 // pred_region
        // Predicated region
        $region53: #{tpu_custom_call.1} parent=51 // pred_check
          %p360 = pneg %p56
        $region54: #{tpu_custom_call.1} parent=51 // pred_check_branch
          %362 = sbr.rel (%p360) target = $region56
        $region55: #{tpu_custom_call.1} parent=51 // pred_region
          %s363 = sand.u32 %s46, 1
          %s364 = scalar_lea.sflag [#allocation3], %s363
          %s365 = sand.u32 %s46, 1
          %s366 = smul.addr %s365, 8
          %s367 = scalar_lea.vmem [#allocation2], %s366
          %s369 = ssub.s32 128, 128
          %370 = vsyncadd %s364, %s369
          %s371 = smul.addr %s31, 128
          %s372 = scalar_lea.hbm %s0, %s371
          %s374 = sshll.u32 %s367, 4
          %s375 = int_to_ptr.vmem [resolvable:$true] %s374
          %377 = dma.hbm_to_vmem [thread:$0]  %s372, 128, %s375, %s364
        $region56: #{tpu_custom_call.1} parent=51 // pred_fallthru
          _
      $region52: #{tpu_custom_call.1} parent=5 // pred_fallthru
        _
      %p378 = scmp.le.s32.totalorder 1, %s24
      %p379 = scmp.lt.s32.totalorder %s24, 3
      %p380 = pnand %p378, %p379
      %p381 = pneg %p380
      // Predicated region
      $region57: #{tpu_custom_call.1} parent=5 // pred_check
        _
      $region58: #{tpu_custom_call.1} parent=5 // pred_check_branch
        %383 = sbr.rel (%p380) target = $region60
      $region59: #{tpu_custom_call.1} parent=5 // pred_region
        %s384 = ssub.s32 %s24, 1
        %s385 = sand.u32 %s49, 1
        %s386 = scalar_lea.sflag [#allocation3], %s385
        %s387 = sand.u32 %s49, 1
        %s388 = smul.addr %s387, 8
        %s389 = scalar_lea.vmem [#allocation2], %s388
        // Predicated region
        $region61: #{tpu_custom_call.1} parent=59 // pred_check
          %p390 = pneg %p62
        $region62: #{tpu_custom_call.1} parent=59 // pred_check_branch
          %392 = sbr.rel (%p390) target = $region64
        $region63: #{tpu_custom_call.1} parent=59 // pred_region
          %393 = dma.done %s386, 128
        $region64: #{tpu_custom_call.1} parent=59 // pred_fallthru
          _
        // Predicated region
        $region65: #{tpu_custom_call.1} parent=59 // pred_check
          %p394 = pneg %p88
        $region66: #{tpu_custom_call.1} parent=59 // pred_check_branch
          %396 = sbr.rel (%p394) target = $region68
        $region67: #{tpu_custom_call.1} parent=59 // pred_region
          %397 = dma.done [#allocation6], 128
        $region68: #{tpu_custom_call.1} parent=59 // pred_fallthru
          _
        // Predicated region
        $region69: #{tpu_custom_call.1} parent=59 // pred_check
          %p398 = pneg %p109
        $region70: #{tpu_custom_call.1} parent=59 // pred_check_branch
          %400 = sbr.rel (%p398) target = $region72
        $region71: #{tpu_custom_call.1} parent=59 // pred_region
          %401 = dma.done [#allocation6], 256
        $region72: #{tpu_custom_call.1} parent=59 // pred_fallthru
          _
        // Predicated region
        $region73: #{tpu_custom_call.1} parent=59 // pred_check
          %p402 = pneg %p151
        $region74: #{tpu_custom_call.1} parent=59 // pred_check_branch
          %404 = sbr.rel (%p402) target = $region76
        $region75: #{tpu_custom_call.1} parent=59 // pred_region
          %405 = dma.done [#allocation9], 256
        $region76: #{tpu_custom_call.1} parent=59 // pred_fallthru
          _
        %s406 = sand.u32 %s49, 1
        %s407 = scalar_lea.sflag [#allocation3], %s406
        %s408 = sand.u32 %s49, 1
        %s409 = smul.addr %s408, 8
        %s410 = scalar_lea.vmem [#allocation2], %s409
        %p411 = pneg %p62
        %p412 = pneg %p59
        %p413 = pneg %p88
        %p414 = pneg %p85
        %p415 = pneg %p109
        %p416 = pneg %p106
        %p417 = pneg %p130
        %p418 = pneg %p127
        %p419 = pneg %p151
        %p420 = pneg %p148
        %p421 = pneg %p172
        %p422 = pneg %p169
        %p423 = pneg %p193
        %p424 = pneg %p190
        %p425 = pneg %p214
        %p426 = pneg %p211
        %p427 = pneg %p235
        %p428 = pneg %p232
        %p429 = pneg %p256
        %p430 = pneg %p253
        %p431 = pneg %p284
        %p432 = pneg %p281
        %s433 = sand.u32 %s271, 1
        %s434 = scalar_lea.sflag [#allocation4], %s433
        %s435 = sand.u32 %s271, 1
        %s436 = smul.addr %s435, 8
        %s437 = scalar_lea.vmem [#allocation10], %s436
        %s439 = smul.u32 %s34, 8
        %s440 = scalar_lea.vmem %s389, %s439 [#allocation2]
        %v441 = vld [vmem:[%s440] sm:$0xff]
        %v442 = vpack.c.bf16 %v441, %v441
        %v443 = vld [vmem:[%s389] sm:$0xff]
        %v444 = vpack.c.bf16 %v443, %v443
        %v445 = vld [vmem:[#allocation7] sm:$0xf]
        %v446 = vld [vmem:[#allocation7 + $0x4] sm:$0xf]
        %v447 = vld [vmem:[#allocation7 + $0x8] sm:$0xf]
        %v448 = vld [vmem:[#allocation7 + $0xc] sm:$0xf]
        %v449 = vld [vmem:[%s3] sm:$0x1]
        %v451 = vlaneseq
        %v452 = vshrl.u32 %v451, 7
        %v453 = vsub.s32 0, %v452
        %v454 = vrot.slane %v449, %v453
        %v460 = vunpack.c.l.b16 %v445
        %v461 = vunpack.c.l.b16 %v446
        %v462 = vunpack.c.l.b16 %v447
        %v463 = vunpack.c.l.b16 %v448
        %v464 = vpack.c.b16 %v461, %v460
        %v465 = vpack.c.b16 %v463, %v462
        %vm468 = vcmask 261120
        %v470 = vsel %vm468, %v442, 0
        %472 = vmatprep.subr.bf16.mxu0 0
        %473 = vmatpush1.bf16.msra.mxu0 %v464
        %474 = vmatprep.subr.bf16.mxu0 0
        %475 = vmatpush1.bf16.msra.mxu0 %v465
        %476 = vmatprep.subr.bf16.mxu0 0
        %477 = vmatpush1.bf16.msra.mxu0 0
        %478 = vmatprep.subr.bf16.mxu0 0
        %479 = vmatpush1.bf16.msra.mxu0 0
        %480 = vmatprep.subr.bf16.mxu0 0
        %481 = vmatpush1.bf16.msra.mxu0 0
        %482 = vmatprep.subr.bf16.mxu0 0
        %483 = vmatpush1.bf16.msra.mxu0 0
        %484 = vmatprep.subr.bf16.mxu0 0
        %485 = vmatpush1.bf16.msra.mxu0 0
        %486 = vmatprep.subr.bf16.mxu0 0
        %487 = vmatpush1.bf16.msra.mxu0 0
        %488 = vmatprep.subr.bf16.mxu0 0
        %489 = vmatpush1.bf16.msra.mxu0 0
        %490 = vmatprep.subr.bf16.mxu0 0
        %491 = vmatpush1.bf16.msra.mxu0 0
        %492 = vmatprep.subr.bf16.mxu0 0
        %493 = vmatpush1.bf16.msra.mxu0 0
        %494 = vmatprep.subr.bf16.mxu0 0
        %495 = vmatpush1.bf16.msra.mxu0 0
        %496 = vmatprep.subr.bf16.mxu0 0
        %497 = vmatpush1.bf16.msra.mxu0 0
        %498 = vmatprep.subr.bf16.mxu0 0
        %499 = vmatpush1.bf16.msra.mxu0 0
        %500 = vmatprep.subr.bf16.mxu0 0
        %501 = vmatpush1.bf16.msra.mxu0 0
        %502 = vmatprep.subr.bf16.mxu0 0
        %503 = vmatpush1.bf16.msra.mxu0 0
        %504 = vmatprep.mubr.bf16.mxu0 0
        %505 = vmatmul.mubr.bf16.gmra.mrb[0].mxu0 %v470
        %v506 = vpop.f32.mrb[0].mxu0
        %v507 = vadd.f32 %v454, %v506
        %v508 = vpop.f32.mrb[0].mxu0
        %v509 = vpop.f32.mrb[0].mxu0
        %v510 = vpop.f32.mrb[0].mxu0
        %511 = vdwg.mxu0
        %v512 = vpack.c.bf16 %v507, %v507
        %v513 = vld [vmem:[#allocation8] sm:$0xf]
        %v514 = vld [vmem:[#allocation8 + $0x4] sm:$0xf]
        %v515 = vld [vmem:[#allocation8 + $0x8] sm:$0xf]
        %v516 = vld [vmem:[#allocation8 + $0xc] sm:$0xf]
        %v517 = vld [vmem:[%s5] sm:$0x1]
        %v519 = vlaneseq
        %v520 = vshrl.u32 %v519, 7
        %v521 = vsub.s32 0, %v520
        %v522 = vrot.slane %v517, %v521
        %v528 = vunpack.c.l.b16 %v513
        %v529 = vunpack.c.l.b16 %v514
        %v530 = vunpack.c.l.b16 %v515
        %v531 = vunpack.c.l.b16 %v516
        %v532 = vpack.c.b16 %v529, %v528
        %v533 = vpack.c.b16 %v531, %v530
        %v537 = vsel %vm468, %v444, 0
        %539 = vmatprep.subr.bf16.mxu0 0
        %540 = vmatpush1.bf16.msra.mxu0 %v532
        %541 = vmatprep.subr.bf16.mxu0 0
        %542 = vmatpush1.bf16.msra.mxu0 %v533
        %543 = vmatprep.subr.bf16.mxu0 0
        %544 = vmatpush1.bf16.msra.mxu0 0
        %545 = vmatprep.subr.bf16.mxu0 0
        %546 = vmatpush1.bf16.msra.mxu0 0
        %547 = vmatprep.subr.bf16.mxu0 0
        %548 = vmatpush1.bf16.msra.mxu0 0
        %549 = vmatprep.subr.bf16.mxu0 0
        %550 = vmatpush1.bf16.msra.mxu0 0
        %551 = vmatprep.subr.bf16.mxu0 0
        %552 = vmatpush1.bf16.msra.mxu0 0
        %553 = vmatprep.subr.bf16.mxu0 0
        %554 = vmatpush1.bf16.msra.mxu0 0
        %555 = vmatprep.subr.bf16.mxu0 0
        %556 = vmatpush1.bf16.msra.mxu0 0
        %557 = vmatprep.subr.bf16.mxu0 0
        %558 = vmatpush1.bf16.msra.mxu0 0
        %559 = vmatprep.subr.bf16.mxu0 0
        %560 = vmatpush1.bf16.msra.mxu0 0
        %561 = vmatprep.subr.bf16.mxu0 0
        %562 = vmatpush1.bf16.msra.mxu0 0
        %563 = vmatprep.subr.bf16.mxu0 0
        %564 = vmatpush1.bf16.msra.mxu0 0
        %565 = vmatprep.subr.bf16.mxu0 0
        %566 = vmatpush1.bf16.msra.mxu0 0
        %567 = vmatprep.subr.bf16.mxu0 0
        %568 = vmatpush1.bf16.msra.mxu0 0
        %569 = vmatprep.subr.bf16.mxu0 0
        %570 = vmatpush1.bf16.msra.mxu0 0
        %571 = vmatprep.mubr.bf16.mxu0 0
        %572 = vmatmul.mubr.bf16.gmra.mrb[0].mxu0 %v537
        %v573 = vpop.f32.mrb[0].mxu0
        %v574 = vadd.f32 %v522, %v573
        %v575 = vpop.f32.mrb[0].mxu0
        %v576 = vpop.f32.mrb[0].mxu0
        %v577 = vpop.f32.mrb[0].mxu0
        %578 = vdwg.mxu0
        %v579 = vpack.c.bf16 %v574, %v574
        %v580 = vld [vmem:[#allocation5] sm:$0xff]
        %vm581 = vcmask 64512
        %v583 = vsel %vm581, %v512, 0
        %v586 = vsel %vm581, %v579, 0
        %588 = vmatprep.subr.bf16.mxu0 0
        %589 = vmatpush1.bf16.xpose.msra.mxu0 %v586
        %590 = vmatprep.subr.bf16.mxu0 0
        %591 = vmatpush1.bf16.xpose.msra.mxu0 0
        %592 = vmatprep.subr.bf16.mxu0 0
        %593 = vmatpush1.bf16.xpose.msra.mxu0 0
        %594 = vmatprep.subr.bf16.mxu0 0
        %595 = vmatpush1.bf16.xpose.msra.mxu0 0
        %596 = vmatprep.subr.bf16.mxu0 0
        %597 = vmatpush1.bf16.xpose.msra.mxu0 0
        %598 = vmatprep.subr.bf16.mxu0 0
        %599 = vmatpush1.bf16.xpose.msra.mxu0 0
        %600 = vmatprep.subr.bf16.mxu0 0
        %601 = vmatpush1.bf16.xpose.msra.mxu0 0
        %602 = vmatprep.subr.bf16.mxu0 0
        %603 = vmatpush1.bf16.xpose.msra.mxu0 0
        %604 = vmatprep.subr.bf16.mxu0 0
        %605 = vmatpush1.bf16.xpose.msra.mxu0 0
        %606 = vmatprep.subr.bf16.mxu0 0
        %607 = vmatpush1.bf16.xpose.msra.mxu0 0
        %608 = vmatprep.subr.bf16.mxu0 0
        %609 = vmatpush1.bf16.xpose.msra.mxu0 0
        %610 = vmatprep.subr.bf16.mxu0 0
        %611 = vmatpush1.bf16.xpose.msra.mxu0 0
        %612 = vmatprep.subr.bf16.mxu0 0
        %613 = vmatpush1.bf16.xpose.msra.mxu0 0
        %614 = vmatprep.subr.bf16.mxu0 0
        %615 = vmatpush1.bf16.xpose.msra.mxu0 0
        %616 = vmatprep.subr.bf16.mxu0 0
        %617 = vmatpush1.bf16.xpose.msra.mxu0 0
        %618 = vmatprep.subr.bf16.mxu0 0
        %619 = vmatpush1.bf16.xpose.msra.mxu0 0
        %620 = vmatprep.mubr.bf16.mxu0 0
        %621 = vmatmul.mubr.bf16.gmra.mrb[0].mxu0 %v583
        %v622 = vpop.f32.mrb[0].mxu0
        %v623 = vadd.f32 %v580, %v622
        %v624 = vpop.f32.mrb[0].mxu0
        %v625 = vpop.f32.mrb[0].mxu0
        %v626 = vpop.f32.mrb[0].mxu0
        %627 = vdwg.mxu0
        %v628 = vsel %vm581, %v623, -inf
        %629 = vmax.xlane.f32.xlu0 %v628
        %v630 = vpop.xlane.xlu0 %629
        %v631 = vsub.f32 %v623, %v630
        %v632 = vmul.f32 %v631, 1.442695
        %v633 = vpow.pop %v632
        %v634 = vsel %vm581, %v633, 0.0
        %635 = vadd.xlane.f32.xlu0 %v634
        %v636 = vpop.xlane.xlu0 %635
        %v637 = vrcp.pop %v636
        %v638 = vmul.f32 %v633, %v637
        %v639 = vpack.c.bf16 %v638, %v638
        %641 = vrot.lane.b32.xlu0 %v579, 96
        %v642 = vpop.permute.xlu0 %641
        %v644 = vsel %vm581, %v639, 0
        %vm646 = vcmask 1043456
        %v648 = vsel %vm646, %v642, 0
        %650 = vmatprep.subr.bf16.mxu0 0
        %651 = vmatpush1.bf16.msra.mxu0 %v648
        %652 = vmatprep.subr.bf16.mxu0 0
        %653 = vmatpush1.bf16.msra.mxu0 0
        %654 = vmatprep.subr.bf16.mxu0 0
        %655 = vmatpush1.bf16.msra.mxu0 0
        %656 = vmatprep.subr.bf16.mxu0 0
        %657 = vmatpush1.bf16.msra.mxu0 0
        %658 = vmatprep.subr.bf16.mxu0 0
        %659 = vmatpush1.bf16.msra.mxu0 0
        %660 = vmatprep.subr.bf16.mxu0 0
        %661 = vmatpush1.bf16.msra.mxu0 0
        %662 = vmatprep.subr.bf16.mxu0 0
        %663 = vmatpush1.bf16.msra.mxu0 0
        %664 = vmatprep.subr.bf16.mxu0 0
        %665 = vmatpush1.bf16.msra.mxu0 0
        %666 = vmatprep.subr.bf16.mxu0 0
        %667 = vmatpush1.bf16.msra.mxu0 0
        %668 = vmatprep.subr.bf16.mxu0 0
        %669 = vmatpush1.bf16.msra.mxu0 0
        %670 = vmatprep.subr.bf16.mxu0 0
        %671 = vmatpush1.bf16.msra.mxu0 0
        %672 = vmatprep.subr.bf16.mxu0 0
        %673 = vmatpush1.bf16.msra.mxu0 0
        %674 = vmatprep.subr.bf16.mxu0 0
        %675 = vmatpush1.bf16.msra.mxu0 0
        %676 = vmatprep.subr.bf16.mxu0 0
        %677 = vmatpush1.bf16.msra.mxu0 0
        %678 = vmatprep.subr.bf16.mxu0 0
        %679 = vmatpush1.bf16.msra.mxu0 0
        %680 = vmatprep.subr.bf16.mxu0 0
        %681 = vmatpush1.bf16.msra.mxu0 0
        %682 = vmatprep.mubr.bf16.mxu0 0
        %683 = vmatmul.mubr.bf16.gmra.mrb[0].mxu0 %v644
        %v684 = vpop.f32.mrb[0].mxu0
        %v685 = vadd.f32 0.0, %v684
        %v686 = vpop.f32.mrb[0].mxu0
        %v687 = vpop.f32.mrb[0].mxu0
        %v688 = vpop.f32.mrb[0].mxu0
        %689 = vdwg.mxu0
        %v690 = vpack.c.bf16 %v685, %v685
        %692 = vrot.lane.b32.xlu0 %v512, 120
        %v693 = vpop.permute.xlu0 %692
        %694 = vrot.lane.b32.xlu0 %v579, 120
        %v695 = vpop.permute.xlu0 %694
        %v697 = vsel %vm581, %v693, 0
        %v700 = vsel %vm581, %v695, 0
        %702 = vmatprep.subr.bf16.mxu0 0
        %703 = vmatpush1.bf16.xpose.msra.mxu0 %v700
        %704 = vmatprep.subr.bf16.mxu0 0
        %705 = vmatpush1.bf16.xpose.msra.mxu0 0
        %706 = vmatprep.subr.bf16.mxu0 0
        %707 = vmatpush1.bf16.xpose.msra.mxu0 0
        %708 = vmatprep.subr.bf16.mxu0 0
        %709 = vmatpush1.bf16.xpose.msra.mxu0 0
        %710 = vmatprep.subr.bf16.mxu0 0
        %711 = vmatpush1.bf16.xpose.msra.mxu0 0
        %712 = vmatprep.subr.bf16.mxu0 0
        %713 = vmatpush1.bf16.xpose.msra.mxu0 0
        %714 = vmatprep.subr.bf16.mxu0 0
        %715 = vmatpush1.bf16.xpose.msra.mxu0 0
        %716 = vmatprep.subr.bf16.mxu0 0
        %717 = vmatpush1.bf16.xpose.msra.mxu0 0
        %718 = vmatprep.subr.bf16.mxu0 0
        %719 = vmatpush1.bf16.xpose.msra.mxu0 0
        %720 = vmatprep.subr.bf16.mxu0 0
        %721 = vmatpush1.bf16.xpose.msra.mxu0 0
        %722 = vmatprep.subr.bf16.mxu0 0
        %723 = vmatpush1.bf16.xpose.msra.mxu0 0
        %724 = vmatprep.subr.bf16.mxu0 0
        %725 = vmatpush1.bf16.xpose.msra.mxu0 0
        %726 = vmatprep.subr.bf16.mxu0 0
        %727 = vmatpush1.bf16.xpose.msra.mxu0 0
        %728 = vmatprep.subr.bf16.mxu0 0
        %729 = vmatpush1.bf16.xpose.msra.mxu0 0
        %730 = vmatprep.subr.bf16.mxu0 0
        %731 = vmatpush1.bf16.xpose.msra.mxu0 0
        %732 = vmatprep.subr.bf16.mxu0 0
        %733 = vmatpush1.bf16.xpose.msra.mxu0 0
        %734 = vmatprep.mubr.bf16.mxu0 0
        %735 = vmatmul.mubr.bf16.gmra.mrb[0].mxu0 %v697
        %v736 = vpop.f32.mrb[0].mxu0
        %v737 = vadd.f32 %v580, %v736
        %v738 = vpop.f32.mrb[0].mxu0
        %v739 = vpop.f32.mrb[0].mxu0
        %v740 = vpop.f32.mrb[0].mxu0
        %741 = vdwg.mxu0
        %v742 = vsel %vm581, %v737, -inf
        %743 = vmax.xlane.f32.xlu0 %v742
        %v744 = vpop.xlane.xlu0 %743
        %v745 = vsub.f32 %v737, %v744
        %v746 = vmul.f32 %v745, 1.442695
        %v747 = vpow.pop %v746
        %v748 = vsel %vm581, %v747, 0.0
        %749 = vadd.xlane.f32.xlu0 %v748
        %v750 = vpop.xlane.xlu0 %749
        %v751 = vrcp.pop %v750
        %v752 = vmul.f32 %v747, %v751
        %v753 = vpack.c.bf16 %v752, %v752
        %754 = vrot.lane.b32.xlu0 %v579, 88
        %v755 = vpop.permute.xlu0 %754
        %v757 = vsel %vm581, %v753, 0
        %v760 = vsel %vm646, %v755, 0
        %762 = vmatprep.subr.bf16.mxu0 0
        %763 = vmatpush1.bf16.msra.mxu0 %v760
        %764 = vmatprep.subr.bf16.mxu0 0
        %765 = vmatpush1.bf16.msra.mxu0 0
        %766 = vmatprep.subr.bf16.mxu0 0
        %767 = vmatpush1.bf16.msra.mxu0 0
        %768 = vmatprep.subr.bf16.mxu0 0
        %769 = vmatpush1.bf16.msra.mxu0 0
        %770 = vmatprep.subr.bf16.mxu0 0
        %771 = vmatpush1.bf16.msra.mxu0 0
        %772 = vmatprep.subr.bf16.mxu0 0
        %773 = vmatpush1.bf16.msra.mxu0 0
        %774 = vmatprep.subr.bf16.mxu0 0
        %775 = vmatpush1.bf16.msra.mxu0 0
        %776 = vmatprep.subr.bf16.mxu0 0
        %777 = vmatpush1.bf16.msra.mxu0 0
        %778 = vmatprep.subr.bf16.mxu0 0
        %779 = vmatpush1.bf16.msra.mxu0 0
        %780 = vmatprep.subr.bf16.mxu0 0
        %781 = vmatpush1.bf16.msra.mxu0 0
        %782 = vmatprep.subr.bf16.mxu0 0
        %783 = vmatpush1.bf16.msra.mxu0 0
        %784 = vmatprep.subr.bf16.mxu0 0
        %785 = vmatpush1.bf16.msra.mxu0 0
        %786 = vmatprep.subr.bf16.mxu0 0
        %787 = vmatpush1.bf16.msra.mxu0 0
        %788 = vmatprep.subr.bf16.mxu0 0
        %789 = vmatpush1.bf16.msra.mxu0 0
        %790 = vmatprep.subr.bf16.mxu0 0
        %791 = vmatpush1.bf16.msra.mxu0 0
        %792 = vmatprep.subr.bf16.mxu0 0
        %793 = vmatpush1.bf16.msra.mxu0 0
        %794 = vmatprep.mubr.bf16.mxu0 0
        %795 = vmatmul.mubr.bf16.gmra.mrb[0].mxu0 %v757
        %v796 = vpop.f32.mrb[0].mxu0
        %v797 = vadd.f32 0.0, %v796
        %v798 = vpop.f32.mrb[0].mxu0
        %v799 = vpop.f32.mrb[0].mxu0
        %v800 = vpop.f32.mrb[0].mxu0
        %801 = vdwg.mxu0
        %v802 = vpack.c.bf16 %v797, %v797
        %803 = vrot.lane.b32.xlu0 %v512, 112
        %v804 = vpop.permute.xlu0 %803
        %805 = vrot.lane.b32.xlu0 %v579, 112
        %v806 = vpop.permute.xlu0 %805
        %v808 = vsel %vm581, %v804, 0
        %v811 = vsel %vm581, %v806, 0
        %813 = vmatprep.subr.bf16.mxu0 0
        %814 = vmatpush1.bf16.xpose.msra.mxu0 %v811
        %815 = vmatprep.subr.bf16.mxu0 0
        %816 = vmatpush1.bf16.xpose.msra.mxu0 0
        %817 = vmatprep.subr.bf16.mxu0 0
        %818 = vmatpush1.bf16.xpose.msra.mxu0 0
        %819 = vmatprep.subr.bf16.mxu0 0
        %820 = vmatpush1.bf16.xpose.msra.mxu0 0
        %821 = vmatprep.subr.bf16.mxu0 0
        %822 = vmatpush1.bf16.xpose.msra.mxu0 0
        %823 = vmatprep.subr.bf16.mxu0 0
        %824 = vmatpush1.bf16.xpose.msra.mxu0 0
        %825 = vmatprep.subr.bf16.mxu0 0
        %826 = vmatpush1.bf16.xpose.msra.mxu0 0
        %827 = vmatprep.subr.bf16.mxu0 0
        %828 = vmatpush1.bf16.xpose.msra.mxu0 0
        %829 = vmatprep.subr.bf16.mxu0 0
        %830 = vmatpush1.bf16.xpose.msra.mxu0 0
        %831 = vmatprep.subr.bf16.mxu0 0
        %832 = vmatpush1.bf16.xpose.msra.mxu0 0
        %833 = vmatprep.subr.bf16.mxu0 0
        %834 = vmatpush1.bf16.xpose.msra.mxu0 0
        %835 = vmatprep.subr.bf16.mxu0 0
        %836 = vmatpush1.bf16.xpose.msra.mxu0 0
        %837 = vmatprep.subr.bf16.mxu0 0
        %838 = vmatpush1.bf16.xpose.msra.mxu0 0
        %839 = vmatprep.subr.bf16.mxu0 0
        %840 = vmatpush1.bf16.xpose.msra.mxu0 0
        %841 = vmatprep.subr.bf16.mxu0 0
        %842 = vmatpush1.bf16.xpose.msra.mxu0 0
        %843 = vmatprep.subr.bf16.mxu0 0
        %844 = vmatpush1.bf16.xpose.msra.mxu0 0
        %845 = vmatprep.mubr.bf16.mxu0 0
        %846 = vmatmul.mubr.bf16.gmra.mrb[0].mxu0 %v808
        %v847 = vpop.f32.mrb[0].mxu0
        %v848 = vadd.f32 %v580, %v847
        %v849 = vpop.f32.mrb[0].mxu0
        %v850 = vpop.f32.mrb[0].mxu0
        %v851 = vpop.f32.mrb[0].mxu0
        %852 = vdwg.mxu0
        %v853 = vsel %vm581, %v848, -inf
        %854 = vmax.xlane.f32.xlu0 %v853
        %v855 = vpop.xlane.xlu0 %854
        %v856 = vsub.f32 %v848, %v855
        %v857 = vmul.f32 %v856, 1.442695
        %v858 = vpow.pop %v857
        %v859 = vsel %vm581, %v858, 0.0
        %860 = vadd.xlane.f32.xlu0 %v859
        %v861 = vpop.xlane.xlu0 %860
        %v862 = vrcp.pop %v861
        %v863 = vmul.f32 %v858, %v862
        %v864 = vpack.c.bf16 %v863, %v863
        %865 = vrot.lane.b32.xlu0 %v579, 80
        %v866 = vpop.permute.xlu0 %865
        %v868 = vsel %vm581, %v864, 0
        %v871 = vsel %vm646, %v866, 0
        %873 = vmatprep.subr.bf16.mxu0 0
        %874 = vmatpush1.bf16.msra.mxu0 %v871
        %875 = vmatprep.subr.bf16.mxu0 0
        %876 = vmatpush1.bf16.msra.mxu0 0
        %877 = vmatprep.subr.bf16.mxu0 0
        %878 = vmatpush1.bf16.msra.mxu0 0
        %879 = vmatprep.subr.bf16.mxu0 0
        %880 = vmatpush1.bf16.msra.mxu0 0
        %881 = vmatprep.subr.bf16.mxu0 0
        %882 = vmatpush1.bf16.msra.mxu0 0
        %883 = vmatprep.subr.bf16.mxu0 0
        %884 = vmatpush1.bf16.msra.mxu0 0
        %885 = vmatprep.subr.bf16.mxu0 0
        %886 = vmatpush1.bf16.msra.mxu0 0
        %887 = vmatprep.subr.bf16.mxu0 0
        %888 = vmatpush1.bf16.msra.mxu0 0
        %889 = vmatprep.subr.bf16.mxu0 0
        %890 = vmatpush1.bf16.msra.mxu0 0
        %891 = vmatprep.subr.bf16.mxu0 0
        %892 = vmatpush1.bf16.msra.mxu0 0
        %893 = vmatprep.subr.bf16.mxu0 0
        %894 = vmatpush1.bf16.msra.mxu0 0
        %895 = vmatprep.subr.bf16.mxu0 0
        %896 = vmatpush1.bf16.msra.mxu0 0
        %897 = vmatprep.subr.bf16.mxu0 0
        %898 = vmatpush1.bf16.msra.mxu0 0
        %899 = vmatprep.subr.bf16.mxu0 0
        %900 = vmatpush1.bf16.msra.mxu0 0
        %901 = vmatprep.subr.bf16.mxu0 0
        %902 = vmatpush1.bf16.msra.mxu0 0
        %903 = vmatprep.subr.bf16.mxu0 0
        %904 = vmatpush1.bf16.msra.mxu0 0
        %905 = vmatprep.mubr.bf16.mxu0 0
        %906 = vmatmul.mubr.bf16.gmra.mrb[0].mxu0 %v868
        %v907 = vpop.f32.mrb[0].mxu0
        %v908 = vadd.f32 0.0, %v907
        %v909 = vpop.f32.mrb[0].mxu0
        %v910 = vpop.f32.mrb[0].mxu0
        %v911 = vpop.f32.mrb[0].mxu0
        %912 = vdwg.mxu0
        %v913 = vpack.c.bf16 %v908, %v908
        %914 = vrot.lane.b32.xlu0 %v512, 104
        %v915 = vpop.permute.xlu0 %914
        %916 = vrot.lane.b32.xlu0 %v579, 104
        %v917 = vpop.permute.xlu0 %916
        %v919 = vsel %vm581, %v915, 0
        %v922 = vsel %vm581, %v917, 0
        %924 = vmatprep.subr.bf16.mxu0 0
        %925 = vmatpush1.bf16.xpose.msra.mxu0 %v922
        %926 = vmatprep.subr.bf16.mxu0 0
        %927 = vmatpush1.bf16.xpose.msra.mxu0 0
        %928 = vmatprep.subr.bf16.mxu0 0
        %929 = vmatpush1.bf16.xpose.msra.mxu0 0
        %930 = vmatprep.subr.bf16.mxu0 0
        %931 = vmatpush1.bf16.xpose.msra.mxu0 0
        %932 = vmatprep.subr.bf16.mxu0 0
        %933 = vmatpush1.bf16.xpose.msra.mxu0 0
        %934 = vmatprep.subr.bf16.mxu0 0
        %935 = vmatpush1.bf16.xpose.msra.mxu0 0
        %936 = vmatprep.subr.bf16.mxu0 0
        %937 = vmatpush1.bf16.xpose.msra.mxu0 0
        %938 = vmatprep.subr.bf16.mxu0 0
        %939 = vmatpush1.bf16.xpose.msra.mxu0 0
        %940 = vmatprep.subr.bf16.mxu0 0
        %941 = vmatpush1.bf16.xpose.msra.mxu0 0
        %942 = vmatprep.subr.bf16.mxu0 0
        %943 = vmatpush1.bf16.xpose.msra.mxu0 0
        %944 = vmatprep.subr.bf16.mxu0 0
        %945 = vmatpush1.bf16.xpose.msra.mxu0 0
        %946 = vmatprep.subr.bf16.mxu0 0
        %947 = vmatpush1.bf16.xpose.msra.mxu0 0
        %948 = vmatprep.subr.bf16.mxu0 0
        %949 = vmatpush1.bf16.xpose.msra.mxu0 0
        %950 = vmatprep.subr.bf16.mxu0 0
        %951 = vmatpush1.bf16.xpose.msra.mxu0 0
        %952 = vmatprep.subr.bf16.mxu0 0
        %953 = vmatpush1.bf16.xpose.msra.mxu0 0
        %954 = vmatprep.subr.bf16.mxu0 0
        %955 = vmatpush1.bf16.xpose.msra.mxu0 0
        %956 = vmatprep.mubr.bf16.mxu0 0
        %957 = vmatmul.mubr.bf16.gmra.mrb[0].mxu0 %v919
        %v958 = vpop.f32.mrb[0].mxu0
        %v959 = vadd.f32 %v580, %v958
        %v960 = vpop.f32.mrb[0].mxu0
        %v961 = vpop.f32.mrb[0].mxu0
        %v962 = vpop.f32.mrb[0].mxu0
        %963 = vdwg.mxu0
        %v964 = vsel %vm581, %v959, -inf
        %965 = vmax.xlane.f32.xlu0 %v964
        %v966 = vpop.xlane.xlu0 %965
        %v967 = vsub.f32 %v959, %v966
        %v968 = vmul.f32 %v967, 1.442695
        %v969 = vpow.pop %v968
        %v970 = vsel %vm581, %v969, 0.0
        %971 = vadd.xlane.f32.xlu0 %v970
        %v972 = vpop.xlane.xlu0 %971
        %v973 = vrcp.pop %v972
        %v974 = vmul.f32 %v969, %v973
        %v975 = vpack.c.bf16 %v974, %v974
        %976 = vrot.lane.b32.xlu0 %v579, 72
        %v977 = vpop.permute.xlu0 %976
        %v979 = vsel %vm581, %v975, 0
        %v982 = vsel %vm646, %v977, 0
        %984 = vmatprep.subr.bf16.mxu0 0
        %985 = vmatpush1.bf16.msra.mxu0 %v982
        %986 = vmatprep.subr.bf16.mxu0 0
        %987 = vmatpush1.bf16.msra.mxu0 0
        %988 = vmatprep.subr.bf16.mxu0 0
        %989 = vmatpush1.bf16.msra.mxu0 0
        %990 = vmatprep.subr.bf16.mxu0 0
        %991 = vmatpush1.bf16.msra.mxu0 0
        %992 = vmatprep.subr.bf16.mxu0 0
        %993 = vmatpush1.bf16.msra.mxu0 0
        %994 = vmatprep.subr.bf16.mxu0 0
        %995 = vmatpush1.bf16.msra.mxu0 0
        %996 = vmatprep.subr.bf16.mxu0 0
        %997 = vmatpush1.bf16.msra.mxu0 0
        %998 = vmatprep.subr.bf16.mxu0 0
        %999 = vmatpush1.bf16.msra.mxu0 0
        %1000 = vmatprep.subr.bf16.mxu0 0
        %1001 = vmatpush1.bf16.msra.mxu0 0
        %1002 = vmatprep.subr.bf16.mxu0 0
        %1003 = vmatpush1.bf16.msra.mxu0 0
        %1004 = vmatprep.subr.bf16.mxu0 0
        %1005 = vmatpush1.bf16.msra.mxu0 0
        %1006 = vmatprep.subr.bf16.mxu0 0
        %1007 = vmatpush1.bf16.msra.mxu0 0
        %1008 = vmatprep.subr.bf16.mxu0 0
        %1009 = vmatpush1.bf16.msra.mxu0 0
        %1010 = vmatprep.subr.bf16.mxu0 0
        %1011 = vmatpush1.bf16.msra.mxu0 0
        %1012 = vmatprep.subr.bf16.mxu0 0
        %1013 = vmatpush1.bf16.msra.mxu0 0
        %1014 = vmatprep.subr.bf16.mxu0 0
        %1015 = vmatpush1.bf16.msra.mxu0 0
        %1016 = vmatprep.mubr.bf16.mxu0 0
        %1017 = vmatmul.mubr.bf16.gmra.mrb[0].mxu0 %v979
        %v1018 = vpop.f32.mrb[0].mxu0
        %v1019 = vadd.f32 0.0, %v1018
        %v1020 = vpop.f32.mrb[0].mxu0
        %v1021 = vpop.f32.mrb[0].mxu0
        %v1022 = vpop.f32.mrb[0].mxu0
        %1023 = vdwg.mxu0
        %v1024 = vpack.c.bf16 %v1019, %v1019
        %1026 = vrot.lane.b32.xlu0 %v802, 8
        %v1027 = vpop.permute.xlu0 %1026
        %1029 = vrot.lane.b32.xlu0 %v913, 16
        %v1030 = vpop.permute.xlu0 %1029
        %1032 = vrot.lane.b32.xlu0 %v1024, 24
        %v1033 = vpop.permute.xlu0 %1032
        %v1036 = vsel %vm581, %v690, %v1027
        %vm1037 = vcmask 130048
        %v1039 = vsel %vm1037, %v1036, %v1030
        %vm1040 = vcmask 195584
        %v1042 = vsel %vm1040, %v1039, %v1033
        %v1043 = vld [vmem:[%s6] sm:$0xf]
        %v1044 = vld [vmem:[%s6 + $0x4] sm:$0xf]
        %v1045 = vld [vmem:[%s6 + $0x8] sm:$0xf]
        %v1046 = vld [vmem:[%s6 + $0xc] sm:$0xf]
        %v1047 = vld [vmem:[%s7] sm:$0x1]
        %v1049 = vlaneseq
        %v1050 = vshrl.u32 %v1049, 7
        %v1051 = vsub.s32 0, %v1050
        %v1052 = vrot.slane %v1047, %v1051
        %v1058 = vunpack.c.l.b16 %v1043
        %v1059 = vunpack.c.l.b16 %v1044
        %v1060 = vunpack.c.l.b16 %v1045
        %v1061 = vunpack.c.l.b16 %v1046
        %v1062 = vpack.c.b16 %v1059, %v1058
        %v1063 = vpack.c.b16 %v1061, %v1060
        %v1066 = vsel %vm468, %v1042, 0
        %1068 = vmatprep.subr.bf16.mxu0 0
        %1069 = vmatpush1.bf16.msra.mxu0 %v1062
        %1070 = vmatprep.subr.bf16.mxu0 0
        %1071 = vmatpush1.bf16.msra.mxu0 %v1063
        %1072 = vmatprep.subr.bf16.mxu0 0
        %1073 = vmatpush1.bf16.msra.mxu0 0
        %1074 = vmatprep.subr.bf16.mxu0 0
        %1075 = vmatpush1.bf16.msra.mxu0 0
        %1076 = vmatprep.subr.bf16.mxu0 0
        %1077 = vmatpush1.bf16.msra.mxu0 0
        %1078 = vmatprep.subr.bf16.mxu0 0
        %1079 = vmatpush1.bf16.msra.mxu0 0
        %1080 = vmatprep.subr.bf16.mxu0 0
        %1081 = vmatpush1.bf16.msra.mxu0 0
        %1082 = vmatprep.subr.bf16.mxu0 0
        %1083 = vmatpush1.bf16.msra.mxu0 0
        %1084 = vmatprep.subr.bf16.mxu0 0
        %1085 = vmatpush1.bf16.msra.mxu0 0
        %1086 = vmatprep.subr.bf16.mxu0 0
        %1087 = vmatpush1.bf16.msra.mxu0 0
        %1088 = vmatprep.subr.bf16.mxu0 0
        %1089 = vmatpush1.bf16.msra.mxu0 0
        %1090 = vmatprep.subr.bf16.mxu0 0
        %1091 = vmatpush1.bf16.msra.mxu0 0
        %1092 = vmatprep.subr.bf16.mxu0 0
        %1093 = vmatpush1.bf16.msra.mxu0 0
        %1094 = vmatprep.subr.bf16.mxu0 0
        %1095 = vmatpush1.bf16.msra.mxu0 0
        %1096 = vmatprep.subr.bf16.mxu0 0
        %1097 = vmatpush1.bf16.msra.mxu0 0
        %1098 = vmatprep.subr.bf16.mxu0 0
        %1099 = vmatpush1.bf16.msra.mxu0 0
        %1100 = vmatprep.mubr.bf16.mxu0 0
        %1101 = vmatmul.mubr.bf16.gmra.mrb[0].mxu0 %v1066
        %v1102 = vpop.f32.mrb[0].mxu0
        %v1103 = vadd.f32 %v1052, %v1102
        %v1104 = vpop.f32.mrb[0].mxu0
        %v1105 = vpop.f32.mrb[0].mxu0
        %v1106 = vpop.f32.mrb[0].mxu0
        %1107 = vdwg.mxu0
        %v1108 = vadd.f32 %v1103, %v441
        %v1109 = vsel %vm468, %v1108, 0.0
        %1110 = vadd.xlane.f32.xlu0 %v1109
        %v1111 = vpop.xlane.xlu0 %1110
        %v1112 = vrcp.pop 32.0
        %v1113 = vmul.f32 %v1111, %v1112
        %v1114 = vsub.f32 %v1108, %v1113
        %v1115 = vmul.f32 %v1114, %v1114
        %v1116 = vsel %vm468, %v1115, 0.0
        %1117 = vadd.xlane.f32.xlu0 %v1116
        %v1118 = vpop.xlane.xlu0 %1117
        %v1119 = vmul.f32 %v1118, %v1112
        %v1120 = vadd.f32 %v1119, 1e-05
        %v1121 = vrsqrt.pop %v1120
        %v1122 = vmul.f32 %v1114, %v1121
        %v1123 = vld [vmem:[%s8] sm:$0x1]
        %v1125 = vlaneseq
        %v1126 = vshrl.u32 %v1125, 7
        %v1127 = vsub.s32 0, %v1126
        %v1128 = vrot.slane %v1123, %v1127
        %v1130 = vmul.f32 %v1122, %v1128
        %v1131 = vld [vmem:[%s9] sm:$0x1]
        %v1133 = vlaneseq
        %v1134 = vshrl.u32 %v1133, 7
        %v1135 = vsub.s32 0, %v1134
        %v1136 = vrot.slane %v1131, %v1135
        %v1138 = vadd.f32 %v1130, %v1136
        %1139 = vst.msk [vmem:[%s437] sm:$0xff] %vm468, %v1138
        %s1140 = sand.u32 %s271, 1
        %s1141 = scalar_lea.sflag [#allocation4], %s1140
        %s1142 = sand.u32 %s271, 1
        %s1143 = smul.addr %s1142, 8
        %s1144 = scalar_lea.vmem [#allocation10], %s1143
        // Predicated region
        $region77: #{tpu_custom_call.1} parent=59 // pred_check
          %p1145 = pneg %p281
        $region78: #{tpu_custom_call.1} parent=59 // pred_check_branch
          %1147 = sbr.rel (%p1145) target = $region80
        $region79: #{tpu_custom_call.1} parent=59 // pred_region
          %s1149 = ssub.s32 128, 128
          %1150 = vsyncadd %s1141, %s1149
          %s1151 = sadd.s32 %s34, %s33
          %s1152 = smul.addr %s1151, 128
          %s1153 = scalar_lea.hbm %s10, %s1152
          %s1155 = sshll.u32 %s1144, 4
          %s1156 = int_to_ptr.vmem [resolvable:$true] %s1155
          %1158 = dma.vmem_to_hbm [thread:$0]  %s1156, 128, %s1153, %s1141
        $region80: #{tpu_custom_call.1} parent=59 // pred_fallthru
          _
      $region60: #{tpu_custom_call.1} parent=5 // pred_fallthru
        _
      %p1159 = scmp.le.s32.totalorder 2, %s24
      // Predicated region
      $region81: #{tpu_custom_call.1} parent=5 // pred_check
        %p1160 = pneg %p1159
      $region82: #{tpu_custom_call.1} parent=5 // pred_check_branch
        %1162 = sbr.rel (%p1160) target = $region84
      $region83: #{tpu_custom_call.1} parent=5 // pred_region
        %s1163 = ssub.s32 %s24, 2
        // Predicated region
        $region85: #{tpu_custom_call.1} parent=83 // pred_check
          %p1164 = pneg %p287
        $region86: #{tpu_custom_call.1} parent=83 // pred_check_branch
          %1166 = sbr.rel (%p1164) target = $region88
        $region87: #{tpu_custom_call.1} parent=83 // pred_region
          %s1167 = sand.u32 %s272, 1
          %s1168 = scalar_lea.sflag [#allocation4], %s1167
          %s1169 = sand.u32 %s272, 1
          %s1170 = smul.addr %s1169, 8
          %s1171 = scalar_lea.vmem [#allocation10], %s1170
          %1172 = dma.done %s1168, 128
        $region88: #{tpu_custom_call.1} parent=83 // pred_fallthru
          _
      $region84: #{tpu_custom_call.1} parent=5 // pred_fallthru
        _
    $region6: #{tpu_custom_call.1} parent=1 // loop_footer
      %s28 = sadd.s32 1, %s24
    $region7: #{tpu_custom_call.1} parent=1 // loop_footer_branch
      %23 = sbr.rel target = $region3
    $region8: #{tpu_custom_call.1} parent=1 // loop_exit
      _
    %1173 = vsyncpa [#allocation3], 1
    %s1174 = scalar_lea.sflag [#allocation3], 1
    %1175 = vsyncpa %s1174, 1
    %1176 = vsyncpa [#allocation6], 1
    %1177 = vsyncpa [#allocation9], 1
    %1178 = vsyncpa [#allocation4], 1
    %s1179 = scalar_lea.sflag [#allocation4], 1
    %1180 = vsyncpa %s1179, 1

</llo_original>
